<compile_context>
chip_gen: v6e
topology: v6e:2x2x1
jax: 0.10.0
libtpu: 0.0.40
codegen_flags: <defaults>
</compile_context>

<pallas_src>
import jax
import jax.numpy as jnp
import numpy as np
from jax.experimental import pallas as pl
from jax.experimental.pallas import tpu as pltpu

# Hyperparameters (GraphCON defaults)
DT = 1.0
ALPHA = 0.2
GAMMA = 1.0
NUM_LAYERS = 6
BN_EPS = 1e-5
LANE = 128
# dropout = 0.0  -> F.dropout is the identity; nothing to do in-kernel.


def graphcon_kernel(a_ref, x0_ref, y0_ref, wt_ref, p_ref, out_ref):
    """Single invocation; all layers unrolled.

    a_ref:  (N, N)      normalized dense adjacency A_hat
    x0_ref: (N, Hp)     initial X (lane-padded)
    y0_ref: (N, Hp)     initial Y (lane-padded)
    wt_ref: (L, Hp, Hp) per-layer W_l.T (pre-transposed, lane-padded)
    p_ref:  (L, 3, Hp)  packed [bias, bn_weight, bn_bias] per layer
    out_ref:(N, Hp)     final X
    """
    A = a_ref[...]
    X = x0_ref[...]
    Y = y0_ref[...]
    num_layers = wt_ref.shape[0]

    for l in range(num_layers):           # static unroll (L is small & known)
        Wt = wt_ref[l]                     # (Hp, Hp)
        p = p_ref[l]                       # (3, Hp)
        b = p[0:1, :]
        bn_w = p[1:2, :]
        bn_b = p[2:3, :]

        # ---- conv_l(X): A_hat @ (X @ W.T) + b ----
        conv1 = jnp.dot(
            A, jnp.dot(X, Wt, preferred_element_type=jnp.float32),
            preferred_element_type=jnp.float32) + b

        # ---- coupled-oscillator update (dropout p=0.0 is identity) ----
        Y = Y + DT * (jnp.maximum(conv1, 0.0) - ALPHA * Y - GAMMA * X)
        X = X + DT * Y

        # ---- conv_l(X) again, then BatchNorm1d (training-mode batch stats) ----
        conv2 = jnp.dot(
            A, jnp.dot(X, Wt, preferred_element_type=jnp.float32),
            preferred_element_type=jnp.float32) + b
        mean = jnp.mean(conv2, axis=0, keepdims=True)          # (1, Hp)
        centered = conv2 - mean
        var = jnp.mean(centered * centered, axis=0, keepdims=True)  # biased var
        X = centered * jax.lax.rsqrt(var + BN_EPS) * bn_w + bn_b

    out_ref[...] = X


def graphcon_forward(a_hat, x0, y0, w_t, bias, bn_w, bn_b):
    """a_hat: (N,N); x0,y0: (N,H); w_t: (L,H,H) [already transposed: W_l.T];
    bias/bn_w/bn_b: (L,H). Returns final X: (N,H)."""
    N, H = x0.shape
    L = w_t.shape[0]
    Hp = ((H + LANE - 1) // LANE) * LANE       # pad hidden dim to full lanes
    ph = Hp - H

    # Zero-pad hidden dimension (exact: padded channels remain 0 end-to-end).
    x0p = jnp.pad(x0, ((0, 0), (0, ph)))
    y0p = jnp.pad(y0, ((0, 0), (0, ph)))
    wtp = jnp.pad(w_t, ((0, 0), (0, ph), (0, ph)))
    params = jnp.stack([bias, bn_w, bn_b], axis=1)             # (L, 3, H)
    params = jnp.pad(params, ((0, 0), (0, 0), (0, ph)))        # (L, 3, Hp)

    vmem = pl.BlockSpec(memory_space=pltpu.MemorySpace.VMEM)
    out_p = pl.pallas_call(
        graphcon_kernel,
        out_shape=jax.ShapeDtypeStruct((N, Hp), jnp.float32),
        in_specs=[vmem, vmem, vmem, vmem, vmem],
        out_specs=vmem,
    )(a_hat, x0p, y0p, wtp, params)
    return out_p[:, :H]


def gcn_norm_dense(edge_index, num_nodes):
    """Dense A_hat = D^-1/2 (A + I) D^-1/2 as in PyG's GCNConv default (host-side glue)."""
    src, dst = edge_index
    A = jnp.zeros((num_nodes, num_nodes), jnp.float32)
    A = A.at[dst, src].set(1.0)                       # message j -> i: row i, col j
    A = A + jnp.eye(num_nodes, dtype=jnp.float32)     # add self-loops
    deg = A.sum(axis=1)
    dinv = jnp.where(deg > 0, 1.0 / jnp.sqrt(deg), 0.0)
    return dinv[:, None] * A * dinv[None, :]


def reference_forward(a_hat, x0, y0, w_t, bias, bn_w, bn_b):
    """Pure-JAX reference with identical semantics, for validation."""
    X, Y = x0, y0
    for i in range(w_t.shape[0]):
        conv1 = a_hat @ (X @ w_t[i]) + bias[i][None, :]
        Y = Y + DT * (jnp.maximum(conv1, 0.0) - ALPHA * Y - GAMMA * X)
        X = X + DT * Y
        conv2 = a_hat @ (X @ w_t[i]) + bias[i][None, :]
        mean = conv2.mean(axis=0, keepdims=True)
        var = ((conv2 - mean) ** 2).mean(axis=0, keepdims=True)
        X = (conv2 - mean) / jnp.sqrt(var + BN_EPS) * bn_w[i][None, :] + bn_b[i][None, :]
    return X


if __name__ == "__main__":
    N, H, L = 64, 32, NUM_LAYERS
    key = jax.random.PRNGKey(0)
    k_x, k_y, k_w, k_e = jax.random.split(key, 4)

    # Node states.
    X0 = jax.random.normal(k_x, (N, H), jnp.float32)
    Y0 = jax.random.normal(k_y, (N, H), jnp.float32)

    # Deterministic small graph: ring + a few chords, both directions (undirected).
    src = np.arange(N)
    ring = np.stack([src, (src + 1) % N])
    chords = np.stack([src, (src + 7) % N])
    ei = np.concatenate([ring, chords, ring[::-1], chords[::-1]], axis=1)
    edge_index = jnp.asarray(ei, jnp.int32)
    A_hat = gcn_norm_dense(edge_index, N)

    # Per-layer parameters (deterministic init):
    # GCNConv linear weight ~ glorot uniform, bias zeros; BN weight ones, bias zeros.
    limit = np.sqrt(6.0 / (H + H))
    W = jax.random.uniform(k_w, (L, H, H), jnp.float32, -limit, limit)  # (out, in)
    W_t = jnp.transpose(W, (0, 2, 1))          # pre-transpose so kernel does X @ W.T
    bias = jnp.zeros((L, H), jnp.float32)
    bn_w = jnp.ones((L, H), jnp.float32)
    bn_b = jnp.zeros((L, H), jnp.float32)

    out = graphcon_forward(A_hat, X0, Y0, W_t, bias, bn_w, bn_b)
    out = jax.block_until_ready(out)

    ref = jax.block_until_ready(
        reference_forward(A_hat, X0, Y0, W_t, bias, bn_w, bn_b))
    np.testing.assert_allclose(np.asarray(out), np.asarray(ref),
                               rtol=1e-4, atol=1e-4)

    print("KERNEL_OK")
</pallas_src>

<mosaic_0001>
module attributes {stable_mosaic.version = 11 : i64} {
  func.func @graphcon_kernel(%arg0: memref<64x64xf32, #tpu.memory_space<vmem>>, %arg1: memref<64x128xf32, #tpu.memory_space<vmem>>, %arg2: memref<64x128xf32, #tpu.memory_space<vmem>>, %arg3: memref<6x128x128xf32, #tpu.memory_space<vmem>>, %arg4: memref<6x3x128xf32, #tpu.memory_space<vmem>>, %arg5: memref<64x128xf32, #tpu.memory_space<vmem>>) attributes {dimension_semantics = [], scalar_prefetch = 0 : i64, scratch_operands = 0 : i64, tpu.core_type = #tpu.core_type<tc>} {
    %c0 = arith.constant 0 : index
    %c0_0 = arith.constant 0 : index
    %0 = vector.load %arg0[%c0, %c0_0] : memref<64x64xf32, #tpu.memory_space<vmem>>, vector<64x64xf32>
    %c0_1 = arith.constant 0 : index
    %c0_2 = arith.constant 0 : index
    %1 = vector.load %arg1[%c0_1, %c0_2] : memref<64x128xf32, #tpu.memory_space<vmem>>, vector<64x128xf32>
    %c0_3 = arith.constant 0 : index
    %c0_4 = arith.constant 0 : index
    %2 = vector.load %arg2[%c0_3, %c0_4] : memref<64x128xf32, #tpu.memory_space<vmem>>, vector<64x128xf32>
    %c0_5 = arith.constant 0 : index
    %c0_6 = arith.constant 0 : index
    %c0_7 = arith.constant 0 : index
    %3 = vector.load %arg3[%c0_5, %c0_6, %c0_7] : memref<6x128x128xf32, #tpu.memory_space<vmem>>, vector<1x128x128xf32>
    %4 = vector.shape_cast %3 : vector<1x128x128xf32> to vector<128x128xf32>
    %c0_8 = arith.constant 0 : index
    %c0_9 = arith.constant 0 : index
    %c0_10 = arith.constant 0 : index
    %5 = vector.load %arg4[%c0_8, %c0_9, %c0_10] : memref<6x3x128xf32, #tpu.memory_space<vmem>>, vector<1x3x128xf32>
    %6 = vector.shape_cast %5 : vector<1x3x128xf32> to vector<3x128xf32>
    %7 = vector.extract_strided_slice %6 {offsets = [0, 0], sizes = [1, 128], strides = [1, 1]} : vector<3x128xf32> to vector<1x128xf32>
    %8 = vector.extract_strided_slice %6 {offsets = [1, 0], sizes = [1, 128], strides = [1, 1]} : vector<3x128xf32> to vector<1x128xf32>
    %9 = vector.extract_strided_slice %6 {offsets = [2, 0], sizes = [1, 128], strides = [1, 1]} : vector<3x128xf32> to vector<1x128xf32>
    %cst = arith.constant dense<0.000000e+00> : vector<64x128xf32>
    %10 = tpu.matmul %1, %4, %cst {dimension_numbers = #tpu.dot_dimension_numbers<[1], [0], [0], [1], [0, 0, 1, 1], [], []>} : vector<64x128xf32>, vector<128x128xf32>, vector<64x128xf32> -> vector<64x128xf32>
    %cst_11 = arith.constant dense<0.000000e+00> : vector<64x128xf32>
    %11 = tpu.matmul %0, %10, %cst_11 {dimension_numbers = #tpu.dot_dimension_numbers<[1], [0], [0], [1], [0, 0, 1, 1], [], []>} : vector<64x64xf32>, vector<64x128xf32>, vector<64x128xf32> -> vector<64x128xf32>
    %12 = vector.broadcast %7 : vector<1x128xf32> to vector<64x128xf32>
    %13 = arith.addf %11, %12 : vector<64x128xf32>
    %cst_12 = arith.constant 0.000000e+00 : f32
    %14 = vector.broadcast %cst_12 : f32 to vector<64x128xf32>
    %15 = arith.maximumf %13, %14 : vector<64x128xf32>
    %cst_13 = arith.constant 2.000000e-01 : f32
    %16 = vector.broadcast %cst_13 : f32 to vector<64x128xf32>
    %17 = arith.mulf %16, %2 : vector<64x128xf32>
    %18 = arith.subf %15, %17 : vector<64x128xf32>
    %cst_14 = arith.constant 1.000000e+00 : f32
    %19 = vector.broadcast %cst_14 : f32 to vector<64x128xf32>
    %20 = arith.mulf %19, %1 : vector<64x128xf32>
    %21 = arith.subf %18, %20 : vector<64x128xf32>
    %cst_15 = arith.constant 1.000000e+00 : f32
    %22 = vector.broadcast %cst_15 : f32 to vector<64x128xf32>
    %23 = arith.mulf %22, %21 : vector<64x128xf32>
    %24 = arith.addf %2, %23 : vector<64x128xf32>
    %cst_16 = arith.constant 1.000000e+00 : f32
    %25 = vector.broadcast %cst_16 : f32 to vector<64x128xf32>
    %26 = arith.mulf %25, %24 : vector<64x128xf32>
    %27 = arith.addf %1, %26 : vector<64x128xf32>
    %cst_17 = arith.constant dense<0.000000e+00> : vector<64x128xf32>
    %28 = tpu.matmul %27, %4, %cst_17 {dimension_numbers = #tpu.dot_dimension_numbers<[1], [0], [0], [1], [0, 0, 1, 1], [], []>} : vector<64x128xf32>, vector<128x128xf32>, vector<64x128xf32> -> vector<64x128xf32>
    %cst_18 = arith.constant dense<0.000000e+00> : vector<64x128xf32>
    %29 = tpu.matmul %0, %28, %cst_18 {dimension_numbers = #tpu.dot_dimension_numbers<[1], [0], [0], [1], [0, 0, 1, 1], [], []>} : vector<64x64xf32>, vector<64x128xf32>, vector<64x128xf32> -> vector<64x128xf32>
    %30 = vector.broadcast %7 : vector<1x128xf32> to vector<64x128xf32>
    %31 = arith.addf %29, %30 : vector<64x128xf32>
    %cst_19 = arith.constant dense<0.000000e+00> : vector<128xf32>
    %32 = vector.multi_reduction <add>, %31, %cst_19 [0] : vector<64x128xf32> to vector<128xf32>
    %33 = vector.shape_cast %32 : vector<128xf32> to vector<1x128xf32>
    %cst_20 = arith.constant 6.400000e+01 : f32
    %34 = vector.broadcast %cst_20 : f32 to vector<1x128xf32>
    %35 = arith.divf %33, %34 : vector<1x128xf32>
    %36 = vector.broadcast %35 : vector<1x128xf32> to vector<64x128xf32>
    %37 = arith.subf %31, %36 : vector<64x128xf32>
    %38 = arith.mulf %37, %37 : vector<64x128xf32>
    %cst_21 = arith.constant dense<0.000000e+00> : vector<128xf32>
    %39 = vector.multi_reduction <add>, %38, %cst_21 [0] : vector<64x128xf32> to vector<128xf32>
    %40 = vector.shape_cast %39 : vector<128xf32> to vector<1x128xf32>
    %cst_22 = arith.constant 6.400000e+01 : f32
    %41 = vector.broadcast %cst_22 : f32 to vector<1x128xf32>
    %42 = arith.divf %40, %41 : vector<1x128xf32>
    %cst_23 = arith.constant 9.99999974E-6 : f32
    %43 = vector.broadcast %cst_23 : f32 to vector<1x128xf32>
    %44 = arith.addf %42, %43 : vector<1x128xf32>
    %45 = math.rsqrt %44 : vector<1x128xf32>
    %46 = vector.broadcast %45 : vector<1x128xf32> to vector<64x128xf32>
    %47 = arith.mulf %37, %46 : vector<64x128xf32>
    %48 = vector.broadcast %8 : vector<1x128xf32> to vector<64x128xf32>
    %49 = arith.mulf %47, %48 : vector<64x128xf32>
    %50 = vector.broadcast %9 : vector<1x128xf32> to vector<64x128xf32>
    %51 = arith.addf %49, %50 : vector<64x128xf32>
    %c1 = arith.constant 1 : index
    %c0_24 = arith.constant 0 : index
    %c0_25 = arith.constant 0 : index
    %52 = vector.load %arg3[%c1, %c0_24, %c0_25] : memref<6x128x128xf32, #tpu.memory_space<vmem>>, vector<1x128x128xf32>
    %53 = vector.shape_cast %52 : vector<1x128x128xf32> to vector<128x128xf32>
    %c1_26 = arith.constant 1 : index
    %c0_27 = arith.constant 0 : index
    %c0_28 = arith.constant 0 : index
    %54 = vector.load %arg4[%c1_26, %c0_27, %c0_28] : memref<6x3x128xf32, #tpu.memory_space<vmem>>, vector<1x3x128xf32>
    %55 = vector.shape_cast %54 : vector<1x3x128xf32> to vector<3x128xf32>
    %56 = vector.extract_strided_slice %55 {offsets = [0, 0], sizes = [1, 128], strides = [1, 1]} : vector<3x128xf32> to vector<1x128xf32>
    %57 = vector.extract_strided_slice %55 {offsets = [1, 0], sizes = [1, 128], strides = [1, 1]} : vector<3x128xf32> to vector<1x128xf32>
    %58 = vector.extract_strided_slice %55 {offsets = [2, 0], sizes = [1, 128], strides = [1, 1]} : vector<3x128xf32> to vector<1x128xf32>
    %cst_29 = arith.constant dense<0.000000e+00> : vector<64x128xf32>
    %59 = tpu.matmul %51, %53, %cst_29 {dimension_numbers = #tpu.dot_dimension_numbers<[1], [0], [0], [1], [0, 0, 1, 1], [], []>} : vector<64x128xf32>, vector<128x128xf32>, vector<64x128xf32> -> vector<64x128xf32>
    %cst_30 = arith.constant dense<0.000000e+00> : vector<64x128xf32>
    %60 = tpu.matmul %0, %59, %cst_30 {dimension_numbers = #tpu.dot_dimension_numbers<[1], [0], [0], [1], [0, 0, 1, 1], [], []>} : vector<64x64xf32>, vector<64x128xf32>, vector<64x128xf32> -> vector<64x128xf32>
    %61 = vector.broadcast %56 : vector<1x128xf32> to vector<64x128xf32>
    %62 = arith.addf %60, %61 : vector<64x128xf32>
    %cst_31 = arith.constant 0.000000e+00 : f32
    %63 = vector.broadcast %cst_31 : f32 to vector<64x128xf32>
    %64 = arith.maximumf %62, %63 : vector<64x128xf32>
    %cst_32 = arith.constant 2.000000e-01 : f32
    %65 = vector.broadcast %cst_32 : f32 to vector<64x128xf32>
    %66 = arith.mulf %65, %24 : vector<64x128xf32>
    %67 = arith.subf %64, %66 : vector<64x128xf32>
    %cst_33 = arith.constant 1.000000e+00 : f32
    %68 = vector.broadcast %cst_33 : f32 to vector<64x128xf32>
    %69 = arith.mulf %68, %51 : vector<64x128xf32>
    %70 = arith.subf %67, %69 : vector<64x128xf32>
    %cst_34 = arith.constant 1.000000e+00 : f32
    %71 = vector.broadcast %cst_34 : f32 to vector<64x128xf32>
    %72 = arith.mulf %71, %70 : vector<64x128xf32>
    %73 = arith.addf %24, %72 : vector<64x128xf32>
    %cst_35 = arith.constant 1.000000e+00 : f32
    %74 = vector.broadcast %cst_35 : f32 to vector<64x128xf32>
    %75 = arith.mulf %74, %73 : vector<64x128xf32>
    %76 = arith.addf %51, %75 : vector<64x128xf32>
    %cst_36 = arith.constant dense<0.000000e+00> : vector<64x128xf32>
    %77 = tpu.matmul %76, %53, %cst_36 {dimension_numbers = #tpu.dot_dimension_numbers<[1], [0], [0], [1], [0, 0, 1, 1], [], []>} : vector<64x128xf32>, vector<128x128xf32>, vector<64x128xf32> -> vector<64x128xf32>
    %cst_37 = arith.constant dense<0.000000e+00> : vector<64x128xf32>
    %78 = tpu.matmul %0, %77, %cst_37 {dimension_numbers = #tpu.dot_dimension_numbers<[1], [0], [0], [1], [0, 0, 1, 1], [], []>} : vector<64x64xf32>, vector<64x128xf32>, vector<64x128xf32> -> vector<64x128xf32>
    %79 = vector.broadcast %56 : vector<1x128xf32> to vector<64x128xf32>
    %80 = arith.addf %78, %79 : vector<64x128xf32>
    %cst_38 = arith.constant dense<0.000000e+00> : vector<128xf32>
    %81 = vector.multi_reduction <add>, %80, %cst_38 [0] : vector<64x128xf32> to vector<128xf32>
    %82 = vector.shape_cast %81 : vector<128xf32> to vector<1x128xf32>
    %cst_39 = arith.constant 6.400000e+01 : f32
    %83 = vector.broadcast %cst_39 : f32 to vector<1x128xf32>
    %84 = arith.divf %82, %83 : vector<1x128xf32>
    %85 = vector.broadcast %84 : vector<1x128xf32> to vector<64x128xf32>
    %86 = arith.subf %80, %85 : vector<64x128xf32>
    %87 = arith.mulf %86, %86 : vector<64x128xf32>
    %cst_40 = arith.constant dense<0.000000e+00> : vector<128xf32>
    %88 = vector.multi_reduction <add>, %87, %cst_40 [0] : vector<64x128xf32> to vector<128xf32>
    %89 = vector.shape_cast %88 : vector<128xf32> to vector<1x128xf32>
    %cst_41 = arith.constant 6.400000e+01 : f32
    %90 = vector.broadcast %cst_41 : f32 to vector<1x128xf32>
    %91 = arith.divf %89, %90 : vector<1x128xf32>
    %cst_42 = arith.constant 9.99999974E-6 : f32
    %92 = vector.broadcast %cst_42 : f32 to vector<1x128xf32>
    %93 = arith.addf %91, %92 : vector<1x128xf32>
    %94 = math.rsqrt %93 : vector<1x128xf32>
    %95 = vector.broadcast %94 : vector<1x128xf32> to vector<64x128xf32>
    %96 = arith.mulf %86, %95 : vector<64x128xf32>
    %97 = vector.broadcast %57 : vector<1x128xf32> to vector<64x128xf32>
    %98 = arith.mulf %96, %97 : vector<64x128xf32>
    %99 = vector.broadcast %58 : vector<1x128xf32> to vector<64x128xf32>
    %100 = arith.addf %98, %99 : vector<64x128xf32>
    %c2 = arith.constant 2 : index
    %c0_43 = arith.constant 0 : index
    %c0_44 = arith.constant 0 : index
    %101 = vector.load %arg3[%c2, %c0_43, %c0_44] : memref<6x128x128xf32, #tpu.memory_space<vmem>>, vector<1x128x128xf32>
    %102 = vector.shape_cast %101 : vector<1x128x128xf32> to vector<128x128xf32>
    %c2_45 = arith.constant 2 : index
    %c0_46 = arith.constant 0 : index
    %c0_47 = arith.constant 0 : index
    %103 = vector.load %arg4[%c2_45, %c0_46, %c0_47] : memref<6x3x128xf32, #tpu.memory_space<vmem>>, vector<1x3x128xf32>
    %104 = vector.shape_cast %103 : vector<1x3x128xf32> to vector<3x128xf32>
    %105 = vector.extract_strided_slice %104 {offsets = [0, 0], sizes = [1, 128], strides = [1, 1]} : vector<3x128xf32> to vector<1x128xf32>
    %106 = vector.extract_strided_slice %104 {offsets = [1, 0], sizes = [1, 128], strides = [1, 1]} : vector<3x128xf32> to vector<1x128xf32>
    %107 = vector.extract_strided_slice %104 {offsets = [2, 0], sizes = [1, 128], strides = [1, 1]} : vector<3x128xf32> to vector<1x128xf32>
    %cst_48 = arith.constant dense<0.000000e+00> : vector<64x128xf32>
    %108 = tpu.matmul %100, %102, %cst_48 {dimension_numbers = #tpu.dot_dimension_numbers<[1], [0], [0], [1], [0, 0, 1, 1], [], []>} : vector<64x128xf32>, vector<128x128xf32>, vector<64x128xf32> -> vector<64x128xf32>
    %cst_49 = arith.constant dense<0.000000e+00> : vector<64x128xf32>
    %109 = tpu.matmul %0, %108, %cst_49 {dimension_numbers = #tpu.dot_dimension_numbers<[1], [0], [0], [1], [0, 0, 1, 1], [], []>} : vector<64x64xf32>, vector<64x128xf32>, vector<64x128xf32> -> vector<64x128xf32>
    %110 = vector.broadcast %105 : vector<1x128xf32> to vector<64x128xf32>
    %111 = arith.addf %109, %110 : vector<64x128xf32>
    %cst_50 = arith.constant 0.000000e+00 : f32
    %112 = vector.broadcast %cst_50 : f32 to vector<64x128xf32>
    %113 = arith.maximumf %111, %112 : vector<64x128xf32>
    %cst_51 = arith.constant 2.000000e-01 : f32
    %114 = vector.broadcast %cst_51 : f32 to vector<64x128xf32>
    %115 = arith.mulf %114, %73 : vector<64x128xf32>
    %116 = arith.subf %113, %115 : vector<64x128xf32>
    %cst_52 = arith.constant 1.000000e+00 : f32
    %117 = vector.broadcast %cst_52 : f32 to vector<64x128xf32>
    %118 = arith.mulf %117, %100 : vector<64x128xf32>
    %119 = arith.subf %116, %118 : vector<64x128xf32>
    %cst_53 = arith.constant 1.000000e+00 : f32
    %120 = vector.broadcast %cst_53 : f32 to vector<64x128xf32>
    %121 = arith.mulf %120, %119 : vector<64x128xf32>
    %122 = arith.addf %73, %121 : vector<64x128xf32>
    %cst_54 = arith.constant 1.000000e+00 : f32
    %123 = vector.broadcast %cst_54 : f32 to vector<64x128xf32>
    %124 = arith.mulf %123, %122 : vector<64x128xf32>
    %125 = arith.addf %100, %124 : vector<64x128xf32>
    %cst_55 = arith.constant dense<0.000000e+00> : vector<64x128xf32>
    %126 = tpu.matmul %125, %102, %cst_55 {dimension_numbers = #tpu.dot_dimension_numbers<[1], [0], [0], [1], [0, 0, 1, 1], [], []>} : vector<64x128xf32>, vector<128x128xf32>, vector<64x128xf32> -> vector<64x128xf32>
    %cst_56 = arith.constant dense<0.000000e+00> : vector<64x128xf32>
    %127 = tpu.matmul %0, %126, %cst_56 {dimension_numbers = #tpu.dot_dimension_numbers<[1], [0], [0], [1], [0, 0, 1, 1], [], []>} : vector<64x64xf32>, vector<64x128xf32>, vector<64x128xf32> -> vector<64x128xf32>
    %128 = vector.broadcast %105 : vector<1x128xf32> to vector<64x128xf32>
    %129 = arith.addf %127, %128 : vector<64x128xf32>
    %cst_57 = arith.constant dense<0.000000e+00> : vector<128xf32>
    %130 = vector.multi_reduction <add>, %129, %cst_57 [0] : vector<64x128xf32> to vector<128xf32>
    %131 = vector.shape_cast %130 : vector<128xf32> to vector<1x128xf32>
    %cst_58 = arith.constant 6.400000e+01 : f32
    %132 = vector.broadcast %cst_58 : f32 to vector<1x128xf32>
    %133 = arith.divf %131, %132 : vector<1x128xf32>
    %134 = vector.broadcast %133 : vector<1x128xf32> to vector<64x128xf32>
    %135 = arith.subf %129, %134 : vector<64x128xf32>
    %136 = arith.mulf %135, %135 : vector<64x128xf32>
    %cst_59 = arith.constant dense<0.000000e+00> : vector<128xf32>
    %137 = vector.multi_reduction <add>, %136, %cst_59 [0] : vector<64x128xf32> to vector<128xf32>
    %138 = vector.shape_cast %137 : vector<128xf32> to vector<1x128xf32>
    %cst_60 = arith.constant 6.400000e+01 : f32
    %139 = vector.broadcast %cst_60 : f32 to vector<1x128xf32>
    %140 = arith.divf %138, %139 : vector<1x128xf32>
    %cst_61 = arith.constant 9.99999974E-6 : f32
    %141 = vector.broadcast %cst_61 : f32 to vector<1x128xf32>
    %142 = arith.addf %140, %141 : vector<1x128xf32>
    %143 = math.rsqrt %142 : vector<1x128xf32>
    %144 = vector.broadcast %143 : vector<1x128xf32> to vector<64x128xf32>
    %145 = arith.mulf %135, %144 : vector<64x128xf32>
    %146 = vector.broadcast %106 : vector<1x128xf32> to vector<64x128xf32>
    %147 = arith.mulf %145, %146 : vector<64x128xf32>
    %148 = vector.broadcast %107 : vector<1x128xf32> to vector<64x128xf32>
    %149 = arith.addf %147, %148 : vector<64x128xf32>
    %c3 = arith.constant 3 : index
    %c0_62 = arith.constant 0 : index
    %c0_63 = arith.constant 0 : index
    %150 = vector.load %arg3[%c3, %c0_62, %c0_63] : memref<6x128x128xf32, #tpu.memory_space<vmem>>, vector<1x128x128xf32>
    %151 = vector.shape_cast %150 : vector<1x128x128xf32> to vector<128x128xf32>
    %c3_64 = arith.constant 3 : index
    %c0_65 = arith.constant 0 : index
    %c0_66 = arith.constant 0 : index
    %152 = vector.load %arg4[%c3_64, %c0_65, %c0_66] : memref<6x3x128xf32, #tpu.memory_space<vmem>>, vector<1x3x128xf32>
    %153 = vector.shape_cast %152 : vector<1x3x128xf32> to vector<3x128xf32>
    %154 = vector.extract_strided_slice %153 {offsets = [0, 0], sizes = [1, 128], strides = [1, 1]} : vector<3x128xf32> to vector<1x128xf32>
    %155 = vector.extract_strided_slice %153 {offsets = [1, 0], sizes = [1, 128], strides = [1, 1]} : vector<3x128xf32> to vector<1x128xf32>
    %156 = vector.extract_strided_slice %153 {offsets = [2, 0], sizes = [1, 128], strides = [1, 1]} : vector<3x128xf32> to vector<1x128xf32>
    %cst_67 = arith.constant dense<0.000000e+00> : vector<64x128xf32>
    %157 = tpu.matmul %149, %151, %cst_67 {dimension_numbers = #tpu.dot_dimension_numbers<[1], [0], [0], [1], [0, 0, 1, 1], [], []>} : vector<64x128xf32>, vector<128x128xf32>, vector<64x128xf32> -> vector<64x128xf32>
    %cst_68 = arith.constant dense<0.000000e+00> : vector<64x128xf32>
    %158 = tpu.matmul %0, %157, %cst_68 {dimension_numbers = #tpu.dot_dimension_numbers<[1], [0], [0], [1], [0, 0, 1, 1], [], []>} : vector<64x64xf32>, vector<64x128xf32>, vector<64x128xf32> -> vector<64x128xf32>
    %159 = vector.broadcast %154 : vector<1x128xf32> to vector<64x128xf32>
    %160 = arith.addf %158, %159 : vector<64x128xf32>
    %cst_69 = arith.constant 0.000000e+00 : f32
    %161 = vector.broadcast %cst_69 : f32 to vector<64x128xf32>
    %162 = arith.maximumf %160, %161 : vector<64x128xf32>
    %cst_70 = arith.constant 2.000000e-01 : f32
    %163 = vector.broadcast %cst_70 : f32 to vector<64x128xf32>
    %164 = arith.mulf %163, %122 : vector<64x128xf32>
    %165 = arith.subf %162, %164 : vector<64x128xf32>
    %cst_71 = arith.constant 1.000000e+00 : f32
    %166 = vector.broadcast %cst_71 : f32 to vector<64x128xf32>
    %167 = arith.mulf %166, %149 : vector<64x128xf32>
    %168 = arith.subf %165, %167 : vector<64x128xf32>
    %cst_72 = arith.constant 1.000000e+00 : f32
    %169 = vector.broadcast %cst_72 : f32 to vector<64x128xf32>
    %170 = arith.mulf %169, %168 : vector<64x128xf32>
    %171 = arith.addf %122, %170 : vector<64x128xf32>
    %cst_73 = arith.constant 1.000000e+00 : f32
    %172 = vector.broadcast %cst_73 : f32 to vector<64x128xf32>
    %173 = arith.mulf %172, %171 : vector<64x128xf32>
    %174 = arith.addf %149, %173 : vector<64x128xf32>
    %cst_74 = arith.constant dense<0.000000e+00> : vector<64x128xf32>
    %175 = tpu.matmul %174, %151, %cst_74 {dimension_numbers = #tpu.dot_dimension_numbers<[1], [0], [0], [1], [0, 0, 1, 1], [], []>} : vector<64x128xf32>, vector<128x128xf32>, vector<64x128xf32> -> vector<64x128xf32>
    %cst_75 = arith.constant dense<0.000000e+00> : vector<64x128xf32>
    %176 = tpu.matmul %0, %175, %cst_75 {dimension_numbers = #tpu.dot_dimension_numbers<[1], [0], [0], [1], [0, 0, 1, 1], [], []>} : vector<64x64xf32>, vector<64x128xf32>, vector<64x128xf32> -> vector<64x128xf32>
    %177 = vector.broadcast %154 : vector<1x128xf32> to vector<64x128xf32>
    %178 = arith.addf %176, %177 : vector<64x128xf32>
    %cst_76 = arith.constant dense<0.000000e+00> : vector<128xf32>
    %179 = vector.multi_reduction <add>, %178, %cst_76 [0] : vector<64x128xf32> to vector<128xf32>
    %180 = vector.shape_cast %179 : vector<128xf32> to vector<1x128xf32>
    %cst_77 = arith.constant 6.400000e+01 : f32
    %181 = vector.broadcast %cst_77 : f32 to vector<1x128xf32>
    %182 = arith.divf %180, %181 : vector<1x128xf32>
    %183 = vector.broadcast %182 : vector<1x128xf32> to vector<64x128xf32>
    %184 = arith.subf %178, %183 : vector<64x128xf32>
    %185 = arith.mulf %184, %184 : vector<64x128xf32>
    %cst_78 = arith.constant dense<0.000000e+00> : vector<128xf32>
    %186 = vector.multi_reduction <add>, %185, %cst_78 [0] : vector<64x128xf32> to vector<128xf32>
    %187 = vector.shape_cast %186 : vector<128xf32> to vector<1x128xf32>
    %cst_79 = arith.constant 6.400000e+01 : f32
    %188 = vector.broadcast %cst_79 : f32 to vector<1x128xf32>
    %189 = arith.divf %187, %188 : vector<1x128xf32>
    %cst_80 = arith.constant 9.99999974E-6 : f32
    %190 = vector.broadcast %cst_80 : f32 to vector<1x128xf32>
    %191 = arith.addf %189, %190 : vector<1x128xf32>
    %192 = math.rsqrt %191 : vector<1x128xf32>
    %193 = vector.broadcast %192 : vector<1x128xf32> to vector<64x128xf32>
    %194 = arith.mulf %184, %193 : vector<64x128xf32>
    %195 = vector.broadcast %155 : vector<1x128xf32> to vector<64x128xf32>
    %196 = arith.mulf %194, %195 : vector<64x128xf32>
    %197 = vector.broadcast %156 : vector<1x128xf32> to vector<64x128xf32>
    %198 = arith.addf %196, %197 : vector<64x128xf32>
    %c4 = arith.constant 4 : index
    %c0_81 = arith.constant 0 : index
    %c0_82 = arith.constant 0 : index
    %199 = vector.load %arg3[%c4, %c0_81, %c0_82] : memref<6x128x128xf32, #tpu.memory_space<vmem>>, vector<1x128x128xf32>
    %200 = vector.shape_cast %199 : vector<1x128x128xf32> to vector<128x128xf32>
    %c4_83 = arith.constant 4 : index
    %c0_84 = arith.constant 0 : index
    %c0_85 = arith.constant 0 : index
    %201 = vector.load %arg4[%c4_83, %c0_84, %c0_85] : memref<6x3x128xf32, #tpu.memory_space<vmem>>, vector<1x3x128xf32>
    %202 = vector.shape_cast %201 : vector<1x3x128xf32> to vector<3x128xf32>
    %203 = vector.extract_strided_slice %202 {offsets = [0, 0], sizes = [1, 128], strides = [1, 1]} : vector<3x128xf32> to vector<1x128xf32>
    %204 = vector.extract_strided_slice %202 {offsets = [1, 0], sizes = [1, 128], strides = [1, 1]} : vector<3x128xf32> to vector<1x128xf32>
    %205 = vector.extract_strided_slice %202 {offsets = [2, 0], sizes = [1, 128], strides = [1, 1]} : vector<3x128xf32> to vector<1x128xf32>
    %cst_86 = arith.constant dense<0.000000e+00> : vector<64x128xf32>
    %206 = tpu.matmul %198, %200, %cst_86 {dimension_numbers = #tpu.dot_dimension_numbers<[1], [0], [0], [1], [0, 0, 1, 1], [], []>} : vector<64x128xf32>, vector<128x128xf32>, vector<64x128xf32> -> vector<64x128xf32>
    %cst_87 = arith.constant dense<0.000000e+00> : vector<64x128xf32>
    %207 = tpu.matmul %0, %206, %cst_87 {dimension_numbers = #tpu.dot_dimension_numbers<[1], [0], [0], [1], [0, 0, 1, 1], [], []>} : vector<64x64xf32>, vector<64x128xf32>, vector<64x128xf32> -> vector<64x128xf32>
    %208 = vector.broadcast %203 : vector<1x128xf32> to vector<64x128xf32>
    %209 = arith.addf %207, %208 : vector<64x128xf32>
    %cst_88 = arith.constant 0.000000e+00 : f32
    %210 = vector.broadcast %cst_88 : f32 to vector<64x128xf32>
    %211 = arith.maximumf %209, %210 : vector<64x128xf32>
    %cst_89 = arith.constant 2.000000e-01 : f32
    %212 = vector.broadcast %cst_89 : f32 to vector<64x128xf32>
    %213 = arith.mulf %212, %171 : vector<64x128xf32>
    %214 = arith.subf %211, %213 : vector<64x128xf32>
    %cst_90 = arith.constant 1.000000e+00 : f32
    %215 = vector.broadcast %cst_90 : f32 to vector<64x128xf32>
    %216 = arith.mulf %215, %198 : vector<64x128xf32>
    %217 = arith.subf %214, %216 : vector<64x128xf32>
    %cst_91 = arith.constant 1.000000e+00 : f32
    %218 = vector.broadcast %cst_91 : f32 to vector<64x128xf32>
    %219 = arith.mulf %218, %217 : vector<64x128xf32>
    %220 = arith.addf %171, %219 : vector<64x128xf32>
    %cst_92 = arith.constant 1.000000e+00 : f32
    %221 = vector.broadcast %cst_92 : f32 to vector<64x128xf32>
    %222 = arith.mulf %221, %220 : vector<64x128xf32>
    %223 = arith.addf %198, %222 : vector<64x128xf32>
    %cst_93 = arith.constant dense<0.000000e+00> : vector<64x128xf32>
    %224 = tpu.matmul %223, %200, %cst_93 {dimension_numbers = #tpu.dot_dimension_numbers<[1], [0], [0], [1], [0, 0, 1, 1], [], []>} : vector<64x128xf32>, vector<128x128xf32>, vector<64x128xf32> -> vector<64x128xf32>
    %cst_94 = arith.constant dense<0.000000e+00> : vector<64x128xf32>
    %225 = tpu.matmul %0, %224, %cst_94 {dimension_numbers = #tpu.dot_dimension_numbers<[1], [0], [0], [1], [0, 0, 1, 1], [], []>} : vector<64x64xf32>, vector<64x128xf32>, vector<64x128xf32> -> vector<64x128xf32>
    %226 = vector.broadcast %203 : vector<1x128xf32> to vector<64x128xf32>
    %227 = arith.addf %225, %226 : vector<64x128xf32>
    %cst_95 = arith.constant dense<0.000000e+00> : vector<128xf32>
    %228 = vector.multi_reduction <add>, %227, %cst_95 [0] : vector<64x128xf32> to vector<128xf32>
    %229 = vector.shape_cast %228 : vector<128xf32> to vector<1x128xf32>
    %cst_96 = arith.constant 6.400000e+01 : f32
    %230 = vector.broadcast %cst_96 : f32 to vector<1x128xf32>
    %231 = arith.divf %229, %230 : vector<1x128xf32>
    %232 = vector.broadcast %231 : vector<1x128xf32> to vector<64x128xf32>
    %233 = arith.subf %227, %232 : vector<64x128xf32>
    %234 = arith.mulf %233, %233 : vector<64x128xf32>
    %cst_97 = arith.constant dense<0.000000e+00> : vector<128xf32>
    %235 = vector.multi_reduction <add>, %234, %cst_97 [0] : vector<64x128xf32> to vector<128xf32>
    %236 = vector.shape_cast %235 : vector<128xf32> to vector<1x128xf32>
    %cst_98 = arith.constant 6.400000e+01 : f32
    %237 = vector.broadcast %cst_98 : f32 to vector<1x128xf32>
    %238 = arith.divf %236, %237 : vector<1x128xf32>
    %cst_99 = arith.constant 9.99999974E-6 : f32
    %239 = vector.broadcast %cst_99 : f32 to vector<1x128xf32>
    %240 = arith.addf %238, %239 : vector<1x128xf32>
    %241 = math.rsqrt %240 : vector<1x128xf32>
    %242 = vector.broadcast %241 : vector<1x128xf32> to vector<64x128xf32>
    %243 = arith.mulf %233, %242 : vector<64x128xf32>
    %244 = vector.broadcast %204 : vector<1x128xf32> to vector<64x128xf32>
    %245 = arith.mulf %243, %244 : vector<64x128xf32>
    %246 = vector.broadcast %205 : vector<1x128xf32> to vector<64x128xf32>
    %247 = arith.addf %245, %246 : vector<64x128xf32>
    %c5 = arith.constant 5 : index
    %c0_100 = arith.constant 0 : index
    %c0_101 = arith.constant 0 : index
    %248 = vector.load %arg3[%c5, %c0_100, %c0_101] : memref<6x128x128xf32, #tpu.memory_space<vmem>>, vector<1x128x128xf32>
    %249 = vector.shape_cast %248 : vector<1x128x128xf32> to vector<128x128xf32>
    %c5_102 = arith.constant 5 : index
    %c0_103 = arith.constant 0 : index
    %c0_104 = arith.constant 0 : index
    %250 = vector.load %arg4[%c5_102, %c0_103, %c0_104] : memref<6x3x128xf32, #tpu.memory_space<vmem>>, vector<1x3x128xf32>
    %251 = vector.shape_cast %250 : vector<1x3x128xf32> to vector<3x128xf32>
    %252 = vector.extract_strided_slice %251 {offsets = [0, 0], sizes = [1, 128], strides = [1, 1]} : vector<3x128xf32> to vector<1x128xf32>
    %253 = vector.extract_strided_slice %251 {offsets = [1, 0], sizes = [1, 128], strides = [1, 1]} : vector<3x128xf32> to vector<1x128xf32>
    %254 = vector.extract_strided_slice %251 {offsets = [2, 0], sizes = [1, 128], strides = [1, 1]} : vector<3x128xf32> to vector<1x128xf32>
    %cst_105 = arith.constant dense<0.000000e+00> : vector<64x128xf32>
    %255 = tpu.matmul %247, %249, %cst_105 {dimension_numbers = #tpu.dot_dimension_numbers<[1], [0], [0], [1], [0, 0, 1, 1], [], []>} : vector<64x128xf32>, vector<128x128xf32>, vector<64x128xf32> -> vector<64x128xf32>
    %cst_106 = arith.constant dense<0.000000e+00> : vector<64x128xf32>
    %256 = tpu.matmul %0, %255, %cst_106 {dimension_numbers = #tpu.dot_dimension_numbers<[1], [0], [0], [1], [0, 0, 1, 1], [], []>} : vector<64x64xf32>, vector<64x128xf32>, vector<64x128xf32> -> vector<64x128xf32>
    %257 = vector.broadcast %252 : vector<1x128xf32> to vector<64x128xf32>
    %258 = arith.addf %256, %257 : vector<64x128xf32>
    %cst_107 = arith.constant 0.000000e+00 : f32
    %259 = vector.broadcast %cst_107 : f32 to vector<64x128xf32>
    %260 = arith.maximumf %258, %259 : vector<64x128xf32>
    %cst_108 = arith.constant 2.000000e-01 : f32
    %261 = vector.broadcast %cst_108 : f32 to vector<64x128xf32>
    %262 = arith.mulf %261, %220 : vector<64x128xf32>
    %263 = arith.subf %260, %262 : vector<64x128xf32>
    %cst_109 = arith.constant 1.000000e+00 : f32
    %264 = vector.broadcast %cst_109 : f32 to vector<64x128xf32>
    %265 = arith.mulf %264, %247 : vector<64x128xf32>
    %266 = arith.subf %263, %265 : vector<64x128xf32>
    %cst_110 = arith.constant 1.000000e+00 : f32
    %267 = vector.broadcast %cst_110 : f32 to vector<64x128xf32>
    %268 = arith.mulf %267, %266 : vector<64x128xf32>
    %269 = arith.addf %220, %268 : vector<64x128xf32>
    %cst_111 = arith.constant 1.000000e+00 : f32
    %270 = vector.broadcast %cst_111 : f32 to vector<64x128xf32>
    %271 = arith.mulf %270, %269 : vector<64x128xf32>
    %272 = arith.addf %247, %271 : vector<64x128xf32>
    %cst_112 = arith.constant dense<0.000000e+00> : vector<64x128xf32>
    %273 = tpu.matmul %272, %249, %cst_112 {dimension_numbers = #tpu.dot_dimension_numbers<[1], [0], [0], [1], [0, 0, 1, 1], [], []>} : vector<64x128xf32>, vector<128x128xf32>, vector<64x128xf32> -> vector<64x128xf32>
    %cst_113 = arith.constant dense<0.000000e+00> : vector<64x128xf32>
    %274 = tpu.matmul %0, %273, %cst_113 {dimension_numbers = #tpu.dot_dimension_numbers<[1], [0], [0], [1], [0, 0, 1, 1], [], []>} : vector<64x64xf32>, vector<64x128xf32>, vector<64x128xf32> -> vector<64x128xf32>
    %275 = vector.broadcast %252 : vector<1x128xf32> to vector<64x128xf32>
    %276 = arith.addf %274, %275 : vector<64x128xf32>
    %cst_114 = arith.constant dense<0.000000e+00> : vector<128xf32>
    %277 = vector.multi_reduction <add>, %276, %cst_114 [0] : vector<64x128xf32> to vector<128xf32>
    %278 = vector.shape_cast %277 : vector<128xf32> to vector<1x128xf32>
    %cst_115 = arith.constant 6.400000e+01 : f32
    %279 = vector.broadcast %cst_115 : f32 to vector<1x128xf32>
    %280 = arith.divf %278, %279 : vector<1x128xf32>
    %281 = vector.broadcast %280 : vector<1x128xf32> to vector<64x128xf32>
    %282 = arith.subf %276, %281 : vector<64x128xf32>
    %283 = arith.mulf %282, %282 : vector<64x128xf32>
    %cst_116 = arith.constant dense<0.000000e+00> : vector<128xf32>
    %284 = vector.multi_reduction <add>, %283, %cst_116 [0] : vector<64x128xf32> to vector<128xf32>
    %285 = vector.shape_cast %284 : vector<128xf32> to vector<1x128xf32>
    %cst_117 = arith.constant 6.400000e+01 : f32
    %286 = vector.broadcast %cst_117 : f32 to vector<1x128xf32>
    %287 = arith.divf %285, %286 : vector<1x128xf32>
    %cst_118 = arith.constant 9.99999974E-6 : f32
    %288 = vector.broadcast %cst_118 : f32 to vector<1x128xf32>
    %289 = arith.addf %287, %288 : vector<1x128xf32>
    %290 = math.rsqrt %289 : vector<1x128xf32>
    %291 = vector.broadcast %290 : vector<1x128xf32> to vector<64x128xf32>
    %292 = arith.mulf %282, %291 : vector<64x128xf32>
    %293 = vector.broadcast %253 : vector<1x128xf32> to vector<64x128xf32>
    %294 = arith.mulf %292, %293 : vector<64x128xf32>
    %295 = vector.broadcast %254 : vector<1x128xf32> to vector<64x128xf32>
    %296 = arith.addf %294, %295 : vector<64x128xf32>
    %c0_119 = arith.constant 0 : index
    %c0_120 = arith.constant 0 : index
    %297 = vector.load %arg5[%c0_119, %c0_120] : memref<64x128xf32, #tpu.memory_space<vmem>>, vector<64x128xf32>
    tpu.vector_store %arg5[%c0_119, %c0_120], %296 {strides = array<i32>} : memref<64x128xf32, #tpu.memory_space<vmem>>, vector<64x128xf32>,
    return
  }
}

</mosaic_0001>

<llo_original>
// kernel: tpu_custom_call.1
$region0: #{tpu_custom_call.1}
  #allocation0 [shape = 'u32[]', space=smem, size = 0x4, offset = 0x4, fixed_abs, tag = 'smem constant byte address 0x4 - core index']
  #allocation1 [shape = 'u32[144,128]{1,0:T(1,128)}', space=vmem, size = 0x12000, scoped, tag = 'internal scratch']
  %s0 = inlined_call_operand.hbm [shape: f32[64,64], index: 0, kind: input, shape index: {}]
  %s1 = inlined_call_operand.hbm [shape: f32[64,128], index: 1, kind: input, shape index: {}]
  %s2 = inlined_call_operand.hbm [shape: f32[64,128], index: 2, kind: input, shape index: {}]
  %s3 = inlined_call_operand.hbm [shape: f32[6,128,128], index: 3, kind: input, shape index: {}]
  %s4 = inlined_call_operand.hbm [shape: f32[6,3,128], index: 4, kind: input, shape index: {}]
  %s5 = inlined_call_operand.hbm [shape: f32[64,128], index: 5, kind: output, shape index: {}]
  %s6 = sld [smem:[#allocation0]]
  $region50: #{tpu_custom_call.1} parent=0
    _
  %s8 = ssub.s32 1, %s6
  %s9 = scalar_select 0, %s8, %s6
  $region1: #{tpu_custom_call.1} parent=0
    #allocation2 [shape = 'u8[32768]{0}', space=vmem, size = 0x8000, scoped, tag = 'input window, operand 0, single buffered']
    #allocation3 [shape = 's32[1]{0}', space=sflag, size = 0x4, scoped, tag = 'scoped memory for tpu_custom_call.1']
    #allocation4 [shape = 's32[1]{0}', space=sflag, size = 0x4, scoped, tag = 'scoped memory for tpu_custom_call.1']
    #allocation5 [shape = 'u8[32768]{0}', space=vmem, size = 0x8000, scoped, tag = 'input window, operand 1, single buffered']
    #allocation6 [shape = 's32[1]{0}', space=sflag, size = 0x4, scoped, tag = 'scoped memory for tpu_custom_call.1']
    #allocation7 [shape = 'u8[32768]{0}', space=vmem, size = 0x8000, scoped, tag = 'input window, operand 2, single buffered']
    #allocation8 [shape = 'u8[393216]{0}', space=vmem, size = 0x60000, scoped, tag = 'input window, operand 3, single buffered']
    #allocation9 [shape = 's32[1]{0}', space=sflag, size = 0x4, scoped, tag = 'scoped memory for tpu_custom_call.1']
    #allocation10 [shape = 'u8[12288]{0}', space=vmem, size = 0x3000, scoped, tag = 'input window, operand 4, single buffered']
    #allocation11 [shape = 'u8[32768]{0}', space=vmem, size = 0x8000, scoped, tag = 'output window, operand 0, single buffered']
    %10 = vsyncpa [#allocation3], 0
    %11 = vsyncpa [#allocation6], 0
    %12 = vsyncpa [#allocation9], 0
    %13 = vsyncpa [#allocation4], 0
    // Predicated region
    $region2: #{tpu_custom_call.1} parent=1 // pred_check
      _
    $region3: #{tpu_custom_call.1} parent=1 // pred_check_branch
      %15 = sbr.rel (0) target = $region5
    $region4: #{tpu_custom_call.1} parent=1 // pred_region
      %s17 = ssub.s32 1024, 1024
      %18 = vsyncadd [#allocation3], %s17
      %s19 = sshll.u32 [#allocation2], 4
      %s20 = int_to_ptr.vmem [resolvable:$true] %s19
      %25 = dma.hbm_to_vmem [thread:$0]  %s0, 1024, %s20, [#allocation3], 128, 128, 8
    $region5: #{tpu_custom_call.1} parent=1 // pred_fallthru
      _
    // Predicated region
    $region6: #{tpu_custom_call.1} parent=1 // pred_check
      _
    $region7: #{tpu_custom_call.1} parent=1 // pred_check_branch
      %27 = sbr.rel (0) target = $region9
    $region8: #{tpu_custom_call.1} parent=1 // pred_region
      %s29 = ssub.s32 1024, 1024
      %30 = vsyncadd [#allocation6], %s29
      %s31 = sshll.u32 [#allocation5], 4
      %s32 = int_to_ptr.vmem [resolvable:$true] %s31
      %37 = dma.hbm_to_vmem [thread:$0]  %s1, 1024, %s32, [#allocation6], 128, 128, 8
    $region9: #{tpu_custom_call.1} parent=1 // pred_fallthru
      _
    // Predicated region
    $region10: #{tpu_custom_call.1} parent=1 // pred_check
      _
    $region11: #{tpu_custom_call.1} parent=1 // pred_check_branch
      %39 = sbr.rel (0) target = $region13
    $region12: #{tpu_custom_call.1} parent=1 // pred_region
      %s41 = ssub.s32 1024, 1024
      %42 = vsyncadd [#allocation6], %s41
      %s43 = sshll.u32 [#allocation7], 4
      %s44 = int_to_ptr.vmem [resolvable:$true] %s43
      %49 = dma.hbm_to_vmem [thread:$0]  %s2, 1024, %s44, [#allocation6], 128, 128, 8
    $region13: #{tpu_custom_call.1} parent=1 // pred_fallthru
      _
    // Predicated region
    $region14: #{tpu_custom_call.1} parent=1 // pred_check
      _
    $region15: #{tpu_custom_call.1} parent=1 // pred_check_branch
      %51 = sbr.rel (0) target = $region17
    $region16: #{tpu_custom_call.1} parent=1 // pred_region
      %s53 = ssub.s32 12288, 12288
      %54 = vsyncadd [#allocation9], %s53
      %s55 = sshll.u32 [#allocation8], 4
      %s56 = int_to_ptr.vmem [resolvable:$true] %s55
      %61 = dma.hbm_to_vmem [thread:$0]  %s3, 12288, %s56, [#allocation9], 128, 128, 8
    $region17: #{tpu_custom_call.1} parent=1 // pred_fallthru
      _
    // Predicated region
    $region18: #{tpu_custom_call.1} parent=1 // pred_check
      _
    $region19: #{tpu_custom_call.1} parent=1 // pred_check_branch
      %63 = sbr.rel (0) target = $region21
    $region20: #{tpu_custom_call.1} parent=1 // pred_region
      %s65 = ssub.s32 384, 384
      %66 = vsyncadd [#allocation9], %s65
      %s67 = sshll.u32 [#allocation10], 4
      %s68 = int_to_ptr.vmem [resolvable:$true] %s67
      %73 = dma.hbm_to_vmem [thread:$0]  %s4, 384, %s68, [#allocation9], 64, 64, 4
    $region21: #{tpu_custom_call.1} parent=1 // pred_fallthru
      _
    // Predicated region
    $region22: #{tpu_custom_call.1} parent=1 // pred_check
      _
    $region23: #{tpu_custom_call.1} parent=1 // pred_check_branch
      %75 = sbr.rel (0) target = $region25
    $region24: #{tpu_custom_call.1} parent=1 // pred_region
      %76 = dma.done [#allocation3], 1024
    $region25: #{tpu_custom_call.1} parent=1 // pred_fallthru
      _
    // Predicated region
    $region26: #{tpu_custom_call.1} parent=1 // pred_check
      _
    $region27: #{tpu_custom_call.1} parent=1 // pred_check_branch
      %78 = sbr.rel (0) target = $region29
    $region28: #{tpu_custom_call.1} parent=1 // pred_region
      %79 = dma.done [#allocation6], 1024
    $region29: #{tpu_custom_call.1} parent=1 // pred_fallthru
      _
    // Predicated region
    $region30: #{tpu_custom_call.1} parent=1 // pred_check
      _
    $region31: #{tpu_custom_call.1} parent=1 // pred_check_branch
      %81 = sbr.rel (0) target = $region33
    $region32: #{tpu_custom_call.1} parent=1 // pred_region
      %82 = dma.done [#allocation6], 1024
    $region33: #{tpu_custom_call.1} parent=1 // pred_fallthru
      _
    // Predicated region
    $region34: #{tpu_custom_call.1} parent=1 // pred_check
      _
    $region35: #{tpu_custom_call.1} parent=1 // pred_check_branch
      %84 = sbr.rel (0) target = $region37
    $region36: #{tpu_custom_call.1} parent=1 // pred_region
      %85 = dma.done [#allocation9], 12288
    $region37: #{tpu_custom_call.1} parent=1 // pred_fallthru
      _
    // Predicated region
    $region38: #{tpu_custom_call.1} parent=1 // pred_check
      _
    $region39: #{tpu_custom_call.1} parent=1 // pred_check_branch
      %87 = sbr.rel (0) target = $region41
    $region40: #{tpu_custom_call.1} parent=1 // pred_region
      %88 = dma.done [#allocation9], 384
    $region41: #{tpu_custom_call.1} parent=1 // pred_fallthru
      _
    %v89 = vld [vmem:[#allocation2] sm:$0xff]
    %v90 = vld [vmem:[#allocation2 + $0x8] sm:$0xff]
    %v91 = vld [vmem:[#allocation2 + $0x10] sm:$0xff]
    %v92 = vld [vmem:[#allocation2 + $0x18] sm:$0xff]
    %v93 = vld [vmem:[#allocation2 + $0x20] sm:$0xff]
    %v94 = vld [vmem:[#allocation2 + $0x28] sm:$0xff]
    %v95 = vld [vmem:[#allocation2 + $0x30] sm:$0xff]
    %v96 = vld [vmem:[#allocation2 + $0x38] sm:$0xff]
    %v97 = vld [vmem:[#allocation5] sm:$0xff]
    %v98 = vld [vmem:[#allocation5 + $0x8] sm:$0xff]
    %v99 = vld [vmem:[#allocation5 + $0x10] sm:$0xff]
    %v100 = vld [vmem:[#allocation5 + $0x18] sm:$0xff]
    %v101 = vld [vmem:[#allocation5 + $0x20] sm:$0xff]
    %v102 = vld [vmem:[#allocation5 + $0x28] sm:$0xff]
    %v103 = vld [vmem:[#allocation5 + $0x30] sm:$0xff]
    %v104 = vld [vmem:[#allocation5 + $0x38] sm:$0xff]
    %v105 = vld [vmem:[#allocation7] sm:$0xff]
    %v106 = vld [vmem:[#allocation7 + $0x8] sm:$0xff]
    %v107 = vld [vmem:[#allocation7 + $0x10] sm:$0xff]
    %v108 = vld [vmem:[#allocation7 + $0x18] sm:$0xff]
    %v109 = vld [vmem:[#allocation7 + $0x20] sm:$0xff]
    %v110 = vld [vmem:[#allocation7 + $0x28] sm:$0xff]
    %v111 = vld [vmem:[#allocation7 + $0x30] sm:$0xff]
    %v112 = vld [vmem:[#allocation7 + $0x38] sm:$0xff]
    %v113 = vld [vmem:[#allocation8] sm:$0xff]
    %v114 = vld [vmem:[#allocation8 + $0x8] sm:$0xff]
    %v115 = vld [vmem:[#allocation8 + $0x10] sm:$0xff]
    %v116 = vld [vmem:[#allocation8 + $0x18] sm:$0xff]
    %v117 = vld [vmem:[#allocation8 + $0x20] sm:$0xff]
    %v118 = vld [vmem:[#allocation8 + $0x28] sm:$0xff]
    %v119 = vld [vmem:[#allocation8 + $0x30] sm:$0xff]
    %v120 = vld [vmem:[#allocation8 + $0x38] sm:$0xff]
    %v121 = vld [vmem:[#allocation8 + $0x40] sm:$0xff]
    %v122 = vld [vmem:[#allocation8 + $0x48] sm:$0xff]
    %v123 = vld [vmem:[#allocation8 + $0x50] sm:$0xff]
    %v124 = vld [vmem:[#allocation8 + $0x58] sm:$0xff]
    %v125 = vld [vmem:[#allocation8 + $0x60] sm:$0xff]
    %v126 = vld [vmem:[#allocation8 + $0x68] sm:$0xff]
    %v127 = vld [vmem:[#allocation8 + $0x70] sm:$0xff]
    %v128 = vld [vmem:[#allocation8 + $0x78] sm:$0xff]
    %v129 = vld [vmem:[#allocation10] sm:$0x7]
    %130 = vmatprep.subr.mxu0 0.0
    %131 = vmatpush1.msra.mxu0 %v128
    %132 = vmatprep.subr.mxu0 0.0
    %133 = vmatpush1.msra.mxu0 %v127
    %134 = vmatprep.subr.mxu0 0.0
    %135 = vmatpush1.msra.mxu0 %v126
    %136 = vmatprep.subr.mxu0 0.0
    %137 = vmatpush1.msra.mxu0 %v125
    %138 = vmatprep.subr.mxu0 0.0
    %139 = vmatpush1.msra.mxu0 %v124
    %140 = vmatprep.subr.mxu0 0.0
    %141 = vmatpush1.msra.mxu0 %v123
    %142 = vmatprep.subr.mxu0 0.0
    %143 = vmatpush1.msra.mxu0 %v122
    %144 = vmatprep.subr.mxu0 0.0
    %145 = vmatpush1.msra.mxu0 %v121
    %146 = vmatprep.subr.mxu0 0.0
    %147 = vmatpush1.msra.mxu0 %v120
    %148 = vmatprep.subr.mxu0 0.0
    %149 = vmatpush1.msra.mxu0 %v119
    %150 = vmatprep.subr.mxu0 0.0
    %151 = vmatpush1.msra.mxu0 %v118
    %152 = vmatprep.subr.mxu0 0.0
    %153 = vmatpush1.msra.mxu0 %v117
    %154 = vmatprep.subr.mxu0 0.0
    %155 = vmatpush1.msra.mxu0 %v116
    %156 = vmatprep.subr.mxu0 0.0
    %157 = vmatpush1.msra.mxu0 %v115
    %158 = vmatprep.subr.mxu0 0.0
    %159 = vmatpush1.msra.mxu0 %v114
    %160 = vmatprep.subr.mxu0 0.0
    %161 = vmatpush1.msra.mxu0 %v113
    %162 = vmatprep.subr.mxu0 0.0
    %163 = vmatpush2.msra.mxu0 0.0
    %164 = vmatprep.subr.mxu0 0.0
    %165 = vmatpush2.msra.mxu0 0.0
    %166 = vmatprep.subr.mxu0 0.0
    %167 = vmatpush2.msra.mxu0 0.0
    %168 = vmatprep.subr.mxu0 0.0
    %169 = vmatpush2.msra.mxu0 0.0
    %170 = vmatprep.subr.mxu0 0.0
    %171 = vmatpush2.msra.mxu0 0.0
    %172 = vmatprep.subr.mxu0 0.0
    %173 = vmatpush2.msra.mxu0 0.0
    %174 = vmatprep.subr.mxu0 0.0
    %175 = vmatpush2.msra.mxu0 0.0
    %176 = vmatprep.subr.mxu0 0.0
    %177 = vmatpush2.msra.mxu0 0.0
    %178 = vmatprep.subr.mxu0 0.0
    %179 = vmatpush2.msra.mxu0 0.0
    %180 = vmatprep.subr.mxu0 0.0
    %181 = vmatpush2.msra.mxu0 0.0
    %182 = vmatprep.subr.mxu0 0.0
    %183 = vmatpush2.msra.mxu0 0.0
    %184 = vmatprep.subr.mxu0 0.0
    %185 = vmatpush2.msra.mxu0 0.0
    %186 = vmatprep.subr.mxu0 0.0
    %187 = vmatpush2.msra.mxu0 0.0
    %188 = vmatprep.subr.mxu0 0.0
    %189 = vmatpush2.msra.mxu0 0.0
    %190 = vmatprep.subr.mxu0 0.0
    %191 = vmatpush2.msra.mxu0 0.0
    %192 = vmatprep.subr.mxu0 0.0
    %193 = vmatpush2.msra.mxu0 0.0
    %194 = vmatprep.mubr.f32.mxu0 0.0
    %195 = vmatmul.mubr.f32.gmra.mxu0 %v97
    %v196 = vpop.f32.mrf.mxu0
    %v197 = vadd.f32 0.0, %v196
    %v198 = vpop.f32.mrf.mxu0
    %199 = vmatprep.mubr.f32.mxu0 0.0
    %200 = vmatmul.mubr.f32.gmra.mxu0 %v98
    %v201 = vpop.f32.mrf.mxu0
    %v202 = vadd.f32 0.0, %v201
    %v203 = vpop.f32.mrf.mxu0
    %204 = vmatprep.mubr.f32.mxu0 0.0
    %205 = vmatmul.mubr.f32.gmra.mxu0 %v99
    %v206 = vpop.f32.mrf.mxu0
    %v207 = vadd.f32 0.0, %v206
    %v208 = vpop.f32.mrf.mxu0
    %209 = vmatprep.mubr.f32.mxu0 0.0
    %210 = vmatmul.mubr.f32.gmra.mxu0 %v100
    %v211 = vpop.f32.mrf.mxu0
    %v212 = vadd.f32 0.0, %v211
    %v213 = vpop.f32.mrf.mxu0
    %214 = vmatprep.mubr.f32.mxu0 0.0
    %215 = vmatmul.mubr.f32.gmra.mxu0 %v101
    %v216 = vpop.f32.mrf.mxu0
    %v217 = vadd.f32 0.0, %v216
    %v218 = vpop.f32.mrf.mxu0
    %219 = vmatprep.mubr.f32.mxu0 0.0
    %220 = vmatmul.mubr.f32.gmra.mxu0 %v102
    %v221 = vpop.f32.mrf.mxu0
    %v222 = vadd.f32 0.0, %v221
    %v223 = vpop.f32.mrf.mxu0
    %224 = vmatprep.mubr.f32.mxu0 0.0
    %225 = vmatmul.mubr.f32.gmra.mxu0 %v103
    %v226 = vpop.f32.mrf.mxu0
    %v227 = vadd.f32 0.0, %v226
    %v228 = vpop.f32.mrf.mxu0
    %229 = vmatprep.mubr.f32.mxu0 0.0
    %230 = vmatmul.mubr.f32.gmra.mxu0 %v104
    %v231 = vpop.f32.mrf.mxu0
    %v232 = vadd.f32 0.0, %v231
    %v233 = vpop.f32.mrf.mxu0
    %234 = vdwg.mxu0
    %v235 = vlaneseq
    %v236 = vshrl.u32 %v235, 7
    %v237 = vsub.s32 0, %v236
    %v238 = vrot.slane %v129, %v237
    %vm239 = vcmask 523264
    %v241 = vsel %vm239, %v89, 0
    %v244 = vsel %vm239, %v90, 0
    %v247 = vsel %vm239, %v91, 0
    %v250 = vsel %vm239, %v92, 0
    %v253 = vsel %vm239, %v93, 0
    %v256 = vsel %vm239, %v94, 0
    %v259 = vsel %vm239, %v95, 0
    %v262 = vsel %vm239, %v96, 0
    %264 = vmatprep.subr.mxu0 0.0
    %265 = vmatpush1.msra.mxu0 0.0
    %266 = vmatprep.subr.mxu0 0.0
    %267 = vmatpush1.msra.mxu0 0.0
    %268 = vmatprep.subr.mxu0 0.0
    %269 = vmatpush1.msra.mxu0 0.0
    %270 = vmatprep.subr.mxu0 0.0
    %271 = vmatpush1.msra.mxu0 0.0
    %272 = vmatprep.subr.mxu0 0.0
    %273 = vmatpush1.msra.mxu0 0.0
    %274 = vmatprep.subr.mxu0 0.0
    %275 = vmatpush1.msra.mxu0 0.0
    %276 = vmatprep.subr.mxu0 0.0
    %277 = vmatpush1.msra.mxu0 0.0
    %278 = vmatprep.subr.mxu0 0.0
    %279 = vmatpush1.msra.mxu0 0.0
    %280 = vmatprep.subr.mxu0 0.0
    %281 = vmatpush1.msra.mxu0 %v232
    %282 = vmatprep.subr.mxu0 0.0
    %283 = vmatpush1.msra.mxu0 %v227
    %284 = vmatprep.subr.mxu0 0.0
    %285 = vmatpush1.msra.mxu0 %v222
    %286 = vmatprep.subr.mxu0 0.0
    %287 = vmatpush1.msra.mxu0 %v217
    %288 = vmatprep.subr.mxu0 0.0
    %289 = vmatpush1.msra.mxu0 %v212
    %290 = vmatprep.subr.mxu0 0.0
    %291 = vmatpush1.msra.mxu0 %v207
    %292 = vmatprep.subr.mxu0 0.0
    %293 = vmatpush1.msra.mxu0 %v202
    %294 = vmatprep.subr.mxu0 0.0
    %295 = vmatpush1.msra.mxu0 %v197
    %296 = vmatprep.subr.mxu0 0.0
    %297 = vmatpush2.msra.mxu0 0.0
    %298 = vmatprep.subr.mxu0 0.0
    %299 = vmatpush2.msra.mxu0 0.0
    %300 = vmatprep.subr.mxu0 0.0
    %301 = vmatpush2.msra.mxu0 0.0
    %302 = vmatprep.subr.mxu0 0.0
    %303 = vmatpush2.msra.mxu0 0.0
    %304 = vmatprep.subr.mxu0 0.0
    %305 = vmatpush2.msra.mxu0 0.0
    %306 = vmatprep.subr.mxu0 0.0
    %307 = vmatpush2.msra.mxu0 0.0
    %308 = vmatprep.subr.mxu0 0.0
    %309 = vmatpush2.msra.mxu0 0.0
    %310 = vmatprep.subr.mxu0 0.0
    %311 = vmatpush2.msra.mxu0 0.0
    %312 = vmatprep.subr.mxu0 0.0
    %313 = vmatpush2.msra.mxu0 0.0
    %314 = vmatprep.subr.mxu0 0.0
    %315 = vmatpush2.msra.mxu0 0.0
    %316 = vmatprep.subr.mxu0 0.0
    %317 = vmatpush2.msra.mxu0 0.0
    %318 = vmatprep.subr.mxu0 0.0
    %319 = vmatpush2.msra.mxu0 0.0
    %320 = vmatprep.subr.mxu0 0.0
    %321 = vmatpush2.msra.mxu0 0.0
    %322 = vmatprep.subr.mxu0 0.0
    %323 = vmatpush2.msra.mxu0 0.0
    %324 = vmatprep.subr.mxu0 0.0
    %325 = vmatpush2.msra.mxu0 0.0
    %326 = vmatprep.subr.mxu0 0.0
    %327 = vmatpush2.msra.mxu0 0.0
    %328 = vmatprep.mubr.f32.mxu0 0.0
    %329 = vmatmul.mubr.f32.gmra.mxu0 %v241
    %v330 = vpop.f32.mrf.mxu0
    %v331 = vadd.f32 %v238, %v330
    %v332 = vpop.f32.mrf.mxu0
    %333 = vmatprep.mubr.f32.mxu0 0.0
    %334 = vmatmul.mubr.f32.gmra.mxu0 %v244
    %v335 = vpop.f32.mrf.mxu0
    %v336 = vadd.f32 %v238, %v335
    %v337 = vpop.f32.mrf.mxu0
    %338 = vmatprep.mubr.f32.mxu0 0.0
    %339 = vmatmul.mubr.f32.gmra.mxu0 %v247
    %v340 = vpop.f32.mrf.mxu0
    %v341 = vadd.f32 %v238, %v340
    %v342 = vpop.f32.mrf.mxu0
    %343 = vmatprep.mubr.f32.mxu0 0.0
    %344 = vmatmul.mubr.f32.gmra.mxu0 %v250
    %v345 = vpop.f32.mrf.mxu0
    %v346 = vadd.f32 %v238, %v345
    %v347 = vpop.f32.mrf.mxu0
    %348 = vmatprep.mubr.f32.mxu0 0.0
    %349 = vmatmul.mubr.f32.gmra.mxu0 %v253
    %v350 = vpop.f32.mrf.mxu0
    %v351 = vadd.f32 %v238, %v350
    %v352 = vpop.f32.mrf.mxu0
    %353 = vmatprep.mubr.f32.mxu0 0.0
    %354 = vmatmul.mubr.f32.gmra.mxu0 %v256
    %v355 = vpop.f32.mrf.mxu0
    %v356 = vadd.f32 %v238, %v355
    %v357 = vpop.f32.mrf.mxu0
    %358 = vmatprep.mubr.f32.mxu0 0.0
    %359 = vmatmul.mubr.f32.gmra.mxu0 %v259
    %v360 = vpop.f32.mrf.mxu0
    %v361 = vadd.f32 %v238, %v360
    %v362 = vpop.f32.mrf.mxu0
    %363 = vmatprep.mubr.f32.mxu0 0.0
    %364 = vmatmul.mubr.f32.gmra.mxu0 %v262
    %v365 = vpop.f32.mrf.mxu0
    %v366 = vadd.f32 %v238, %v365
    %v367 = vpop.f32.mrf.mxu0
    %368 = vdwg.mxu0
    %v369 = vmax.f32 %v331, 0.0
    %v370 = vmax.f32 %v336, 0.0
    %v371 = vmax.f32 %v341, 0.0
    %v372 = vmax.f32 %v346, 0.0
    %v373 = vmax.f32 %v351, 0.0
    %v374 = vmax.f32 %v356, 0.0
    %v375 = vmax.f32 %v361, 0.0
    %v376 = vmax.f32 %v366, 0.0
    %v377 = vmul.f32 %v105, 0.2
    %v378 = vmul.f32 %v106, 0.2
    %v379 = vmul.f32 %v107, 0.2
    %v380 = vmul.f32 %v108, 0.2
    %v381 = vmul.f32 %v109, 0.2
    %v382 = vmul.f32 %v110, 0.2
    %v383 = vmul.f32 %v111, 0.2
    %v384 = vmul.f32 %v112, 0.2
    %v385 = vsub.f32 %v369, %v377
    %v386 = vsub.f32 %v370, %v378
    %v387 = vsub.f32 %v371, %v379
    %v388 = vsub.f32 %v372, %v380
    %v389 = vsub.f32 %v373, %v381
    %v390 = vsub.f32 %v374, %v382
    %v391 = vsub.f32 %v375, %v383
    %v392 = vsub.f32 %v376, %v384
    %v393 = vsub.f32 %v385, %v97
    %v394 = vsub.f32 %v386, %v98
    %v395 = vsub.f32 %v387, %v99
    %v396 = vsub.f32 %v388, %v100
    %v397 = vsub.f32 %v389, %v101
    %v398 = vsub.f32 %v390, %v102
    %v399 = vsub.f32 %v391, %v103
    %v400 = vsub.f32 %v392, %v104
    %v401 = vadd.f32 %v105, %v393
    %v402 = vadd.f32 %v106, %v394
    %v403 = vadd.f32 %v107, %v395
    %v404 = vadd.f32 %v108, %v396
    %v405 = vadd.f32 %v109, %v397
    %v406 = vadd.f32 %v110, %v398
    %v407 = vadd.f32 %v111, %v399
    %v408 = vadd.f32 %v112, %v400
    %v409 = vadd.f32 %v97, %v401
    %v410 = vadd.f32 %v98, %v402
    %v411 = vadd.f32 %v99, %v403
    %v412 = vadd.f32 %v100, %v404
    %v413 = vadd.f32 %v101, %v405
    %v414 = vadd.f32 %v102, %v406
    %v415 = vadd.f32 %v103, %v407
    %v416 = vadd.f32 %v104, %v408
    %417 = vmatprep.subr.mxu0 0.0
    %418 = vmatpush1.msra.mxu0 %v128
    %419 = vmatprep.subr.mxu0 0.0
    %420 = vmatpush1.msra.mxu0 %v127
    %421 = vmatprep.subr.mxu0 0.0
    %422 = vmatpush1.msra.mxu0 %v126
    %423 = vmatprep.subr.mxu0 0.0
    %424 = vmatpush1.msra.mxu0 %v125
    %425 = vmatprep.subr.mxu0 0.0
    %426 = vmatpush1.msra.mxu0 %v124
    %427 = vmatprep.subr.mxu0 0.0
    %428 = vmatpush1.msra.mxu0 %v123
    %429 = vmatprep.subr.mxu0 0.0
    %430 = vmatpush1.msra.mxu0 %v122
    %431 = vmatprep.subr.mxu0 0.0
    %432 = vmatpush1.msra.mxu0 %v121
    %433 = vmatprep.subr.mxu0 0.0
    %434 = vmatpush1.msra.mxu0 %v120
    %435 = vmatprep.subr.mxu0 0.0
    %436 = vmatpush1.msra.mxu0 %v119
    %437 = vmatprep.subr.mxu0 0.0
    %438 = vmatpush1.msra.mxu0 %v118
    %439 = vmatprep.subr.mxu0 0.0
    %440 = vmatpush1.msra.mxu0 %v117
    %441 = vmatprep.subr.mxu0 0.0
    %442 = vmatpush1.msra.mxu0 %v116
    %443 = vmatprep.subr.mxu0 0.0
    %444 = vmatpush1.msra.mxu0 %v115
    %445 = vmatprep.subr.mxu0 0.0
    %446 = vmatpush1.msra.mxu0 %v114
    %447 = vmatprep.subr.mxu0 0.0
    %448 = vmatpush1.msra.mxu0 %v113
    %449 = vmatprep.subr.mxu0 0.0
    %450 = vmatpush2.msra.mxu0 0.0
    %451 = vmatprep.subr.mxu0 0.0
    %452 = vmatpush2.msra.mxu0 0.0
    %453 = vmatprep.subr.mxu0 0.0
    %454 = vmatpush2.msra.mxu0 0.0
    %455 = vmatprep.subr.mxu0 0.0
    %456 = vmatpush2.msra.mxu0 0.0
    %457 = vmatprep.subr.mxu0 0.0
    %458 = vmatpush2.msra.mxu0 0.0
    %459 = vmatprep.subr.mxu0 0.0
    %460 = vmatpush2.msra.mxu0 0.0
    %461 = vmatprep.subr.mxu0 0.0
    %462 = vmatpush2.msra.mxu0 0.0
    %463 = vmatprep.subr.mxu0 0.0
    %464 = vmatpush2.msra.mxu0 0.0
    %465 = vmatprep.subr.mxu0 0.0
    %466 = vmatpush2.msra.mxu0 0.0
    %467 = vmatprep.subr.mxu0 0.0
    %468 = vmatpush2.msra.mxu0 0.0
    %469 = vmatprep.subr.mxu0 0.0
    %470 = vmatpush2.msra.mxu0 0.0
    %471 = vmatprep.subr.mxu0 0.0
    %472 = vmatpush2.msra.mxu0 0.0
    %473 = vmatprep.subr.mxu0 0.0
    %474 = vmatpush2.msra.mxu0 0.0
    %475 = vmatprep.subr.mxu0 0.0
    %476 = vmatpush2.msra.mxu0 0.0
    %477 = vmatprep.subr.mxu0 0.0
    %478 = vmatpush2.msra.mxu0 0.0
    %479 = vmatprep.subr.mxu0 0.0
    %480 = vmatpush2.msra.mxu0 0.0
    %481 = vmatprep.mubr.f32.mxu0 0.0
    %482 = vmatmul.mubr.f32.gmra.mxu0 %v409
    %v483 = vpop.f32.mrf.mxu0
    %v484 = vadd.f32 0.0, %v483
    %v485 = vpop.f32.mrf.mxu0
    %486 = vmatprep.mubr.f32.mxu0 0.0
    %487 = vmatmul.mubr.f32.gmra.mxu0 %v410
    %v488 = vpop.f32.mrf.mxu0
    %v489 = vadd.f32 0.0, %v488
    %v490 = vpop.f32.mrf.mxu0
    %491 = vmatprep.mubr.f32.mxu0 0.0
    %492 = vmatmul.mubr.f32.gmra.mxu0 %v411
    %v493 = vpop.f32.mrf.mxu0
    %v494 = vadd.f32 0.0, %v493
    %v495 = vpop.f32.mrf.mxu0
    %496 = vmatprep.mubr.f32.mxu0 0.0
    %497 = vmatmul.mubr.f32.gmra.mxu0 %v412
    %v498 = vpop.f32.mrf.mxu0
    %v499 = vadd.f32 0.0, %v498
    %v500 = vpop.f32.mrf.mxu0
    %501 = vmatprep.mubr.f32.mxu0 0.0
    %502 = vmatmul.mubr.f32.gmra.mxu0 %v413
    %v503 = vpop.f32.mrf.mxu0
    %v504 = vadd.f32 0.0, %v503
    %v505 = vpop.f32.mrf.mxu0
    %506 = vmatprep.mubr.f32.mxu0 0.0
    %507 = vmatmul.mubr.f32.gmra.mxu0 %v414
    %v508 = vpop.f32.mrf.mxu0
    %v509 = vadd.f32 0.0, %v508
    %v510 = vpop.f32.mrf.mxu0
    %511 = vmatprep.mubr.f32.mxu0 0.0
    %512 = vmatmul.mubr.f32.gmra.mxu0 %v415
    %v513 = vpop.f32.mrf.mxu0
    %v514 = vadd.f32 0.0, %v513
    %v515 = vpop.f32.mrf.mxu0
    %516 = vmatprep.mubr.f32.mxu0 0.0
    %517 = vmatmul.mubr.f32.gmra.mxu0 %v416
    %v518 = vpop.f32.mrf.mxu0
    %v519 = vadd.f32 0.0, %v518
    %v520 = vpop.f32.mrf.mxu0
    %521 = vdwg.mxu0
    %522 = vmatprep.subr.mxu0 0.0
    %523 = vmatpush1.msra.mxu0 0.0
    %524 = vmatprep.subr.mxu0 0.0
    %525 = vmatpush1.msra.mxu0 0.0
    %526 = vmatprep.subr.mxu0 0.0
    %527 = vmatpush1.msra.mxu0 0.0
    %528 = vmatprep.subr.mxu0 0.0
    %529 = vmatpush1.msra.mxu0 0.0
    %530 = vmatprep.subr.mxu0 0.0
    %531 = vmatpush1.msra.mxu0 0.0
    %532 = vmatprep.subr.mxu0 0.0
    %533 = vmatpush1.msra.mxu0 0.0
    %534 = vmatprep.subr.mxu0 0.0
    %535 = vmatpush1.msra.mxu0 0.0
    %536 = vmatprep.subr.mxu0 0.0
    %537 = vmatpush1.msra.mxu0 0.0
    %538 = vmatprep.subr.mxu0 0.0
    %539 = vmatpush1.msra.mxu0 %v519
    %540 = vmatprep.subr.mxu0 0.0
    %541 = vmatpush1.msra.mxu0 %v514
    %542 = vmatprep.subr.mxu0 0.0
    %543 = vmatpush1.msra.mxu0 %v509
    %544 = vmatprep.subr.mxu0 0.0
    %545 = vmatpush1.msra.mxu0 %v504
    %546 = vmatprep.subr.mxu0 0.0
    %547 = vmatpush1.msra.mxu0 %v499
    %548 = vmatprep.subr.mxu0 0.0
    %549 = vmatpush1.msra.mxu0 %v494
    %550 = vmatprep.subr.mxu0 0.0
    %551 = vmatpush1.msra.mxu0 %v489
    %552 = vmatprep.subr.mxu0 0.0
    %553 = vmatpush1.msra.mxu0 %v484
    %554 = vmatprep.subr.mxu0 0.0
    %555 = vmatpush2.msra.mxu0 0.0
    %556 = vmatprep.subr.mxu0 0.0
    %557 = vmatpush2.msra.mxu0 0.0
    %558 = vmatprep.subr.mxu0 0.0
    %559 = vmatpush2.msra.mxu0 0.0
    %560 = vmatprep.subr.mxu0 0.0
    %561 = vmatpush2.msra.mxu0 0.0
    %562 = vmatprep.subr.mxu0 0.0
    %563 = vmatpush2.msra.mxu0 0.0
    %564 = vmatprep.subr.mxu0 0.0
    %565 = vmatpush2.msra.mxu0 0.0
    %566 = vmatprep.subr.mxu0 0.0
    %567 = vmatpush2.msra.mxu0 0.0
    %568 = vmatprep.subr.mxu0 0.0
    %569 = vmatpush2.msra.mxu0 0.0
    %570 = vmatprep.subr.mxu0 0.0
    %571 = vmatpush2.msra.mxu0 0.0
    %572 = vmatprep.subr.mxu0 0.0
    %573 = vmatpush2.msra.mxu0 0.0
    %574 = vmatprep.subr.mxu0 0.0
    %575 = vmatpush2.msra.mxu0 0.0
    %576 = vmatprep.subr.mxu0 0.0
    %577 = vmatpush2.msra.mxu0 0.0
    %578 = vmatprep.subr.mxu0 0.0
    %579 = vmatpush2.msra.mxu0 0.0
    %580 = vmatprep.subr.mxu0 0.0
    %581 = vmatpush2.msra.mxu0 0.0
    %582 = vmatprep.subr.mxu0 0.0
    %583 = vmatpush2.msra.mxu0 0.0
    %584 = vmatprep.subr.mxu0 0.0
    %585 = vmatpush2.msra.mxu0 0.0
    %586 = vmatprep.mubr.f32.mxu0 0.0
    %587 = vmatmul.mubr.f32.gmra.mxu0 %v241
    %v588 = vpop.f32.mrf.mxu0
    %v589 = vadd.f32 %v238, %v588
    %v590 = vpop.f32.mrf.mxu0
    %591 = vmatprep.mubr.f32.mxu0 0.0
    %592 = vmatmul.mubr.f32.gmra.mxu0 %v244
    %v593 = vpop.f32.mrf.mxu0
    %v594 = vadd.f32 %v238, %v593
    %v595 = vpop.f32.mrf.mxu0
    %596 = vmatprep.mubr.f32.mxu0 0.0
    %597 = vmatmul.mubr.f32.gmra.mxu0 %v247
    %v598 = vpop.f32.mrf.mxu0
    %v599 = vadd.f32 %v238, %v598
    %v600 = vpop.f32.mrf.mxu0
    %601 = vmatprep.mubr.f32.mxu0 0.0
    %602 = vmatmul.mubr.f32.gmra.mxu0 %v250
    %v603 = vpop.f32.mrf.mxu0
    %v604 = vadd.f32 %v238, %v603
    %v605 = vpop.f32.mrf.mxu0
    %606 = vmatprep.mubr.f32.mxu0 0.0
    %607 = vmatmul.mubr.f32.gmra.mxu0 %v253
    %v608 = vpop.f32.mrf.mxu0
    %v609 = vadd.f32 %v238, %v608
    %v610 = vpop.f32.mrf.mxu0
    %611 = vmatprep.mubr.f32.mxu0 0.0
    %612 = vmatmul.mubr.f32.gmra.mxu0 %v256
    %v613 = vpop.f32.mrf.mxu0
    %v614 = vadd.f32 %v238, %v613
    %v615 = vpop.f32.mrf.mxu0
    %616 = vmatprep.mubr.f32.mxu0 0.0
    %617 = vmatmul.mubr.f32.gmra.mxu0 %v259
    %v618 = vpop.f32.mrf.mxu0
    %v619 = vadd.f32 %v238, %v618
    %v620 = vpop.f32.mrf.mxu0
    %621 = vmatprep.mubr.f32.mxu0 0.0
    %622 = vmatmul.mubr.f32.gmra.mxu0 %v262
    %v623 = vpop.f32.mrf.mxu0
    %v624 = vadd.f32 %v238, %v623
    %v625 = vpop.f32.mrf.mxu0
    %626 = vdwg.mxu0
    %v627 = vadd.f32 %v589, %v594
    %v628 = vadd.f32 %v627, %v599
    %v629 = vadd.f32 %v628, %v604
    %v630 = vadd.f32 %v629, %v609
    %v631 = vadd.f32 %v630, %v614
    %v632 = vadd.f32 %v631, %v619
    %v633 = vadd.f32 %v632, %v624
    %v634 = vrot.slane %v633, 4
    %v635 = vadd.f32 %v633, %v634
    %v636 = vrot.slane %v635, 2
    %v637 = vadd.f32 %v635, %v636
    %v638 = vrot.slane %v637, 1
    %v639 = vadd.f32 %v637, %v638
    %v640 = vrcp.pop 64.0
    %v641 = vmul.f32 %v639, %v640
    %v642 = vsub.f32 %v589, %v641
    %v643 = vsub.f32 %v594, %v641
    %v644 = vsub.f32 %v599, %v641
    %v645 = vsub.f32 %v604, %v641
    %v646 = vsub.f32 %v609, %v641
    %v647 = vsub.f32 %v614, %v641
    %v648 = vsub.f32 %v619, %v641
    %v649 = vsub.f32 %v624, %v641
    %v650 = vmul.f32 %v642, %v642
    %v651 = vmul.f32 %v643, %v643
    %v652 = vmul.f32 %v644, %v644
    %v653 = vmul.f32 %v645, %v645
    %v654 = vmul.f32 %v646, %v646
    %v655 = vmul.f32 %v647, %v647
    %v656 = vmul.f32 %v648, %v648
    %v657 = vmul.f32 %v649, %v649
    %v658 = vadd.f32 %v650, %v651
    %v659 = vadd.f32 %v658, %v652
    %v660 = vadd.f32 %v659, %v653
    %v661 = vadd.f32 %v660, %v654
    %v662 = vadd.f32 %v661, %v655
    %v663 = vadd.f32 %v662, %v656
    %v664 = vadd.f32 %v663, %v657
    %v665 = vrot.slane %v664, 4
    %v666 = vadd.f32 %v664, %v665
    %v667 = vrot.slane %v666, 2
    %v668 = vadd.f32 %v666, %v667
    %v669 = vrot.slane %v668, 1
    %v670 = vadd.f32 %v668, %v669
    %v671 = vmul.f32 %v670, %v640
    %v672 = vadd.f32 %v671, 1e-05
    %v673 = vrsqrt.pop %v672
    %v674 = vmul.f32 %v642, %v673
    %v675 = vmul.f32 %v643, %v673
    %v676 = vmul.f32 %v644, %v673
    %v677 = vmul.f32 %v645, %v673
    %v678 = vmul.f32 %v646, %v673
    %v679 = vmul.f32 %v647, %v673
    %v680 = vmul.f32 %v648, %v673
    %v681 = vmul.f32 %v649, %v673
    %v682 = vlaneseq
    %v683 = vshrl.u32 %v682, 7
    %v684 = vsub.s32 1, %v683
    %v685 = vrot.slane %v129, %v684
    %v686 = vmul.f32 %v674, %v685
    %v687 = vmul.f32 %v675, %v685
    %v688 = vmul.f32 %v676, %v685
    %v689 = vmul.f32 %v677, %v685
    %v690 = vmul.f32 %v678, %v685
    %v691 = vmul.f32 %v679, %v685
    %v692 = vmul.f32 %v680, %v685
    %v693 = vmul.f32 %v681, %v685
    %v694 = vlaneseq
    %v695 = vshrl.u32 %v694, 7
    %v696 = vsub.s32 2, %v695
    %v697 = vrot.slane %v129, %v696
    %v698 = vadd.f32 %v686, %v697
    %v699 = vadd.f32 %v687, %v697
    %v700 = vadd.f32 %v688, %v697
    %v701 = vadd.f32 %v689, %v697
    %v702 = vadd.f32 %v690, %v697
    %v703 = vadd.f32 %v691, %v697
    %v704 = vadd.f32 %v692, %v697
    %v705 = vadd.f32 %v693, %v697
    %s706 = scalar_lea.vmem [#allocation8], 128
    %v707 = vld [vmem:[%s706] sm:$0xff]
    %v708 = vld [vmem:[%s706 + $0x8] sm:$0xff]
    %v709 = vld [vmem:[%s706 + $0x10] sm:$0xff]
    %v710 = vld [vmem:[%s706 + $0x18] sm:$0xff]
    %v711 = vld [vmem:[%s706 + $0x20] sm:$0xff]
    %v712 = vld [vmem:[%s706 + $0x28] sm:$0xff]
    %v713 = vld [vmem:[%s706 + $0x30] sm:$0xff]
    %v714 = vld [vmem:[%s706 + $0x38] sm:$0xff]
    %v715 = vld [vmem:[%s706 + $0x40] sm:$0xff]
    %v716 = vld [vmem:[%s706 + $0x48] sm:$0xff]
    %v717 = vld [vmem:[%s706 + $0x50] sm:$0xff]
    %v718 = vld [vmem:[%s706 + $0x58] sm:$0xff]
    %v719 = vld [vmem:[%s706 + $0x60] sm:$0xff]
    %v720 = vld [vmem:[%s706 + $0x68] sm:$0xff]
    %v721 = vld [vmem:[%s706 + $0x70] sm:$0xff]
    %v722 = vld [vmem:[%s706 + $0x78] sm:$0xff]
    %s723 = scalar_lea.vmem [#allocation10], 4
    %v724 = vld [vmem:[%s723] sm:$0x7]
    %725 = vmatprep.subr.mxu0 0.0
    %726 = vmatpush1.msra.mxu0 %v722
    %727 = vmatprep.subr.mxu0 0.0
    %728 = vmatpush1.msra.mxu0 %v721
    %729 = vmatprep.subr.mxu0 0.0
    %730 = vmatpush1.msra.mxu0 %v720
    %731 = vmatprep.subr.mxu0 0.0
    %732 = vmatpush1.msra.mxu0 %v719
    %733 = vmatprep.subr.mxu0 0.0
    %734 = vmatpush1.msra.mxu0 %v718
    %735 = vmatprep.subr.mxu0 0.0
    %736 = vmatpush1.msra.mxu0 %v717
    %737 = vmatprep.subr.mxu0 0.0
    %738 = vmatpush1.msra.mxu0 %v716
    %739 = vmatprep.subr.mxu0 0.0
    %740 = vmatpush1.msra.mxu0 %v715
    %741 = vmatprep.subr.mxu0 0.0
    %742 = vmatpush1.msra.mxu0 %v714
    %743 = vmatprep.subr.mxu0 0.0
    %744 = vmatpush1.msra.mxu0 %v713
    %745 = vmatprep.subr.mxu0 0.0
    %746 = vmatpush1.msra.mxu0 %v712
    %747 = vmatprep.subr.mxu0 0.0
    %748 = vmatpush1.msra.mxu0 %v711
    %749 = vmatprep.subr.mxu0 0.0
    %750 = vmatpush1.msra.mxu0 %v710
    %751 = vmatprep.subr.mxu0 0.0
    %752 = vmatpush1.msra.mxu0 %v709
    %753 = vmatprep.subr.mxu0 0.0
    %754 = vmatpush1.msra.mxu0 %v708
    %755 = vmatprep.subr.mxu0 0.0
    %756 = vmatpush1.msra.mxu0 %v707
    %757 = vmatprep.subr.mxu0 0.0
    %758 = vmatpush2.msra.mxu0 0.0
    %759 = vmatprep.subr.mxu0 0.0
    %760 = vmatpush2.msra.mxu0 0.0
    %761 = vmatprep.subr.mxu0 0.0
    %762 = vmatpush2.msra.mxu0 0.0
    %763 = vmatprep.subr.mxu0 0.0
    %764 = vmatpush2.msra.mxu0 0.0
    %765 = vmatprep.subr.mxu0 0.0
    %766 = vmatpush2.msra.mxu0 0.0
    %767 = vmatprep.subr.mxu0 0.0
    %768 = vmatpush2.msra.mxu0 0.0
    %769 = vmatprep.subr.mxu0 0.0
    %770 = vmatpush2.msra.mxu0 0.0
    %771 = vmatprep.subr.mxu0 0.0
    %772 = vmatpush2.msra.mxu0 0.0
    %773 = vmatprep.subr.mxu0 0.0
    %774 = vmatpush2.msra.mxu0 0.0
    %775 = vmatprep.subr.mxu0 0.0
    %776 = vmatpush2.msra.mxu0 0.0
    %777 = vmatprep.subr.mxu0 0.0
    %778 = vmatpush2.msra.mxu0 0.0
    %779 = vmatprep.subr.mxu0 0.0
    %780 = vmatpush2.msra.mxu0 0.0
    %781 = vmatprep.subr.mxu0 0.0
    %782 = vmatpush2.msra.mxu0 0.0
    %783 = vmatprep.subr.mxu0 0.0
    %784 = vmatpush2.msra.mxu0 0.0
    %785 = vmatprep.subr.mxu0 0.0
    %786 = vmatpush2.msra.mxu0 0.0
    %787 = vmatprep.subr.mxu0 0.0
    %788 = vmatpush2.msra.mxu0 0.0
    %789 = vmatprep.mubr.f32.mxu0 0.0
    %790 = vmatmul.mubr.f32.gmra.mxu0 %v698
    %v791 = vpop.f32.mrf.mxu0
    %v792 = vadd.f32 0.0, %v791
    %v793 = vpop.f32.mrf.mxu0
    %794 = vmatprep.mubr.f32.mxu0 0.0
    %795 = vmatmul.mubr.f32.gmra.mxu0 %v699
    %v796 = vpop.f32.mrf.mxu0
    %v797 = vadd.f32 0.0, %v796
    %v798 = vpop.f32.mrf.mxu0
    %799 = vmatprep.mubr.f32.mxu0 0.0
    %800 = vmatmul.mubr.f32.gmra.mxu0 %v700
    %v801 = vpop.f32.mrf.mxu0
    %v802 = vadd.f32 0.0, %v801
    %v803 = vpop.f32.mrf.mxu0
    %804 = vmatprep.mubr.f32.mxu0 0.0
    %805 = vmatmul.mubr.f32.gmra.mxu0 %v701
    %v806 = vpop.f32.mrf.mxu0
    %v807 = vadd.f32 0.0, %v806
    %v808 = vpop.f32.mrf.mxu0
    %809 = vmatprep.mubr.f32.mxu0 0.0
    %810 = vmatmul.mubr.f32.gmra.mxu0 %v702
    %v811 = vpop.f32.mrf.mxu0
    %v812 = vadd.f32 0.0, %v811
    %v813 = vpop.f32.mrf.mxu0
    %814 = vmatprep.mubr.f32.mxu0 0.0
    %815 = vmatmul.mubr.f32.gmra.mxu0 %v703
    %v816 = vpop.f32.mrf.mxu0
    %v817 = vadd.f32 0.0, %v816
    %v818 = vpop.f32.mrf.mxu0
    %819 = vmatprep.mubr.f32.mxu0 0.0
    %820 = vmatmul.mubr.f32.gmra.mxu0 %v704
    %v821 = vpop.f32.mrf.mxu0
    %v822 = vadd.f32 0.0, %v821
    %v823 = vpop.f32.mrf.mxu0
    %824 = vmatprep.mubr.f32.mxu0 0.0
    %825 = vmatmul.mubr.f32.gmra.mxu0 %v705
    %v826 = vpop.f32.mrf.mxu0
    %v827 = vadd.f32 0.0, %v826
    %v828 = vpop.f32.mrf.mxu0
    %829 = vdwg.mxu0
    %v830 = vlaneseq
    %v831 = vshrl.u32 %v830, 7
    %v832 = vsub.s32 0, %v831
    %v833 = vrot.slane %v724, %v832
    %834 = vmatprep.subr.mxu0 0.0
    %835 = vmatpush1.msra.mxu0 0.0
    %836 = vmatprep.subr.mxu0 0.0
    %837 = vmatpush1.msra.mxu0 0.0
    %838 = vmatprep.subr.mxu0 0.0
    %839 = vmatpush1.msra.mxu0 0.0
    %840 = vmatprep.subr.mxu0 0.0
    %841 = vmatpush1.msra.mxu0 0.0
    %842 = vmatprep.subr.mxu0 0.0
    %843 = vmatpush1.msra.mxu0 0.0
    %844 = vmatprep.subr.mxu0 0.0
    %845 = vmatpush1.msra.mxu0 0.0
    %846 = vmatprep.subr.mxu0 0.0
    %847 = vmatpush1.msra.mxu0 0.0
    %848 = vmatprep.subr.mxu0 0.0
    %849 = vmatpush1.msra.mxu0 0.0
    %850 = vmatprep.subr.mxu0 0.0
    %851 = vmatpush1.msra.mxu0 %v827
    %852 = vmatprep.subr.mxu0 0.0
    %853 = vmatpush1.msra.mxu0 %v822
    %854 = vmatprep.subr.mxu0 0.0
    %855 = vmatpush1.msra.mxu0 %v817
    %856 = vmatprep.subr.mxu0 0.0
    %857 = vmatpush1.msra.mxu0 %v812
    %858 = vmatprep.subr.mxu0 0.0
    %859 = vmatpush1.msra.mxu0 %v807
    %860 = vmatprep.subr.mxu0 0.0
    %861 = vmatpush1.msra.mxu0 %v802
    %862 = vmatprep.subr.mxu0 0.0
    %863 = vmatpush1.msra.mxu0 %v797
    %864 = vmatprep.subr.mxu0 0.0
    %865 = vmatpush1.msra.mxu0 %v792
    %866 = vmatprep.subr.mxu0 0.0
    %867 = vmatpush2.msra.mxu0 0.0
    %868 = vmatprep.subr.mxu0 0.0
    %869 = vmatpush2.msra.mxu0 0.0
    %870 = vmatprep.subr.mxu0 0.0
    %871 = vmatpush2.msra.mxu0 0.0
    %872 = vmatprep.subr.mxu0 0.0
    %873 = vmatpush2.msra.mxu0 0.0
    %874 = vmatprep.subr.mxu0 0.0
    %875 = vmatpush2.msra.mxu0 0.0
    %876 = vmatprep.subr.mxu0 0.0
    %877 = vmatpush2.msra.mxu0 0.0
    %878 = vmatprep.subr.mxu0 0.0
    %879 = vmatpush2.msra.mxu0 0.0
    %880 = vmatprep.subr.mxu0 0.0
    %881 = vmatpush2.msra.mxu0 0.0
    %882 = vmatprep.subr.mxu0 0.0
    %883 = vmatpush2.msra.mxu0 0.0
    %884 = vmatprep.subr.mxu0 0.0
    %885 = vmatpush2.msra.mxu0 0.0
    %886 = vmatprep.subr.mxu0 0.0
    %887 = vmatpush2.msra.mxu0 0.0
    %888 = vmatprep.subr.mxu0 0.0
    %889 = vmatpush2.msra.mxu0 0.0
    %890 = vmatprep.subr.mxu0 0.0
    %891 = vmatpush2.msra.mxu0 0.0
    %892 = vmatprep.subr.mxu0 0.0
    %893 = vmatpush2.msra.mxu0 0.0
    %894 = vmatprep.subr.mxu0 0.0
    %895 = vmatpush2.msra.mxu0 0.0
    %896 = vmatprep.subr.mxu0 0.0
    %897 = vmatpush2.msra.mxu0 0.0
    %898 = vmatprep.mubr.f32.mxu0 0.0
    %899 = vmatmul.mubr.f32.gmra.mxu0 %v241
    %v900 = vpop.f32.mrf.mxu0
    %v901 = vadd.f32 %v833, %v900
    %v902 = vpop.f32.mrf.mxu0
    %903 = vmatprep.mubr.f32.mxu0 0.0
    %904 = vmatmul.mubr.f32.gmra.mxu0 %v244
    %v905 = vpop.f32.mrf.mxu0
    %v906 = vadd.f32 %v833, %v905
    %v907 = vpop.f32.mrf.mxu0
    %908 = vmatprep.mubr.f32.mxu0 0.0
    %909 = vmatmul.mubr.f32.gmra.mxu0 %v247
    %v910 = vpop.f32.mrf.mxu0
    %v911 = vadd.f32 %v833, %v910
    %v912 = vpop.f32.mrf.mxu0
    %913 = vmatprep.mubr.f32.mxu0 0.0
    %914 = vmatmul.mubr.f32.gmra.mxu0 %v250
    %v915 = vpop.f32.mrf.mxu0
    %v916 = vadd.f32 %v833, %v915
    %v917 = vpop.f32.mrf.mxu0
    %918 = vmatprep.mubr.f32.mxu0 0.0
    %919 = vmatmul.mubr.f32.gmra.mxu0 %v253
    %v920 = vpop.f32.mrf.mxu0
    %v921 = vadd.f32 %v833, %v920
    %v922 = vpop.f32.mrf.mxu0
    %923 = vmatprep.mubr.f32.mxu0 0.0
    %924 = vmatmul.mubr.f32.gmra.mxu0 %v256
    %v925 = vpop.f32.mrf.mxu0
    %v926 = vadd.f32 %v833, %v925
    %v927 = vpop.f32.mrf.mxu0
    %928 = vmatprep.mubr.f32.mxu0 0.0
    %929 = vmatmul.mubr.f32.gmra.mxu0 %v259
    %v930 = vpop.f32.mrf.mxu0
    %v931 = vadd.f32 %v833, %v930
    %v932 = vpop.f32.mrf.mxu0
    %933 = vmatprep.mubr.f32.mxu0 0.0
    %934 = vmatmul.mubr.f32.gmra.mxu0 %v262
    %v935 = vpop.f32.mrf.mxu0
    %v936 = vadd.f32 %v833, %v935
    %v937 = vpop.f32.mrf.mxu0
    %938 = vdwg.mxu0
    %v939 = vmax.f32 %v901, 0.0
    %v940 = vmax.f32 %v906, 0.0
    %v941 = vmax.f32 %v911, 0.0
    %v942 = vmax.f32 %v916, 0.0
    %v943 = vmax.f32 %v921, 0.0
    %v944 = vmax.f32 %v926, 0.0
    %v945 = vmax.f32 %v931, 0.0
    %v946 = vmax.f32 %v936, 0.0
    %v947 = vmul.f32 %v401, 0.2
    %v948 = vmul.f32 %v402, 0.2
    %v949 = vmul.f32 %v403, 0.2
    %v950 = vmul.f32 %v404, 0.2
    %v951 = vmul.f32 %v405, 0.2
    %v952 = vmul.f32 %v406, 0.2
    %v953 = vmul.f32 %v407, 0.2
    %v954 = vmul.f32 %v408, 0.2
    %v955 = vsub.f32 %v939, %v947
    %v956 = vsub.f32 %v940, %v948
    %v957 = vsub.f32 %v941, %v949
    %v958 = vsub.f32 %v942, %v950
    %v959 = vsub.f32 %v943, %v951
    %v960 = vsub.f32 %v944, %v952
    %v961 = vsub.f32 %v945, %v953
    %v962 = vsub.f32 %v946, %v954
    %v963 = vsub.f32 %v955, %v698
    %v964 = vsub.f32 %v956, %v699
    %v965 = vsub.f32 %v957, %v700
    %v966 = vsub.f32 %v958, %v701
    %v967 = vsub.f32 %v959, %v702
    %v968 = vsub.f32 %v960, %v703
    %v969 = vsub.f32 %v961, %v704
    %v970 = vsub.f32 %v962, %v705
    %v971 = vadd.f32 %v401, %v963
    %v972 = vadd.f32 %v402, %v964
    %v973 = vadd.f32 %v403, %v965
    %v974 = vadd.f32 %v404, %v966
    %v975 = vadd.f32 %v405, %v967
    %v976 = vadd.f32 %v406, %v968
    %v977 = vadd.f32 %v407, %v969
    %v978 = vadd.f32 %v408, %v970
    %v979 = vadd.f32 %v698, %v971
    %v980 = vadd.f32 %v699, %v972
    %v981 = vadd.f32 %v700, %v973
    %v982 = vadd.f32 %v701, %v974
    %v983 = vadd.f32 %v702, %v975
    %v984 = vadd.f32 %v703, %v976
    %v985 = vadd.f32 %v704, %v977
    %v986 = vadd.f32 %v705, %v978
    %987 = vmatprep.subr.mxu0 0.0
    %988 = vmatpush1.msra.mxu0 %v722
    %989 = vmatprep.subr.mxu0 0.0
    %990 = vmatpush1.msra.mxu0 %v721
    %991 = vmatprep.subr.mxu0 0.0
    %992 = vmatpush1.msra.mxu0 %v720
    %993 = vmatprep.subr.mxu0 0.0
    %994 = vmatpush1.msra.mxu0 %v719
    %995 = vmatprep.subr.mxu0 0.0
    %996 = vmatpush1.msra.mxu0 %v718
    %997 = vmatprep.subr.mxu0 0.0
    %998 = vmatpush1.msra.mxu0 %v717
    %999 = vmatprep.subr.mxu0 0.0
    %1000 = vmatpush1.msra.mxu0 %v716
    %1001 = vmatprep.subr.mxu0 0.0
    %1002 = vmatpush1.msra.mxu0 %v715
    %1003 = vmatprep.subr.mxu0 0.0
    %1004 = vmatpush1.msra.mxu0 %v714
    %1005 = vmatprep.subr.mxu0 0.0
    %1006 = vmatpush1.msra.mxu0 %v713
    %1007 = vmatprep.subr.mxu0 0.0
    %1008 = vmatpush1.msra.mxu0 %v712
    %1009 = vmatprep.subr.mxu0 0.0
    %1010 = vmatpush1.msra.mxu0 %v711
    %1011 = vmatprep.subr.mxu0 0.0
    %1012 = vmatpush1.msra.mxu0 %v710
    %1013 = vmatprep.subr.mxu0 0.0
    %1014 = vmatpush1.msra.mxu0 %v709
    %1015 = vmatprep.subr.mxu0 0.0
    %1016 = vmatpush1.msra.mxu0 %v708
    %1017 = vmatprep.subr.mxu0 0.0
    %1018 = vmatpush1.msra.mxu0 %v707
    %1019 = vmatprep.subr.mxu0 0.0
    %1020 = vmatpush2.msra.mxu0 0.0
    %1021 = vmatprep.subr.mxu0 0.0
    %1022 = vmatpush2.msra.mxu0 0.0
    %1023 = vmatprep.subr.mxu0 0.0
    %1024 = vmatpush2.msra.mxu0 0.0
    %1025 = vmatprep.subr.mxu0 0.0
    %1026 = vmatpush2.msra.mxu0 0.0
    %1027 = vmatprep.subr.mxu0 0.0
    %1028 = vmatpush2.msra.mxu0 0.0
    %1029 = vmatprep.subr.mxu0 0.0
    %1030 = vmatpush2.msra.mxu0 0.0
    %1031 = vmatprep.subr.mxu0 0.0
    %1032 = vmatpush2.msra.mxu0 0.0
    %1033 = vmatprep.subr.mxu0 0.0
    %1034 = vmatpush2.msra.mxu0 0.0
    %1035 = vmatprep.subr.mxu0 0.0
    %1036 = vmatpush2.msra.mxu0 0.0
    %1037 = vmatprep.subr.mxu0 0.0
    %1038 = vmatpush2.msra.mxu0 0.0
    %1039 = vmatprep.subr.mxu0 0.0
    %1040 = vmatpush2.msra.mxu0 0.0
    %1041 = vmatprep.subr.mxu0 0.0
    %1042 = vmatpush2.msra.mxu0 0.0
    %1043 = vmatprep.subr.mxu0 0.0
    %1044 = vmatpush2.msra.mxu0 0.0
    %1045 = vmatprep.subr.mxu0 0.0
    %1046 = vmatpush2.msra.mxu0 0.0
    %1047 = vmatprep.subr.mxu0 0.0
    %1048 = vmatpush2.msra.mxu0 0.0
    %1049 = vmatprep.subr.mxu0 0.0
    %1050 = vmatpush2.msra.mxu0 0.0
    %1051 = vmatprep.mubr.f32.mxu0 0.0
    %1052 = vmatmul.mubr.f32.gmra.mxu0 %v979
    %v1053 = vpop.f32.mrf.mxu0
    %v1054 = vadd.f32 0.0, %v1053
    %v1055 = vpop.f32.mrf.mxu0
    %1056 = vmatprep.mubr.f32.mxu0 0.0
    %1057 = vmatmul.mubr.f32.gmra.mxu0 %v980
    %v1058 = vpop.f32.mrf.mxu0
    %v1059 = vadd.f32 0.0, %v1058
    %v1060 = vpop.f32.mrf.mxu0
    %1061 = vmatprep.mubr.f32.mxu0 0.0
    %1062 = vmatmul.mubr.f32.gmra.mxu0 %v981
    %v1063 = vpop.f32.mrf.mxu0
    %v1064 = vadd.f32 0.0, %v1063
    %v1065 = vpop.f32.mrf.mxu0
    %1066 = vmatprep.mubr.f32.mxu0 0.0
    %1067 = vmatmul.mubr.f32.gmra.mxu0 %v982
    %v1068 = vpop.f32.mrf.mxu0
    %v1069 = vadd.f32 0.0, %v1068
    %v1070 = vpop.f32.mrf.mxu0
    %1071 = vmatprep.mubr.f32.mxu0 0.0
    %1072 = vmatmul.mubr.f32.gmra.mxu0 %v983
    %v1073 = vpop.f32.mrf.mxu0
    %v1074 = vadd.f32 0.0, %v1073
    %v1075 = vpop.f32.mrf.mxu0
    %1076 = vmatprep.mubr.f32.mxu0 0.0
    %1077 = vmatmul.mubr.f32.gmra.mxu0 %v984
    %v1078 = vpop.f32.mrf.mxu0
    %v1079 = vadd.f32 0.0, %v1078
    %v1080 = vpop.f32.mrf.mxu0
    %1081 = vmatprep.mubr.f32.mxu0 0.0
    %1082 = vmatmul.mubr.f32.gmra.mxu0 %v985
    %v1083 = vpop.f32.mrf.mxu0
    %v1084 = vadd.f32 0.0, %v1083
    %v1085 = vpop.f32.mrf.mxu0
    %1086 = vmatprep.mubr.f32.mxu0 0.0
    %1087 = vmatmul.mubr.f32.gmra.mxu0 %v986
    %v1088 = vpop.f32.mrf.mxu0
    %v1089 = vadd.f32 0.0, %v1088
    %v1090 = vpop.f32.mrf.mxu0
    %1091 = vdwg.mxu0
    %1092 = vmatprep.subr.mxu0 0.0
    %1093 = vmatpush1.msra.mxu0 0.0
    %1094 = vmatprep.subr.mxu0 0.0
    %1095 = vmatpush1.msra.mxu0 0.0
    %1096 = vmatprep.subr.mxu0 0.0
    %1097 = vmatpush1.msra.mxu0 0.0
    %1098 = vmatprep.subr.mxu0 0.0
    %1099 = vmatpush1.msra.mxu0 0.0
    %1100 = vmatprep.subr.mxu0 0.0
    %1101 = vmatpush1.msra.mxu0 0.0
    %1102 = vmatprep.subr.mxu0 0.0
    %1103 = vmatpush1.msra.mxu0 0.0
    %1104 = vmatprep.subr.mxu0 0.0
    %1105 = vmatpush1.msra.mxu0 0.0
    %1106 = vmatprep.subr.mxu0 0.0
    %1107 = vmatpush1.msra.mxu0 0.0
    %1108 = vmatprep.subr.mxu0 0.0
    %1109 = vmatpush1.msra.mxu0 %v1089
    %1110 = vmatprep.subr.mxu0 0.0
    %1111 = vmatpush1.msra.mxu0 %v1084
    %1112 = vmatprep.subr.mxu0 0.0
    %1113 = vmatpush1.msra.mxu0 %v1079
    %1114 = vmatprep.subr.mxu0 0.0
    %1115 = vmatpush1.msra.mxu0 %v1074
    %1116 = vmatprep.subr.mxu0 0.0
    %1117 = vmatpush1.msra.mxu0 %v1069
    %1118 = vmatprep.subr.mxu0 0.0
    %1119 = vmatpush1.msra.mxu0 %v1064
    %1120 = vmatprep.subr.mxu0 0.0
    %1121 = vmatpush1.msra.mxu0 %v1059
    %1122 = vmatprep.subr.mxu0 0.0
    %1123 = vmatpush1.msra.mxu0 %v1054
    %1124 = vmatprep.subr.mxu0 0.0
    %1125 = vmatpush2.msra.mxu0 0.0
    %1126 = vmatprep.subr.mxu0 0.0
    %1127 = vmatpush2.msra.mxu0 0.0
    %1128 = vmatprep.subr.mxu0 0.0
    %1129 = vmatpush2.msra.mxu0 0.0
    %1130 = vmatprep.subr.mxu0 0.0
    %1131 = vmatpush2.msra.mxu0 0.0
    %1132 = vmatprep.subr.mxu0 0.0
    %1133 = vmatpush2.msra.mxu0 0.0
    %1134 = vmatprep.subr.mxu0 0.0
    %1135 = vmatpush2.msra.mxu0 0.0
    %1136 = vmatprep.subr.mxu0 0.0
    %1137 = vmatpush2.msra.mxu0 0.0
    %1138 = vmatprep.subr.mxu0 0.0
    %1139 = vmatpush2.msra.mxu0 0.0
    %1140 = vmatprep.subr.mxu0 0.0
    %1141 = vmatpush2.msra.mxu0 0.0
    %1142 = vmatprep.subr.mxu0 0.0
    %1143 = vmatpush2.msra.mxu0 0.0
    %1144 = vmatprep.subr.mxu0 0.0
    %1145 = vmatpush2.msra.mxu0 0.0
    %1146 = vmatprep.subr.mxu0 0.0
    %1147 = vmatpush2.msra.mxu0 0.0
    %1148 = vmatprep.subr.mxu0 0.0
    %1149 = vmatpush2.msra.mxu0 0.0
    %1150 = vmatprep.subr.mxu0 0.0
    %1151 = vmatpush2.msra.mxu0 0.0
    %1152 = vmatprep.subr.mxu0 0.0
    %1153 = vmatpush2.msra.mxu0 0.0
    %1154 = vmatprep.subr.mxu0 0.0
    %1155 = vmatpush2.msra.mxu0 0.0
    %1156 = vmatprep.mubr.f32.mxu0 0.0
    %1157 = vmatmul.mubr.f32.gmra.mxu0 %v241
    %v1158 = vpop.f32.mrf.mxu0
    %v1159 = vadd.f32 %v833, %v1158
    %v1160 = vpop.f32.mrf.mxu0
    %1161 = vmatprep.mubr.f32.mxu0 0.0
    %1162 = vmatmul.mubr.f32.gmra.mxu0 %v244
    %v1163 = vpop.f32.mrf.mxu0
    %v1164 = vadd.f32 %v833, %v1163
    %v1165 = vpop.f32.mrf.mxu0
    %1166 = vmatprep.mubr.f32.mxu0 0.0
    %1167 = vmatmul.mubr.f32.gmra.mxu0 %v247
    %v1168 = vpop.f32.mrf.mxu0
    %v1169 = vadd.f32 %v833, %v1168
    %v1170 = vpop.f32.mrf.mxu0
    %1171 = vmatprep.mubr.f32.mxu0 0.0
    %1172 = vmatmul.mubr.f32.gmra.mxu0 %v250
    %v1173 = vpop.f32.mrf.mxu0
    %v1174 = vadd.f32 %v833, %v1173
    %v1175 = vpop.f32.mrf.mxu0
    %1176 = vmatprep.mubr.f32.mxu0 0.0
    %1177 = vmatmul.mubr.f32.gmra.mxu0 %v253
    %v1178 = vpop.f32.mrf.mxu0
    %v1179 = vadd.f32 %v833, %v1178
    %v1180 = vpop.f32.mrf.mxu0
    %1181 = vmatprep.mubr.f32.mxu0 0.0
    %1182 = vmatmul.mubr.f32.gmra.mxu0 %v256
    %v1183 = vpop.f32.mrf.mxu0
    %v1184 = vadd.f32 %v833, %v1183
    %v1185 = vpop.f32.mrf.mxu0
    %1186 = vmatprep.mubr.f32.mxu0 0.0
    %1187 = vmatmul.mubr.f32.gmra.mxu0 %v259
    %v1188 = vpop.f32.mrf.mxu0
    %v1189 = vadd.f32 %v833, %v1188
    %v1190 = vpop.f32.mrf.mxu0
    %1191 = vmatprep.mubr.f32.mxu0 0.0
    %1192 = vmatmul.mubr.f32.gmra.mxu0 %v262
    %v1193 = vpop.f32.mrf.mxu0
    %v1194 = vadd.f32 %v833, %v1193
    %v1195 = vpop.f32.mrf.mxu0
    %1196 = vdwg.mxu0
    %v1197 = vadd.f32 %v1159, %v1164
    %v1198 = vadd.f32 %v1197, %v1169
    %v1199 = vadd.f32 %v1198, %v1174
    %v1200 = vadd.f32 %v1199, %v1179
    %v1201 = vadd.f32 %v1200, %v1184
    %v1202 = vadd.f32 %v1201, %v1189
    %v1203 = vadd.f32 %v1202, %v1194
    %v1204 = vrot.slane %v1203, 4
    %v1205 = vadd.f32 %v1203, %v1204
    %v1206 = vrot.slane %v1205, 2
    %v1207 = vadd.f32 %v1205, %v1206
    %v1208 = vrot.slane %v1207, 1
    %v1209 = vadd.f32 %v1207, %v1208
    %v1210 = vmul.f32 %v1209, %v640
    %v1211 = vsub.f32 %v1159, %v1210
    %v1212 = vsub.f32 %v1164, %v1210
    %v1213 = vsub.f32 %v1169, %v1210
    %v1214 = vsub.f32 %v1174, %v1210
    %v1215 = vsub.f32 %v1179, %v1210
    %v1216 = vsub.f32 %v1184, %v1210
    %v1217 = vsub.f32 %v1189, %v1210
    %v1218 = vsub.f32 %v1194, %v1210
    %v1219 = vmul.f32 %v1211, %v1211
    %v1220 = vmul.f32 %v1212, %v1212
    %v1221 = vmul.f32 %v1213, %v1213
    %v1222 = vmul.f32 %v1214, %v1214
    %v1223 = vmul.f32 %v1215, %v1215
    %v1224 = vmul.f32 %v1216, %v1216
    %v1225 = vmul.f32 %v1217, %v1217
    %v1226 = vmul.f32 %v1218, %v1218
    %v1227 = vadd.f32 %v1219, %v1220
    %v1228 = vadd.f32 %v1227, %v1221
    %v1229 = vadd.f32 %v1228, %v1222
    %v1230 = vadd.f32 %v1229, %v1223
    %v1231 = vadd.f32 %v1230, %v1224
    %v1232 = vadd.f32 %v1231, %v1225
    %v1233 = vadd.f32 %v1232, %v1226
    %v1234 = vrot.slane %v1233, 4
    %v1235 = vadd.f32 %v1233, %v1234
    %v1236 = vrot.slane %v1235, 2
    %v1237 = vadd.f32 %v1235, %v1236
    %v1238 = vrot.slane %v1237, 1
    %v1239 = vadd.f32 %v1237, %v1238
    %v1240 = vmul.f32 %v1239, %v640
    %v1241 = vadd.f32 %v1240, 1e-05
    %v1242 = vrsqrt.pop %v1241
    %v1243 = vmul.f32 %v1211, %v1242
    %v1244 = vmul.f32 %v1212, %v1242
    %v1245 = vmul.f32 %v1213, %v1242
    %v1246 = vmul.f32 %v1214, %v1242
    %v1247 = vmul.f32 %v1215, %v1242
    %v1248 = vmul.f32 %v1216, %v1242
    %v1249 = vmul.f32 %v1217, %v1242
    %v1250 = vmul.f32 %v1218, %v1242
    %v1251 = vlaneseq
    %v1252 = vshrl.u32 %v1251, 7
    %v1253 = vsub.s32 1, %v1252
    %v1254 = vrot.slane %v724, %v1253
    %v1255 = vmul.f32 %v1243, %v1254
    %v1256 = vmul.f32 %v1244, %v1254
    %v1257 = vmul.f32 %v1245, %v1254
    %v1258 = vmul.f32 %v1246, %v1254
    %v1259 = vmul.f32 %v1247, %v1254
    %v1260 = vmul.f32 %v1248, %v1254
    %v1261 = vmul.f32 %v1249, %v1254
    %v1262 = vmul.f32 %v1250, %v1254
    %v1263 = vlaneseq
    %v1264 = vshrl.u32 %v1263, 7
    %v1265 = vsub.s32 2, %v1264
    %v1266 = vrot.slane %v724, %v1265
    %v1267 = vadd.f32 %v1255, %v1266
    %v1268 = vadd.f32 %v1256, %v1266
    %v1269 = vadd.f32 %v1257, %v1266
    %v1270 = vadd.f32 %v1258, %v1266
    %v1271 = vadd.f32 %v1259, %v1266
    %v1272 = vadd.f32 %v1260, %v1266
    %v1273 = vadd.f32 %v1261, %v1266
    %v1274 = vadd.f32 %v1262, %v1266
    %s1275 = scalar_lea.vmem [#allocation8], 256
    %v1276 = vld [vmem:[%s1275] sm:$0xff]
    %v1277 = vld [vmem:[%s1275 + $0x8] sm:$0xff]
    %v1278 = vld [vmem:[%s1275 + $0x10] sm:$0xff]
    %v1279 = vld [vmem:[%s1275 + $0x18] sm:$0xff]
    %v1280 = vld [vmem:[%s1275 + $0x20] sm:$0xff]
    %v1281 = vld [vmem:[%s1275 + $0x28] sm:$0xff]
    %v1282 = vld [vmem:[%s1275 + $0x30] sm:$0xff]
    %v1283 = vld [vmem:[%s1275 + $0x38] sm:$0xff]
    %v1284 = vld [vmem:[%s1275 + $0x40] sm:$0xff]
    %v1285 = vld [vmem:[%s1275 + $0x48] sm:$0xff]
    %v1286 = vld [vmem:[%s1275 + $0x50] sm:$0xff]
    %v1287 = vld [vmem:[%s1275 + $0x58] sm:$0xff]
    %v1288 = vld [vmem:[%s1275 + $0x60] sm:$0xff]
    %v1289 = vld [vmem:[%s1275 + $0x68] sm:$0xff]
    %v1290 = vld [vmem:[%s1275 + $0x70] sm:$0xff]
    %v1291 = vld [vmem:[%s1275 + $0x78] sm:$0xff]
    %s1292 = scalar_lea.vmem [#allocation10], 8
    %v1293 = vld [vmem:[%s1292] sm:$0x7]
    %1294 = vmatprep.subr.mxu0 0.0
    %1295 = vmatpush1.msra.mxu0 %v1291
    %1296 = vmatprep.subr.mxu0 0.0
    %1297 = vmatpush1.msra.mxu0 %v1290
    %1298 = vmatprep.subr.mxu0 0.0
    %1299 = vmatpush1.msra.mxu0 %v1289
    %1300 = vmatprep.subr.mxu0 0.0
    %1301 = vmatpush1.msra.mxu0 %v1288
    %1302 = vmatprep.subr.mxu0 0.0
    %1303 = vmatpush1.msra.mxu0 %v1287
    %1304 = vmatprep.subr.mxu0 0.0
    %1305 = vmatpush1.msra.mxu0 %v1286
    %1306 = vmatprep.subr.mxu0 0.0
    %1307 = vmatpush1.msra.mxu0 %v1285
    %1308 = vmatprep.subr.mxu0 0.0
    %1309 = vmatpush1.msra.mxu0 %v1284
    %1310 = vmatprep.subr.mxu0 0.0
    %1311 = vmatpush1.msra.mxu0 %v1283
    %1312 = vmatprep.subr.mxu0 0.0
    %1313 = vmatpush1.msra.mxu0 %v1282
    %1314 = vmatprep.subr.mxu0 0.0
    %1315 = vmatpush1.msra.mxu0 %v1281
    %1316 = vmatprep.subr.mxu0 0.0
    %1317 = vmatpush1.msra.mxu0 %v1280
    %1318 = vmatprep.subr.mxu0 0.0
    %1319 = vmatpush1.msra.mxu0 %v1279
    %1320 = vmatprep.subr.mxu0 0.0
    %1321 = vmatpush1.msra.mxu0 %v1278
    %1322 = vmatprep.subr.mxu0 0.0
    %1323 = vmatpush1.msra.mxu0 %v1277
    %1324 = vmatprep.subr.mxu0 0.0
    %1325 = vmatpush1.msra.mxu0 %v1276
    %1326 = vmatprep.subr.mxu0 0.0
    %1327 = vmatpush2.msra.mxu0 0.0
    %1328 = vmatprep.subr.mxu0 0.0
    %1329 = vmatpush2.msra.mxu0 0.0
    %1330 = vmatprep.subr.mxu0 0.0
    %1331 = vmatpush2.msra.mxu0 0.0
    %1332 = vmatprep.subr.mxu0 0.0
    %1333 = vmatpush2.msra.mxu0 0.0
    %1334 = vmatprep.subr.mxu0 0.0
    %1335 = vmatpush2.msra.mxu0 0.0
    %1336 = vmatprep.subr.mxu0 0.0
    %1337 = vmatpush2.msra.mxu0 0.0
    %1338 = vmatprep.subr.mxu0 0.0
    %1339 = vmatpush2.msra.mxu0 0.0
    %1340 = vmatprep.subr.mxu0 0.0
    %1341 = vmatpush2.msra.mxu0 0.0
    %1342 = vmatprep.subr.mxu0 0.0
    %1343 = vmatpush2.msra.mxu0 0.0
    %1344 = vmatprep.subr.mxu0 0.0
    %1345 = vmatpush2.msra.mxu0 0.0
    %1346 = vmatprep.subr.mxu0 0.0
    %1347 = vmatpush2.msra.mxu0 0.0
    %1348 = vmatprep.subr.mxu0 0.0
    %1349 = vmatpush2.msra.mxu0 0.0
    %1350 = vmatprep.subr.mxu0 0.0
    %1351 = vmatpush2.msra.mxu0 0.0
    %1352 = vmatprep.subr.mxu0 0.0
    %1353 = vmatpush2.msra.mxu0 0.0
    %1354 = vmatprep.subr.mxu0 0.0
    %1355 = vmatpush2.msra.mxu0 0.0
    %1356 = vmatprep.subr.mxu0 0.0
    %1357 = vmatpush2.msra.mxu0 0.0
    %1358 = vmatprep.mubr.f32.mxu0 0.0
    %1359 = vmatmul.mubr.f32.gmra.mxu0 %v1267
    %v1360 = vpop.f32.mrf.mxu0
    %v1361 = vadd.f32 0.0, %v1360
    %v1362 = vpop.f32.mrf.mxu0
    %1363 = vmatprep.mubr.f32.mxu0 0.0
    %1364 = vmatmul.mubr.f32.gmra.mxu0 %v1268
    %v1365 = vpop.f32.mrf.mxu0
    %v1366 = vadd.f32 0.0, %v1365
    %v1367 = vpop.f32.mrf.mxu0
    %1368 = vmatprep.mubr.f32.mxu0 0.0
    %1369 = vmatmul.mubr.f32.gmra.mxu0 %v1269
    %v1370 = vpop.f32.mrf.mxu0
    %v1371 = vadd.f32 0.0, %v1370
    %v1372 = vpop.f32.mrf.mxu0
    %1373 = vmatprep.mubr.f32.mxu0 0.0
    %1374 = vmatmul.mubr.f32.gmra.mxu0 %v1270
    %v1375 = vpop.f32.mrf.mxu0
    %v1376 = vadd.f32 0.0, %v1375
    %v1377 = vpop.f32.mrf.mxu0
    %1378 = vmatprep.mubr.f32.mxu0 0.0
    %1379 = vmatmul.mubr.f32.gmra.mxu0 %v1271
    %v1380 = vpop.f32.mrf.mxu0
    %v1381 = vadd.f32 0.0, %v1380
    %v1382 = vpop.f32.mrf.mxu0
    %1383 = vmatprep.mubr.f32.mxu0 0.0
    %1384 = vmatmul.mubr.f32.gmra.mxu0 %v1272
    %v1385 = vpop.f32.mrf.mxu0
    %v1386 = vadd.f32 0.0, %v1385
    %v1387 = vpop.f32.mrf.mxu0
    %1388 = vmatprep.mubr.f32.mxu0 0.0
    %1389 = vmatmul.mubr.f32.gmra.mxu0 %v1273
    %v1390 = vpop.f32.mrf.mxu0
    %v1391 = vadd.f32 0.0, %v1390
    %v1392 = vpop.f32.mrf.mxu0
    %1393 = vmatprep.mubr.f32.mxu0 0.0
    %1394 = vmatmul.mubr.f32.gmra.mxu0 %v1274
    %v1395 = vpop.f32.mrf.mxu0
    %v1396 = vadd.f32 0.0, %v1395
    %v1397 = vpop.f32.mrf.mxu0
    %1398 = vdwg.mxu0
    %v1399 = vlaneseq
    %v1400 = vshrl.u32 %v1399, 7
    %v1401 = vsub.s32 0, %v1400
    %v1402 = vrot.slane %v1293, %v1401
    %1403 = vmatprep.subr.mxu0 0.0
    %1404 = vmatpush1.msra.mxu0 0.0
    %1405 = vmatprep.subr.mxu0 0.0
    %1406 = vmatpush1.msra.mxu0 0.0
    %1407 = vmatprep.subr.mxu0 0.0
    %1408 = vmatpush1.msra.mxu0 0.0
    %1409 = vmatprep.subr.mxu0 0.0
    %1410 = vmatpush1.msra.mxu0 0.0
    %1411 = vmatprep.subr.mxu0 0.0
    %1412 = vmatpush1.msra.mxu0 0.0
    %1413 = vmatprep.subr.mxu0 0.0
    %1414 = vmatpush1.msra.mxu0 0.0
    %1415 = vmatprep.subr.mxu0 0.0
    %1416 = vmatpush1.msra.mxu0 0.0
    %1417 = vmatprep.subr.mxu0 0.0
    %1418 = vmatpush1.msra.mxu0 0.0
    %1419 = vmatprep.subr.mxu0 0.0
    %1420 = vmatpush1.msra.mxu0 %v1396
    %1421 = vmatprep.subr.mxu0 0.0
    %1422 = vmatpush1.msra.mxu0 %v1391
    %1423 = vmatprep.subr.mxu0 0.0
    %1424 = vmatpush1.msra.mxu0 %v1386
    %1425 = vmatprep.subr.mxu0 0.0
    %1426 = vmatpush1.msra.mxu0 %v1381
    %1427 = vmatprep.subr.mxu0 0.0
    %1428 = vmatpush1.msra.mxu0 %v1376
    %1429 = vmatprep.subr.mxu0 0.0
    %1430 = vmatpush1.msra.mxu0 %v1371
    %1431 = vmatprep.subr.mxu0 0.0
    %1432 = vmatpush1.msra.mxu0 %v1366
    %1433 = vmatprep.subr.mxu0 0.0
    %1434 = vmatpush1.msra.mxu0 %v1361
    %1435 = vmatprep.subr.mxu0 0.0
    %1436 = vmatpush2.msra.mxu0 0.0
    %1437 = vmatprep.subr.mxu0 0.0
    %1438 = vmatpush2.msra.mxu0 0.0
    %1439 = vmatprep.subr.mxu0 0.0
    %1440 = vmatpush2.msra.mxu0 0.0
    %1441 = vmatprep.subr.mxu0 0.0
    %1442 = vmatpush2.msra.mxu0 0.0
    %1443 = vmatprep.subr.mxu0 0.0
    %1444 = vmatpush2.msra.mxu0 0.0
    %1445 = vmatprep.subr.mxu0 0.0
    %1446 = vmatpush2.msra.mxu0 0.0
    %1447 = vmatprep.subr.mxu0 0.0
    %1448 = vmatpush2.msra.mxu0 0.0
    %1449 = vmatprep.subr.mxu0 0.0
    %1450 = vmatpush2.msra.mxu0 0.0
    %1451 = vmatprep.subr.mxu0 0.0
    %1452 = vmatpush2.msra.mxu0 0.0
    %1453 = vmatprep.subr.mxu0 0.0
    %1454 = vmatpush2.msra.mxu0 0.0
    %1455 = vmatprep.subr.mxu0 0.0
    %1456 = vmatpush2.msra.mxu0 0.0
    %1457 = vmatprep.subr.mxu0 0.0
    %1458 = vmatpush2.msra.mxu0 0.0
    %1459 = vmatprep.subr.mxu0 0.0
    %1460 = vmatpush2.msra.mxu0 0.0
    %1461 = vmatprep.subr.mxu0 0.0
    %1462 = vmatpush2.msra.mxu0 0.0
    %1463 = vmatprep.subr.mxu0 0.0
    %1464 = vmatpush2.msra.mxu0 0.0
    %1465 = vmatprep.subr.mxu0 0.0
    %1466 = vmatpush2.msra.mxu0 0.0
    %1467 = vmatprep.mubr.f32.mxu0 0.0
    %1468 = vmatmul.mubr.f32.gmra.mxu0 %v241
    %v1469 = vpop.f32.mrf.mxu0
    %v1470 = vadd.f32 %v1402, %v1469
    %v1471 = vpop.f32.mrf.mxu0
    %1472 = vmatprep.mubr.f32.mxu0 0.0
    %1473 = vmatmul.mubr.f32.gmra.mxu0 %v244
    %v1474 = vpop.f32.mrf.mxu0
    %v1475 = vadd.f32 %v1402, %v1474
    %v1476 = vpop.f32.mrf.mxu0
    %1477 = vmatprep.mubr.f32.mxu0 0.0
    %1478 = vmatmul.mubr.f32.gmra.mxu0 %v247
    %v1479 = vpop.f32.mrf.mxu0
    %v1480 = vadd.f32 %v1402, %v1479
    %v1481 = vpop.f32.mrf.mxu0
    %1482 = vmatprep.mubr.f32.mxu0 0.0
    %1483 = vmatmul.mubr.f32.gmra.mxu0 %v250
    %v1484 = vpop.f32.mrf.mxu0
    %v1485 = vadd.f32 %v1402, %v1484
    %v1486 = vpop.f32.mrf.mxu0
    %1487 = vmatprep.mubr.f32.mxu0 0.0
    %1488 = vmatmul.mubr.f32.gmra.mxu0 %v253
    %v1489 = vpop.f32.mrf.mxu0
    %v1490 = vadd.f32 %v1402, %v1489
    %v1491 = vpop.f32.mrf.mxu0
    %1492 = vmatprep.mubr.f32.mxu0 0.0
    %1493 = vmatmul.mubr.f32.gmra.mxu0 %v256
    %v1494 = vpop.f32.mrf.mxu0
    %v1495 = vadd.f32 %v1402, %v1494
    %v1496 = vpop.f32.mrf.mxu0
    %1497 = vmatprep.mubr.f32.mxu0 0.0
    %1498 = vmatmul.mubr.f32.gmra.mxu0 %v259
    %v1499 = vpop.f32.mrf.mxu0
    %v1500 = vadd.f32 %v1402, %v1499
    %v1501 = vpop.f32.mrf.mxu0
    %1502 = vmatprep.mubr.f32.mxu0 0.0
    %1503 = vmatmul.mubr.f32.gmra.mxu0 %v262
    %v1504 = vpop.f32.mrf.mxu0
    %v1505 = vadd.f32 %v1402, %v1504
    %v1506 = vpop.f32.mrf.mxu0
    %1507 = vdwg.mxu0
    %v1508 = vmax.f32 %v1470, 0.0
    %v1509 = vmax.f32 %v1475, 0.0
    %v1510 = vmax.f32 %v1480, 0.0
    %v1511 = vmax.f32 %v1485, 0.0
    %v1512 = vmax.f32 %v1490, 0.0
    %v1513 = vmax.f32 %v1495, 0.0
    %v1514 = vmax.f32 %v1500, 0.0
    %v1515 = vmax.f32 %v1505, 0.0
    %v1516 = vmul.f32 %v971, 0.2
    %v1517 = vmul.f32 %v972, 0.2
    %v1518 = vmul.f32 %v973, 0.2
    %v1519 = vmul.f32 %v974, 0.2
    %v1520 = vmul.f32 %v975, 0.2
    %v1521 = vmul.f32 %v976, 0.2
    %v1522 = vmul.f32 %v977, 0.2
    %v1523 = vmul.f32 %v978, 0.2
    %v1524 = vsub.f32 %v1508, %v1516
    %v1525 = vsub.f32 %v1509, %v1517
    %v1526 = vsub.f32 %v1510, %v1518
    %v1527 = vsub.f32 %v1511, %v1519
    %v1528 = vsub.f32 %v1512, %v1520
    %v1529 = vsub.f32 %v1513, %v1521
    %v1530 = vsub.f32 %v1514, %v1522
    %v1531 = vsub.f32 %v1515, %v1523
    %v1532 = vsub.f32 %v1524, %v1267
    %v1533 = vsub.f32 %v1525, %v1268
    %v1534 = vsub.f32 %v1526, %v1269
    %v1535 = vsub.f32 %v1527, %v1270
    %v1536 = vsub.f32 %v1528, %v1271
    %v1537 = vsub.f32 %v1529, %v1272
    %v1538 = vsub.f32 %v1530, %v1273
    %v1539 = vsub.f32 %v1531, %v1274
    %v1540 = vadd.f32 %v971, %v1532
    %v1541 = vadd.f32 %v972, %v1533
    %v1542 = vadd.f32 %v973, %v1534
    %v1543 = vadd.f32 %v974, %v1535
    %v1544 = vadd.f32 %v975, %v1536
    %v1545 = vadd.f32 %v976, %v1537
    %v1546 = vadd.f32 %v977, %v1538
    %v1547 = vadd.f32 %v978, %v1539
    %v1548 = vadd.f32 %v1267, %v1540
    %v1549 = vadd.f32 %v1268, %v1541
    %v1550 = vadd.f32 %v1269, %v1542
    %v1551 = vadd.f32 %v1270, %v1543
    %v1552 = vadd.f32 %v1271, %v1544
    %v1553 = vadd.f32 %v1272, %v1545
    %v1554 = vadd.f32 %v1273, %v1546
    %v1555 = vadd.f32 %v1274, %v1547
    %1556 = vmatprep.subr.mxu0 0.0
    %1557 = vmatpush1.msra.mxu0 %v1291
    %1558 = vmatprep.subr.mxu0 0.0
    %1559 = vmatpush1.msra.mxu0 %v1290
    %1560 = vmatprep.subr.mxu0 0.0
    %1561 = vmatpush1.msra.mxu0 %v1289
    %1562 = vmatprep.subr.mxu0 0.0
    %1563 = vmatpush1.msra.mxu0 %v1288
    %1564 = vmatprep.subr.mxu0 0.0
    %1565 = vmatpush1.msra.mxu0 %v1287
    %1566 = vmatprep.subr.mxu0 0.0
    %1567 = vmatpush1.msra.mxu0 %v1286
    %1568 = vmatprep.subr.mxu0 0.0
    %1569 = vmatpush1.msra.mxu0 %v1285
    %1570 = vmatprep.subr.mxu0 0.0
    %1571 = vmatpush1.msra.mxu0 %v1284
    %1572 = vmatprep.subr.mxu0 0.0
    %1573 = vmatpush1.msra.mxu0 %v1283
    %1574 = vmatprep.subr.mxu0 0.0
    %1575 = vmatpush1.msra.mxu0 %v1282
    %1576 = vmatprep.subr.mxu0 0.0
    %1577 = vmatpush1.msra.mxu0 %v1281
    %1578 = vmatprep.subr.mxu0 0.0
    %1579 = vmatpush1.msra.mxu0 %v1280
    %1580 = vmatprep.subr.mxu0 0.0
    %1581 = vmatpush1.msra.mxu0 %v1279
    %1582 = vmatprep.subr.mxu0 0.0
    %1583 = vmatpush1.msra.mxu0 %v1278
    %1584 = vmatprep.subr.mxu0 0.0
    %1585 = vmatpush1.msra.mxu0 %v1277
    %1586 = vmatprep.subr.mxu0 0.0
    %1587 = vmatpush1.msra.mxu0 %v1276
    %1588 = vmatprep.subr.mxu0 0.0
    %1589 = vmatpush2.msra.mxu0 0.0
    %1590 = vmatprep.subr.mxu0 0.0
    %1591 = vmatpush2.msra.mxu0 0.0
    %1592 = vmatprep.subr.mxu0 0.0
    %1593 = vmatpush2.msra.mxu0 0.0
    %1594 = vmatprep.subr.mxu0 0.0
    %1595 = vmatpush2.msra.mxu0 0.0
    %1596 = vmatprep.subr.mxu0 0.0
    %1597 = vmatpush2.msra.mxu0 0.0
    %1598 = vmatprep.subr.mxu0 0.0
    %1599 = vmatpush2.msra.mxu0 0.0
    %1600 = vmatprep.subr.mxu0 0.0
    %1601 = vmatpush2.msra.mxu0 0.0
    %1602 = vmatprep.subr.mxu0 0.0
    %1603 = vmatpush2.msra.mxu0 0.0
    %1604 = vmatprep.subr.mxu0 0.0
    %1605 = vmatpush2.msra.mxu0 0.0
    %1606 = vmatprep.subr.mxu0 0.0
    %1607 = vmatpush2.msra.mxu0 0.0
    %1608 = vmatprep.subr.mxu0 0.0
    %1609 = vmatpush2.msra.mxu0 0.0
    %1610 = vmatprep.subr.mxu0 0.0
    %1611 = vmatpush2.msra.mxu0 0.0
    %1612 = vmatprep.subr.mxu0 0.0
    %1613 = vmatpush2.msra.mxu0 0.0
    %1614 = vmatprep.subr.mxu0 0.0
    %1615 = vmatpush2.msra.mxu0 0.0
    %1616 = vmatprep.subr.mxu0 0.0
    %1617 = vmatpush2.msra.mxu0 0.0
    %1618 = vmatprep.subr.mxu0 0.0
    %1619 = vmatpush2.msra.mxu0 0.0
    %1620 = vmatprep.mubr.f32.mxu0 0.0
    %1621 = vmatmul.mubr.f32.gmra.mxu0 %v1548
    %v1622 = vpop.f32.mrf.mxu0
    %v1623 = vadd.f32 0.0, %v1622
    %v1624 = vpop.f32.mrf.mxu0
    %1625 = vmatprep.mubr.f32.mxu0 0.0
    %1626 = vmatmul.mubr.f32.gmra.mxu0 %v1549
    %v1627 = vpop.f32.mrf.mxu0
    %v1628 = vadd.f32 0.0, %v1627
    %v1629 = vpop.f32.mrf.mxu0
    %1630 = vmatprep.mubr.f32.mxu0 0.0
    %1631 = vmatmul.mubr.f32.gmra.mxu0 %v1550
    %v1632 = vpop.f32.mrf.mxu0
    %v1633 = vadd.f32 0.0, %v1632
    %v1634 = vpop.f32.mrf.mxu0
    %1635 = vmatprep.mubr.f32.mxu0 0.0
    %1636 = vmatmul.mubr.f32.gmra.mxu0 %v1551
    %v1637 = vpop.f32.mrf.mxu0
    %v1638 = vadd.f32 0.0, %v1637
    %v1639 = vpop.f32.mrf.mxu0
    %1640 = vmatprep.mubr.f32.mxu0 0.0
    %1641 = vmatmul.mubr.f32.gmra.mxu0 %v1552
    %v1642 = vpop.f32.mrf.mxu0
    %v1643 = vadd.f32 0.0, %v1642
    %v1644 = vpop.f32.mrf.mxu0
    %1645 = vmatprep.mubr.f32.mxu0 0.0
    %1646 = vmatmul.mubr.f32.gmra.mxu0 %v1553
    %v1647 = vpop.f32.mrf.mxu0
    %v1648 = vadd.f32 0.0, %v1647
    %v1649 = vpop.f32.mrf.mxu0
    %1650 = vmatprep.mubr.f32.mxu0 0.0
    %1651 = vmatmul.mubr.f32.gmra.mxu0 %v1554
    %v1652 = vpop.f32.mrf.mxu0
    %v1653 = vadd.f32 0.0, %v1652
    %v1654 = vpop.f32.mrf.mxu0
    %1655 = vmatprep.mubr.f32.mxu0 0.0
    %1656 = vmatmul.mubr.f32.gmra.mxu0 %v1555
    %v1657 = vpop.f32.mrf.mxu0
    %v1658 = vadd.f32 0.0, %v1657
    %v1659 = vpop.f32.mrf.mxu0
    %1660 = vdwg.mxu0
    %1661 = vmatprep.subr.mxu0 0.0
    %1662 = vmatpush1.msra.mxu0 0.0
    %1663 = vmatprep.subr.mxu0 0.0
    %1664 = vmatpush1.msra.mxu0 0.0
    %1665 = vmatprep.subr.mxu0 0.0
    %1666 = vmatpush1.msra.mxu0 0.0
    %1667 = vmatprep.subr.mxu0 0.0
    %1668 = vmatpush1.msra.mxu0 0.0
    %1669 = vmatprep.subr.mxu0 0.0
    %1670 = vmatpush1.msra.mxu0 0.0
    %1671 = vmatprep.subr.mxu0 0.0
    %1672 = vmatpush1.msra.mxu0 0.0
    %1673 = vmatprep.subr.mxu0 0.0
    %1674 = vmatpush1.msra.mxu0 0.0
    %1675 = vmatprep.subr.mxu0 0.0
    %1676 = vmatpush1.msra.mxu0 0.0
    %1677 = vmatprep.subr.mxu0 0.0
    %1678 = vmatpush1.msra.mxu0 %v1658
    %1679 = vmatprep.subr.mxu0 0.0
    %1680 = vmatpush1.msra.mxu0 %v1653
    %1681 = vmatprep.subr.mxu0 0.0
    %1682 = vmatpush1.msra.mxu0 %v1648
    %1683 = vmatprep.subr.mxu0 0.0
    %1684 = vmatpush1.msra.mxu0 %v1643
    %1685 = vmatprep.subr.mxu0 0.0
    %1686 = vmatpush1.msra.mxu0 %v1638
    %1687 = vmatprep.subr.mxu0 0.0
    %1688 = vmatpush1.msra.mxu0 %v1633
    %1689 = vmatprep.subr.mxu0 0.0
    %1690 = vmatpush1.msra.mxu0 %v1628
    %1691 = vmatprep.subr.mxu0 0.0
    %1692 = vmatpush1.msra.mxu0 %v1623
    %1693 = vmatprep.subr.mxu0 0.0
    %1694 = vmatpush2.msra.mxu0 0.0
    %1695 = vmatprep.subr.mxu0 0.0
    %1696 = vmatpush2.msra.mxu0 0.0
    %1697 = vmatprep.subr.mxu0 0.0
    %1698 = vmatpush2.msra.mxu0 0.0
    %1699 = vmatprep.subr.mxu0 0.0
    %1700 = vmatpush2.msra.mxu0 0.0
    %1701 = vmatprep.subr.mxu0 0.0
    %1702 = vmatpush2.msra.mxu0 0.0
    %1703 = vmatprep.subr.mxu0 0.0
    %1704 = vmatpush2.msra.mxu0 0.0
    %1705 = vmatprep.subr.mxu0 0.0
    %1706 = vmatpush2.msra.mxu0 0.0
    %1707 = vmatprep.subr.mxu0 0.0
    %1708 = vmatpush2.msra.mxu0 0.0
    %1709 = vmatprep.subr.mxu0 0.0
    %1710 = vmatpush2.msra.mxu0 0.0
    %1711 = vmatprep.subr.mxu0 0.0
    %1712 = vmatpush2.msra.mxu0 0.0
    %1713 = vmatprep.subr.mxu0 0.0
    %1714 = vmatpush2.msra.mxu0 0.0
    %1715 = vmatprep.subr.mxu0 0.0
    %1716 = vmatpush2.msra.mxu0 0.0
    %1717 = vmatprep.subr.mxu0 0.0
    %1718 = vmatpush2.msra.mxu0 0.0
    %1719 = vmatprep.subr.mxu0 0.0
    %1720 = vmatpush2.msra.mxu0 0.0
    %1721 = vmatprep.subr.mxu0 0.0
    %1722 = vmatpush2.msra.mxu0 0.0
    %1723 = vmatprep.subr.mxu0 0.0
    %1724 = vmatpush2.msra.mxu0 0.0
    %1725 = vmatprep.mubr.f32.mxu0 0.0
    %1726 = vmatmul.mubr.f32.gmra.mxu0 %v241
    %v1727 = vpop.f32.mrf.mxu0
    %v1728 = vadd.f32 %v1402, %v1727
    %v1729 = vpop.f32.mrf.mxu0
    %1730 = vmatprep.mubr.f32.mxu0 0.0
    %1731 = vmatmul.mubr.f32.gmra.mxu0 %v244
    %v1732 = vpop.f32.mrf.mxu0
    %v1733 = vadd.f32 %v1402, %v1732
    %v1734 = vpop.f32.mrf.mxu0
    %1735 = vmatprep.mubr.f32.mxu0 0.0
    %1736 = vmatmul.mubr.f32.gmra.mxu0 %v247
    %v1737 = vpop.f32.mrf.mxu0
    %v1738 = vadd.f32 %v1402, %v1737
    %v1739 = vpop.f32.mrf.mxu0
    %1740 = vmatprep.mubr.f32.mxu0 0.0
    %1741 = vmatmul.mubr.f32.gmra.mxu0 %v250
    %v1742 = vpop.f32.mrf.mxu0
    %v1743 = vadd.f32 %v1402, %v1742
    %v1744 = vpop.f32.mrf.mxu0
    %1745 = vmatprep.mubr.f32.mxu0 0.0
    %1746 = vmatmul.mubr.f32.gmra.mxu0 %v253
    %v1747 = vpop.f32.mrf.mxu0
    %v1748 = vadd.f32 %v1402, %v1747
    %v1749 = vpop.f32.mrf.mxu0
    %1750 = vmatprep.mubr.f32.mxu0 0.0
    %1751 = vmatmul.mubr.f32.gmra.mxu0 %v256
    %v1752 = vpop.f32.mrf.mxu0
    %v1753 = vadd.f32 %v1402, %v1752
    %v1754 = vpop.f32.mrf.mxu0
    %1755 = vmatprep.mubr.f32.mxu0 0.0
    %1756 = vmatmul.mubr.f32.gmra.mxu0 %v259
    %v1757 = vpop.f32.mrf.mxu0
    %v1758 = vadd.f32 %v1402, %v1757
    %v1759 = vpop.f32.mrf.mxu0
    %1760 = vmatprep.mubr.f32.mxu0 0.0
    %1761 = vmatmul.mubr.f32.gmra.mxu0 %v262
    %v1762 = vpop.f32.mrf.mxu0
    %v1763 = vadd.f32 %v1402, %v1762
    %v1764 = vpop.f32.mrf.mxu0
    %1765 = vdwg.mxu0
    %v1766 = vadd.f32 %v1728, %v1733
    %v1767 = vadd.f32 %v1766, %v1738
    %v1768 = vadd.f32 %v1767, %v1743
    %v1769 = vadd.f32 %v1768, %v1748
    %v1770 = vadd.f32 %v1769, %v1753
    %v1771 = vadd.f32 %v1770, %v1758
    %v1772 = vadd.f32 %v1771, %v1763
    %v1773 = vrot.slane %v1772, 4
    %v1774 = vadd.f32 %v1772, %v1773
    %v1775 = vrot.slane %v1774, 2
    %v1776 = vadd.f32 %v1774, %v1775
    %v1777 = vrot.slane %v1776, 1
    %v1778 = vadd.f32 %v1776, %v1777
    %v1779 = vmul.f32 %v1778, %v640
    %v1780 = vsub.f32 %v1728, %v1779
    %v1781 = vsub.f32 %v1733, %v1779
    %v1782 = vsub.f32 %v1738, %v1779
    %v1783 = vsub.f32 %v1743, %v1779
    %v1784 = vsub.f32 %v1748, %v1779
    %v1785 = vsub.f32 %v1753, %v1779
    %v1786 = vsub.f32 %v1758, %v1779
    %v1787 = vsub.f32 %v1763, %v1779
    %v1788 = vmul.f32 %v1780, %v1780
    %v1789 = vmul.f32 %v1781, %v1781
    %v1790 = vmul.f32 %v1782, %v1782
    %v1791 = vmul.f32 %v1783, %v1783
    %v1792 = vmul.f32 %v1784, %v1784
    %v1793 = vmul.f32 %v1785, %v1785
    %v1794 = vmul.f32 %v1786, %v1786
    %v1795 = vmul.f32 %v1787, %v1787
    %v1796 = vadd.f32 %v1788, %v1789
    %v1797 = vadd.f32 %v1796, %v1790
    %v1798 = vadd.f32 %v1797, %v1791
    %v1799 = vadd.f32 %v1798, %v1792
    %v1800 = vadd.f32 %v1799, %v1793
    %v1801 = vadd.f32 %v1800, %v1794
    %v1802 = vadd.f32 %v1801, %v1795
    %v1803 = vrot.slane %v1802, 4
    %v1804 = vadd.f32 %v1802, %v1803
    %v1805 = vrot.slane %v1804, 2
    %v1806 = vadd.f32 %v1804, %v1805
    %v1807 = vrot.slane %v1806, 1
    %v1808 = vadd.f32 %v1806, %v1807
    %v1809 = vmul.f32 %v1808, %v640
    %v1810 = vadd.f32 %v1809, 1e-05
    %v1811 = vrsqrt.pop %v1810
    %v1812 = vmul.f32 %v1780, %v1811
    %v1813 = vmul.f32 %v1781, %v1811
    %v1814 = vmul.f32 %v1782, %v1811
    %v1815 = vmul.f32 %v1783, %v1811
    %v1816 = vmul.f32 %v1784, %v1811
    %v1817 = vmul.f32 %v1785, %v1811
    %v1818 = vmul.f32 %v1786, %v1811
    %v1819 = vmul.f32 %v1787, %v1811
    %v1820 = vlaneseq
    %v1821 = vshrl.u32 %v1820, 7
    %v1822 = vsub.s32 1, %v1821
    %v1823 = vrot.slane %v1293, %v1822
    %v1824 = vmul.f32 %v1812, %v1823
    %v1825 = vmul.f32 %v1813, %v1823
    %v1826 = vmul.f32 %v1814, %v1823
    %v1827 = vmul.f32 %v1815, %v1823
    %v1828 = vmul.f32 %v1816, %v1823
    %v1829 = vmul.f32 %v1817, %v1823
    %v1830 = vmul.f32 %v1818, %v1823
    %v1831 = vmul.f32 %v1819, %v1823
    %v1832 = vlaneseq
    %v1833 = vshrl.u32 %v1832, 7
    %v1834 = vsub.s32 2, %v1833
    %v1835 = vrot.slane %v1293, %v1834
    %v1836 = vadd.f32 %v1824, %v1835
    %v1837 = vadd.f32 %v1825, %v1835
    %v1838 = vadd.f32 %v1826, %v1835
    %v1839 = vadd.f32 %v1827, %v1835
    %v1840 = vadd.f32 %v1828, %v1835
    %v1841 = vadd.f32 %v1829, %v1835
    %v1842 = vadd.f32 %v1830, %v1835
    %v1843 = vadd.f32 %v1831, %v1835
    %s1844 = scalar_lea.vmem [#allocation8], 384
    %v1845 = vld [vmem:[%s1844] sm:$0xff]
    %v1846 = vld [vmem:[%s1844 + $0x8] sm:$0xff]
    %v1847 = vld [vmem:[%s1844 + $0x10] sm:$0xff]
    %v1848 = vld [vmem:[%s1844 + $0x18] sm:$0xff]
    %v1849 = vld [vmem:[%s1844 + $0x20] sm:$0xff]
    %v1850 = vld [vmem:[%s1844 + $0x28] sm:$0xff]
    %v1851 = vld [vmem:[%s1844 + $0x30] sm:$0xff]
    %v1852 = vld [vmem:[%s1844 + $0x38] sm:$0xff]
    %v1853 = vld [vmem:[%s1844 + $0x40] sm:$0xff]
    %v1854 = vld [vmem:[%s1844 + $0x48] sm:$0xff]
    %v1855 = vld [vmem:[%s1844 + $0x50] sm:$0xff]
    %v1856 = vld [vmem:[%s1844 + $0x58] sm:$0xff]
    %v1857 = vld [vmem:[%s1844 + $0x60] sm:$0xff]
    %v1858 = vld [vmem:[%s1844 + $0x68] sm:$0xff]
    %v1859 = vld [vmem:[%s1844 + $0x70] sm:$0xff]
    %v1860 = vld [vmem:[%s1844 + $0x78] sm:$0xff]
    %s1861 = scalar_lea.vmem [#allocation10], 12
    %v1862 = vld [vmem:[%s1861] sm:$0x7]
    %1863 = vmatprep.subr.mxu0 0.0
    %1864 = vmatpush1.msra.mxu0 %v1860
    %1865 = vmatprep.subr.mxu0 0.0
    %1866 = vmatpush1.msra.mxu0 %v1859
    %1867 = vmatprep.subr.mxu0 0.0
    %1868 = vmatpush1.msra.mxu0 %v1858
    %1869 = vmatprep.subr.mxu0 0.0
    %1870 = vmatpush1.msra.mxu0 %v1857
    %1871 = vmatprep.subr.mxu0 0.0
    %1872 = vmatpush1.msra.mxu0 %v1856
    %1873 = vmatprep.subr.mxu0 0.0
    %1874 = vmatpush1.msra.mxu0 %v1855
    %1875 = vmatprep.subr.mxu0 0.0
    %1876 = vmatpush1.msra.mxu0 %v1854
    %1877 = vmatprep.subr.mxu0 0.0
    %1878 = vmatpush1.msra.mxu0 %v1853
    %1879 = vmatprep.subr.mxu0 0.0
    %1880 = vmatpush1.msra.mxu0 %v1852
    %1881 = vmatprep.subr.mxu0 0.0
    %1882 = vmatpush1.msra.mxu0 %v1851
    %1883 = vmatprep.subr.mxu0 0.0
    %1884 = vmatpush1.msra.mxu0 %v1850
    %1885 = vmatprep.subr.mxu0 0.0
    %1886 = vmatpush1.msra.mxu0 %v1849
    %1887 = vmatprep.subr.mxu0 0.0
    %1888 = vmatpush1.msra.mxu0 %v1848
    %1889 = vmatprep.subr.mxu0 0.0
    %1890 = vmatpush1.msra.mxu0 %v1847
    %1891 = vmatprep.subr.mxu0 0.0
    %1892 = vmatpush1.msra.mxu0 %v1846
    %1893 = vmatprep.subr.mxu0 0.0
    %1894 = vmatpush1.msra.mxu0 %v1845
    %1895 = vmatprep.subr.mxu0 0.0
    %1896 = vmatpush2.msra.mxu0 0.0
    %1897 = vmatprep.subr.mxu0 0.0
    %1898 = vmatpush2.msra.mxu0 0.0
    %1899 = vmatprep.subr.mxu0 0.0
    %1900 = vmatpush2.msra.mxu0 0.0
    %1901 = vmatprep.subr.mxu0 0.0
    %1902 = vmatpush2.msra.mxu0 0.0
    %1903 = vmatprep.subr.mxu0 0.0
    %1904 = vmatpush2.msra.mxu0 0.0
    %1905 = vmatprep.subr.mxu0 0.0
    %1906 = vmatpush2.msra.mxu0 0.0
    %1907 = vmatprep.subr.mxu0 0.0
    %1908 = vmatpush2.msra.mxu0 0.0
    %1909 = vmatprep.subr.mxu0 0.0
    %1910 = vmatpush2.msra.mxu0 0.0
    %1911 = vmatprep.subr.mxu0 0.0
    %1912 = vmatpush2.msra.mxu0 0.0
    %1913 = vmatprep.subr.mxu0 0.0
    %1914 = vmatpush2.msra.mxu0 0.0
    %1915 = vmatprep.subr.mxu0 0.0
    %1916 = vmatpush2.msra.mxu0 0.0
    %1917 = vmatprep.subr.mxu0 0.0
    %1918 = vmatpush2.msra.mxu0 0.0
    %1919 = vmatprep.subr.mxu0 0.0
    %1920 = vmatpush2.msra.mxu0 0.0
    %1921 = vmatprep.subr.mxu0 0.0
    %1922 = vmatpush2.msra.mxu0 0.0
    %1923 = vmatprep.subr.mxu0 0.0
    %1924 = vmatpush2.msra.mxu0 0.0
    %1925 = vmatprep.subr.mxu0 0.0
    %1926 = vmatpush2.msra.mxu0 0.0
    %1927 = vmatprep.mubr.f32.mxu0 0.0
    %1928 = vmatmul.mubr.f32.gmra.mxu0 %v1836
    %v1929 = vpop.f32.mrf.mxu0
    %v1930 = vadd.f32 0.0, %v1929
    %v1931 = vpop.f32.mrf.mxu0
    %1932 = vmatprep.mubr.f32.mxu0 0.0
    %1933 = vmatmul.mubr.f32.gmra.mxu0 %v1837
    %v1934 = vpop.f32.mrf.mxu0
    %v1935 = vadd.f32 0.0, %v1934
    %v1936 = vpop.f32.mrf.mxu0
    %1937 = vmatprep.mubr.f32.mxu0 0.0
    %1938 = vmatmul.mubr.f32.gmra.mxu0 %v1838
    %v1939 = vpop.f32.mrf.mxu0
    %v1940 = vadd.f32 0.0, %v1939
    %v1941 = vpop.f32.mrf.mxu0
    %1942 = vmatprep.mubr.f32.mxu0 0.0
    %1943 = vmatmul.mubr.f32.gmra.mxu0 %v1839
    %v1944 = vpop.f32.mrf.mxu0
    %v1945 = vadd.f32 0.0, %v1944
    %v1946 = vpop.f32.mrf.mxu0
    %1947 = vmatprep.mubr.f32.mxu0 0.0
    %1948 = vmatmul.mubr.f32.gmra.mxu0 %v1840
    %v1949 = vpop.f32.mrf.mxu0
    %v1950 = vadd.f32 0.0, %v1949
    %v1951 = vpop.f32.mrf.mxu0
    %1952 = vmatprep.mubr.f32.mxu0 0.0
    %1953 = vmatmul.mubr.f32.gmra.mxu0 %v1841
    %v1954 = vpop.f32.mrf.mxu0
    %v1955 = vadd.f32 0.0, %v1954
    %v1956 = vpop.f32.mrf.mxu0
    %1957 = vmatprep.mubr.f32.mxu0 0.0
    %1958 = vmatmul.mubr.f32.gmra.mxu0 %v1842
    %v1959 = vpop.f32.mrf.mxu0
    %v1960 = vadd.f32 0.0, %v1959
    %v1961 = vpop.f32.mrf.mxu0
    %1962 = vmatprep.mubr.f32.mxu0 0.0
    %1963 = vmatmul.mubr.f32.gmra.mxu0 %v1843
    %v1964 = vpop.f32.mrf.mxu0
    %v1965 = vadd.f32 0.0, %v1964
    %v1966 = vpop.f32.mrf.mxu0
    %1967 = vdwg.mxu0
    %v1968 = vlaneseq
    %v1969 = vshrl.u32 %v1968, 7
    %v1970 = vsub.s32 0, %v1969
    %v1971 = vrot.slane %v1862, %v1970
    %1972 = vmatprep.subr.mxu0 0.0
    %1973 = vmatpush1.msra.mxu0 0.0
    %1974 = vmatprep.subr.mxu0 0.0
    %1975 = vmatpush1.msra.mxu0 0.0
    %1976 = vmatprep.subr.mxu0 0.0
    %1977 = vmatpush1.msra.mxu0 0.0
    %1978 = vmatprep.subr.mxu0 0.0
    %1979 = vmatpush1.msra.mxu0 0.0
    %1980 = vmatprep.subr.mxu0 0.0
    %1981 = vmatpush1.msra.mxu0 0.0
    %1982 = vmatprep.subr.mxu0 0.0
    %1983 = vmatpush1.msra.mxu0 0.0
    %1984 = vmatprep.subr.mxu0 0.0
    %1985 = vmatpush1.msra.mxu0 0.0
    %1986 = vmatprep.subr.mxu0 0.0
    %1987 = vmatpush1.msra.mxu0 0.0
    %1988 = vmatprep.subr.mxu0 0.0
    %1989 = vmatpush1.msra.mxu0 %v1965
    %1990 = vmatprep.subr.mxu0 0.0
    %1991 = vmatpush1.msra.mxu0 %v1960
    %1992 = vmatprep.subr.mxu0 0.0
    %1993 = vmatpush1.msra.mxu0 %v1955
    %1994 = vmatprep.subr.mxu0 0.0
    %1995 = vmatpush1.msra.mxu0 %v1950
    %1996 = vmatprep.subr.mxu0 0.0
    %1997 = vmatpush1.msra.mxu0 %v1945
    %1998 = vmatprep.subr.mxu0 0.0
    %1999 = vmatpush1.msra.mxu0 %v1940
    %2000 = vmatprep.subr.mxu0 0.0
    %2001 = vmatpush1.msra.mxu0 %v1935
    %2002 = vmatprep.subr.mxu0 0.0
    %2003 = vmatpush1.msra.mxu0 %v1930
    %2004 = vmatprep.subr.mxu0 0.0
    %2005 = vmatpush2.msra.mxu0 0.0
    %2006 = vmatprep.subr.mxu0 0.0
    %2007 = vmatpush2.msra.mxu0 0.0
    %2008 = vmatprep.subr.mxu0 0.0
    %2009 = vmatpush2.msra.mxu0 0.0
    %2010 = vmatprep.subr.mxu0 0.0
    %2011 = vmatpush2.msra.mxu0 0.0
    %2012 = vmatprep.subr.mxu0 0.0
    %2013 = vmatpush2.msra.mxu0 0.0
    %2014 = vmatprep.subr.mxu0 0.0
    %2015 = vmatpush2.msra.mxu0 0.0
    %2016 = vmatprep.subr.mxu0 0.0
    %2017 = vmatpush2.msra.mxu0 0.0
    %2018 = vmatprep.subr.mxu0 0.0
    %2019 = vmatpush2.msra.mxu0 0.0
    %2020 = vmatprep.subr.mxu0 0.0
    %2021 = vmatpush2.msra.mxu0 0.0
    %2022 = vmatprep.subr.mxu0 0.0
    %2023 = vmatpush2.msra.mxu0 0.0
    %2024 = vmatprep.subr.mxu0 0.0
    %2025 = vmatpush2.msra.mxu0 0.0
    %2026 = vmatprep.subr.mxu0 0.0
    %2027 = vmatpush2.msra.mxu0 0.0
    %2028 = vmatprep.subr.mxu0 0.0
    %2029 = vmatpush2.msra.mxu0 0.0
    %2030 = vmatprep.subr.mxu0 0.0
    %2031 = vmatpush2.msra.mxu0 0.0
    %2032 = vmatprep.subr.mxu0 0.0
    %2033 = vmatpush2.msra.mxu0 0.0
    %2034 = vmatprep.subr.mxu0 0.0
    %2035 = vmatpush2.msra.mxu0 0.0
    %2036 = vmatprep.mubr.f32.mxu0 0.0
    %2037 = vmatmul.mubr.f32.gmra.mxu0 %v241
    %v2038 = vpop.f32.mrf.mxu0
    %v2039 = vadd.f32 %v1971, %v2038
    %v2040 = vpop.f32.mrf.mxu0
    %2041 = vmatprep.mubr.f32.mxu0 0.0
    %2042 = vmatmul.mubr.f32.gmra.mxu0 %v244
    %v2043 = vpop.f32.mrf.mxu0
    %v2044 = vadd.f32 %v1971, %v2043
    %v2045 = vpop.f32.mrf.mxu0
    %2046 = vmatprep.mubr.f32.mxu0 0.0
    %2047 = vmatmul.mubr.f32.gmra.mxu0 %v247
    %v2048 = vpop.f32.mrf.mxu0
    %v2049 = vadd.f32 %v1971, %v2048
    %v2050 = vpop.f32.mrf.mxu0
    %2051 = vmatprep.mubr.f32.mxu0 0.0
    %2052 = vmatmul.mubr.f32.gmra.mxu0 %v250
    %v2053 = vpop.f32.mrf.mxu0
    %v2054 = vadd.f32 %v1971, %v2053
    %v2055 = vpop.f32.mrf.mxu0
    %2056 = vmatprep.mubr.f32.mxu0 0.0
    %2057 = vmatmul.mubr.f32.gmra.mxu0 %v253
    %v2058 = vpop.f32.mrf.mxu0
    %v2059 = vadd.f32 %v1971, %v2058
    %v2060 = vpop.f32.mrf.mxu0
    %2061 = vmatprep.mubr.f32.mxu0 0.0
    %2062 = vmatmul.mubr.f32.gmra.mxu0 %v256
    %v2063 = vpop.f32.mrf.mxu0
    %v2064 = vadd.f32 %v1971, %v2063
    %v2065 = vpop.f32.mrf.mxu0
    %2066 = vmatprep.mubr.f32.mxu0 0.0
    %2067 = vmatmul.mubr.f32.gmra.mxu0 %v259
    %v2068 = vpop.f32.mrf.mxu0
    %v2069 = vadd.f32 %v1971, %v2068
    %v2070 = vpop.f32.mrf.mxu0
    %2071 = vmatprep.mubr.f32.mxu0 0.0
    %2072 = vmatmul.mubr.f32.gmra.mxu0 %v262
    %v2073 = vpop.f32.mrf.mxu0
    %v2074 = vadd.f32 %v1971, %v2073
    %v2075 = vpop.f32.mrf.mxu0
    %2076 = vdwg.mxu0
    %v2077 = vmax.f32 %v2039, 0.0
    %v2078 = vmax.f32 %v2044, 0.0
    %v2079 = vmax.f32 %v2049, 0.0
    %v2080 = vmax.f32 %v2054, 0.0
    %v2081 = vmax.f32 %v2059, 0.0
    %v2082 = vmax.f32 %v2064, 0.0
    %v2083 = vmax.f32 %v2069, 0.0
    %v2084 = vmax.f32 %v2074, 0.0
    %v2085 = vmul.f32 %v1540, 0.2
    %v2086 = vmul.f32 %v1541, 0.2
    %v2087 = vmul.f32 %v1542, 0.2
    %v2088 = vmul.f32 %v1543, 0.2
    %v2089 = vmul.f32 %v1544, 0.2
    %v2090 = vmul.f32 %v1545, 0.2
    %v2091 = vmul.f32 %v1546, 0.2
    %v2092 = vmul.f32 %v1547, 0.2
    %v2093 = vsub.f32 %v2077, %v2085
    %v2094 = vsub.f32 %v2078, %v2086
    %v2095 = vsub.f32 %v2079, %v2087
    %v2096 = vsub.f32 %v2080, %v2088
    %v2097 = vsub.f32 %v2081, %v2089
    %v2098 = vsub.f32 %v2082, %v2090
    %v2099 = vsub.f32 %v2083, %v2091
    %v2100 = vsub.f32 %v2084, %v2092
    %v2101 = vsub.f32 %v2093, %v1836
    %v2102 = vsub.f32 %v2094, %v1837
    %v2103 = vsub.f32 %v2095, %v1838
    %v2104 = vsub.f32 %v2096, %v1839
    %v2105 = vsub.f32 %v2097, %v1840
    %v2106 = vsub.f32 %v2098, %v1841
    %v2107 = vsub.f32 %v2099, %v1842
    %v2108 = vsub.f32 %v2100, %v1843
    %v2109 = vadd.f32 %v1540, %v2101
    %v2110 = vadd.f32 %v1541, %v2102
    %v2111 = vadd.f32 %v1542, %v2103
    %v2112 = vadd.f32 %v1543, %v2104
    %v2113 = vadd.f32 %v1544, %v2105
    %v2114 = vadd.f32 %v1545, %v2106
    %v2115 = vadd.f32 %v1546, %v2107
    %v2116 = vadd.f32 %v1547, %v2108
    %v2117 = vadd.f32 %v1836, %v2109
    %v2118 = vadd.f32 %v1837, %v2110
    %v2119 = vadd.f32 %v1838, %v2111
    %v2120 = vadd.f32 %v1839, %v2112
    %v2121 = vadd.f32 %v1840, %v2113
    %v2122 = vadd.f32 %v1841, %v2114
    %v2123 = vadd.f32 %v1842, %v2115
    %v2124 = vadd.f32 %v1843, %v2116
    %2125 = vmatprep.subr.mxu0 0.0
    %2126 = vmatpush1.msra.mxu0 %v1860
    %2127 = vmatprep.subr.mxu0 0.0
    %2128 = vmatpush1.msra.mxu0 %v1859
    %2129 = vmatprep.subr.mxu0 0.0
    %2130 = vmatpush1.msra.mxu0 %v1858
    %2131 = vmatprep.subr.mxu0 0.0
    %2132 = vmatpush1.msra.mxu0 %v1857
    %2133 = vmatprep.subr.mxu0 0.0
    %2134 = vmatpush1.msra.mxu0 %v1856
    %2135 = vmatprep.subr.mxu0 0.0
    %2136 = vmatpush1.msra.mxu0 %v1855
    %2137 = vmatprep.subr.mxu0 0.0
    %2138 = vmatpush1.msra.mxu0 %v1854
    %2139 = vmatprep.subr.mxu0 0.0
    %2140 = vmatpush1.msra.mxu0 %v1853
    %2141 = vmatprep.subr.mxu0 0.0
    %2142 = vmatpush1.msra.mxu0 %v1852
    %2143 = vmatprep.subr.mxu0 0.0
    %2144 = vmatpush1.msra.mxu0 %v1851
    %2145 = vmatprep.subr.mxu0 0.0
    %2146 = vmatpush1.msra.mxu0 %v1850
    %2147 = vmatprep.subr.mxu0 0.0
    %2148 = vmatpush1.msra.mxu0 %v1849
    %2149 = vmatprep.subr.mxu0 0.0
    %2150 = vmatpush1.msra.mxu0 %v1848
    %2151 = vmatprep.subr.mxu0 0.0
    %2152 = vmatpush1.msra.mxu0 %v1847
    %2153 = vmatprep.subr.mxu0 0.0
    %2154 = vmatpush1.msra.mxu0 %v1846
    %2155 = vmatprep.subr.mxu0 0.0
    %2156 = vmatpush1.msra.mxu0 %v1845
    %2157 = vmatprep.subr.mxu0 0.0
    %2158 = vmatpush2.msra.mxu0 0.0
    %2159 = vmatprep.subr.mxu0 0.0
    %2160 = vmatpush2.msra.mxu0 0.0
    %2161 = vmatprep.subr.mxu0 0.0
    %2162 = vmatpush2.msra.mxu0 0.0
    %2163 = vmatprep.subr.mxu0 0.0
    %2164 = vmatpush2.msra.mxu0 0.0
    %2165 = vmatprep.subr.mxu0 0.0
    %2166 = vmatpush2.msra.mxu0 0.0
    %2167 = vmatprep.subr.mxu0 0.0
    %2168 = vmatpush2.msra.mxu0 0.0
    %2169 = vmatprep.subr.mxu0 0.0
    %2170 = vmatpush2.msra.mxu0 0.0
    %2171 = vmatprep.subr.mxu0 0.0
    %2172 = vmatpush2.msra.mxu0 0.0
    %2173 = vmatprep.subr.mxu0 0.0
    %2174 = vmatpush2.msra.mxu0 0.0
    %2175 = vmatprep.subr.mxu0 0.0
    %2176 = vmatpush2.msra.mxu0 0.0
    %2177 = vmatprep.subr.mxu0 0.0
    %2178 = vmatpush2.msra.mxu0 0.0
    %2179 = vmatprep.subr.mxu0 0.0
    %2180 = vmatpush2.msra.mxu0 0.0
    %2181 = vmatprep.subr.mxu0 0.0
    %2182 = vmatpush2.msra.mxu0 0.0
    %2183 = vmatprep.subr.mxu0 0.0
    %2184 = vmatpush2.msra.mxu0 0.0
    %2185 = vmatprep.subr.mxu0 0.0
    %2186 = vmatpush2.msra.mxu0 0.0
    %2187 = vmatprep.subr.mxu0 0.0
    %2188 = vmatpush2.msra.mxu0 0.0
    %2189 = vmatprep.mubr.f32.mxu0 0.0
    %2190 = vmatmul.mubr.f32.gmra.mxu0 %v2117
    %v2191 = vpop.f32.mrf.mxu0
    %v2192 = vadd.f32 0.0, %v2191
    %v2193 = vpop.f32.mrf.mxu0
    %2194 = vmatprep.mubr.f32.mxu0 0.0
    %2195 = vmatmul.mubr.f32.gmra.mxu0 %v2118
    %v2196 = vpop.f32.mrf.mxu0
    %v2197 = vadd.f32 0.0, %v2196
    %v2198 = vpop.f32.mrf.mxu0
    %2199 = vmatprep.mubr.f32.mxu0 0.0
    %2200 = vmatmul.mubr.f32.gmra.mxu0 %v2119
    %v2201 = vpop.f32.mrf.mxu0
    %v2202 = vadd.f32 0.0, %v2201
    %v2203 = vpop.f32.mrf.mxu0
    %2204 = vmatprep.mubr.f32.mxu0 0.0
    %2205 = vmatmul.mubr.f32.gmra.mxu0 %v2120
    %v2206 = vpop.f32.mrf.mxu0
    %v2207 = vadd.f32 0.0, %v2206
    %v2208 = vpop.f32.mrf.mxu0
    %2209 = vmatprep.mubr.f32.mxu0 0.0
    %2210 = vmatmul.mubr.f32.gmra.mxu0 %v2121
    %v2211 = vpop.f32.mrf.mxu0
    %v2212 = vadd.f32 0.0, %v2211
    %v2213 = vpop.f32.mrf.mxu0
    %2214 = vmatprep.mubr.f32.mxu0 0.0
    %2215 = vmatmul.mubr.f32.gmra.mxu0 %v2122
    %v2216 = vpop.f32.mrf.mxu0
    %v2217 = vadd.f32 0.0, %v2216
    %v2218 = vpop.f32.mrf.mxu0
    %2219 = vmatprep.mubr.f32.mxu0 0.0
    %2220 = vmatmul.mubr.f32.gmra.mxu0 %v2123
    %v2221 = vpop.f32.mrf.mxu0
    %v2222 = vadd.f32 0.0, %v2221
    %v2223 = vpop.f32.mrf.mxu0
    %2224 = vmatprep.mubr.f32.mxu0 0.0
    %2225 = vmatmul.mubr.f32.gmra.mxu0 %v2124
    %v2226 = vpop.f32.mrf.mxu0
    %v2227 = vadd.f32 0.0, %v2226
    %v2228 = vpop.f32.mrf.mxu0
    %2229 = vdwg.mxu0
    %2230 = vmatprep.subr.mxu0 0.0
    %2231 = vmatpush1.msra.mxu0 0.0
    %2232 = vmatprep.subr.mxu0 0.0
    %2233 = vmatpush1.msra.mxu0 0.0
    %2234 = vmatprep.subr.mxu0 0.0
    %2235 = vmatpush1.msra.mxu0 0.0
    %2236 = vmatprep.subr.mxu0 0.0
    %2237 = vmatpush1.msra.mxu0 0.0
    %2238 = vmatprep.subr.mxu0 0.0
    %2239 = vmatpush1.msra.mxu0 0.0
    %2240 = vmatprep.subr.mxu0 0.0
    %2241 = vmatpush1.msra.mxu0 0.0
    %2242 = vmatprep.subr.mxu0 0.0
    %2243 = vmatpush1.msra.mxu0 0.0
    %2244 = vmatprep.subr.mxu0 0.0
    %2245 = vmatpush1.msra.mxu0 0.0
    %2246 = vmatprep.subr.mxu0 0.0
    %2247 = vmatpush1.msra.mxu0 %v2227
    %2248 = vmatprep.subr.mxu0 0.0
    %2249 = vmatpush1.msra.mxu0 %v2222
    %2250 = vmatprep.subr.mxu0 0.0
    %2251 = vmatpush1.msra.mxu0 %v2217
    %2252 = vmatprep.subr.mxu0 0.0
    %2253 = vmatpush1.msra.mxu0 %v2212
    %2254 = vmatprep.subr.mxu0 0.0
    %2255 = vmatpush1.msra.mxu0 %v2207
    %2256 = vmatprep.subr.mxu0 0.0
    %2257 = vmatpush1.msra.mxu0 %v2202
    %2258 = vmatprep.subr.mxu0 0.0
    %2259 = vmatpush1.msra.mxu0 %v2197
    %2260 = vmatprep.subr.mxu0 0.0
    %2261 = vmatpush1.msra.mxu0 %v2192
    %2262 = vmatprep.subr.mxu0 0.0
    %2263 = vmatpush2.msra.mxu0 0.0
    %2264 = vmatprep.subr.mxu0 0.0
    %2265 = vmatpush2.msra.mxu0 0.0
    %2266 = vmatprep.subr.mxu0 0.0
    %2267 = vmatpush2.msra.mxu0 0.0
    %2268 = vmatprep.subr.mxu0 0.0
    %2269 = vmatpush2.msra.mxu0 0.0
    %2270 = vmatprep.subr.mxu0 0.0
    %2271 = vmatpush2.msra.mxu0 0.0
    %2272 = vmatprep.subr.mxu0 0.0
    %2273 = vmatpush2.msra.mxu0 0.0
    %2274 = vmatprep.subr.mxu0 0.0
    %2275 = vmatpush2.msra.mxu0 0.0
    %2276 = vmatprep.subr.mxu0 0.0
    %2277 = vmatpush2.msra.mxu0 0.0
    %2278 = vmatprep.subr.mxu0 0.0
    %2279 = vmatpush2.msra.mxu0 0.0
    %2280 = vmatprep.subr.mxu0 0.0
    %2281 = vmatpush2.msra.mxu0 0.0
    %2282 = vmatprep.subr.mxu0 0.0
    %2283 = vmatpush2.msra.mxu0 0.0
    %2284 = vmatprep.subr.mxu0 0.0
    %2285 = vmatpush2.msra.mxu0 0.0
    %2286 = vmatprep.subr.mxu0 0.0
    %2287 = vmatpush2.msra.mxu0 0.0
    %2288 = vmatprep.subr.mxu0 0.0
    %2289 = vmatpush2.msra.mxu0 0.0
    %2290 = vmatprep.subr.mxu0 0.0
    %2291 = vmatpush2.msra.mxu0 0.0
    %2292 = vmatprep.subr.mxu0 0.0
    %2293 = vmatpush2.msra.mxu0 0.0
    %2294 = vmatprep.mubr.f32.mxu0 0.0
    %2295 = vmatmul.mubr.f32.gmra.mxu0 %v241
    %v2296 = vpop.f32.mrf.mxu0
    %v2297 = vadd.f32 %v1971, %v2296
    %v2298 = vpop.f32.mrf.mxu0
    %2299 = vmatprep.mubr.f32.mxu0 0.0
    %2300 = vmatmul.mubr.f32.gmra.mxu0 %v244
    %v2301 = vpop.f32.mrf.mxu0
    %v2302 = vadd.f32 %v1971, %v2301
    %v2303 = vpop.f32.mrf.mxu0
    %2304 = vmatprep.mubr.f32.mxu0 0.0
    %2305 = vmatmul.mubr.f32.gmra.mxu0 %v247
    %v2306 = vpop.f32.mrf.mxu0
    %v2307 = vadd.f32 %v1971, %v2306
    %v2308 = vpop.f32.mrf.mxu0
    %2309 = vmatprep.mubr.f32.mxu0 0.0
    %2310 = vmatmul.mubr.f32.gmra.mxu0 %v250
    %v2311 = vpop.f32.mrf.mxu0
    %v2312 = vadd.f32 %v1971, %v2311
    %v2313 = vpop.f32.mrf.mxu0
    %2314 = vmatprep.mubr.f32.mxu0 0.0
    %2315 = vmatmul.mubr.f32.gmra.mxu0 %v253
    %v2316 = vpop.f32.mrf.mxu0
    %v2317 = vadd.f32 %v1971, %v2316
    %v2318 = vpop.f32.mrf.mxu0
    %2319 = vmatprep.mubr.f32.mxu0 0.0
    %2320 = vmatmul.mubr.f32.gmra.mxu0 %v256
    %v2321 = vpop.f32.mrf.mxu0
    %v2322 = vadd.f32 %v1971, %v2321
    %v2323 = vpop.f32.mrf.mxu0
    %2324 = vmatprep.mubr.f32.mxu0 0.0
    %2325 = vmatmul.mubr.f32.gmra.mxu0 %v259
    %v2326 = vpop.f32.mrf.mxu0
    %v2327 = vadd.f32 %v1971, %v2326
    %v2328 = vpop.f32.mrf.mxu0
    %2329 = vmatprep.mubr.f32.mxu0 0.0
    %2330 = vmatmul.mubr.f32.gmra.mxu0 %v262
    %v2331 = vpop.f32.mrf.mxu0
    %v2332 = vadd.f32 %v1971, %v2331
    %v2333 = vpop.f32.mrf.mxu0
    %2334 = vdwg.mxu0
    %v2335 = vadd.f32 %v2297, %v2302
    %v2336 = vadd.f32 %v2335, %v2307
    %v2337 = vadd.f32 %v2336, %v2312
    %v2338 = vadd.f32 %v2337, %v2317
    %v2339 = vadd.f32 %v2338, %v2322
    %v2340 = vadd.f32 %v2339, %v2327
    %v2341 = vadd.f32 %v2340, %v2332
    %v2342 = vrot.slane %v2341, 4
    %v2343 = vadd.f32 %v2341, %v2342
    %v2344 = vrot.slane %v2343, 2
    %v2345 = vadd.f32 %v2343, %v2344
    %v2346 = vrot.slane %v2345, 1
    %v2347 = vadd.f32 %v2345, %v2346
    %v2348 = vmul.f32 %v2347, %v640
    %v2349 = vsub.f32 %v2297, %v2348
    %v2350 = vsub.f32 %v2302, %v2348
    %v2351 = vsub.f32 %v2307, %v2348
    %v2352 = vsub.f32 %v2312, %v2348
    %v2353 = vsub.f32 %v2317, %v2348
    %v2354 = vsub.f32 %v2322, %v2348
    %v2355 = vsub.f32 %v2327, %v2348
    %v2356 = vsub.f32 %v2332, %v2348
    %v2357 = vmul.f32 %v2349, %v2349
    %v2358 = vmul.f32 %v2350, %v2350
    %v2359 = vmul.f32 %v2351, %v2351
    %v2360 = vmul.f32 %v2352, %v2352
    %v2361 = vmul.f32 %v2353, %v2353
    %v2362 = vmul.f32 %v2354, %v2354
    %v2363 = vmul.f32 %v2355, %v2355
    %v2364 = vmul.f32 %v2356, %v2356
    %v2365 = vadd.f32 %v2357, %v2358
    %v2366 = vadd.f32 %v2365, %v2359
    %v2367 = vadd.f32 %v2366, %v2360
    %v2368 = vadd.f32 %v2367, %v2361
    %v2369 = vadd.f32 %v2368, %v2362
    %v2370 = vadd.f32 %v2369, %v2363
    %v2371 = vadd.f32 %v2370, %v2364
    %v2372 = vrot.slane %v2371, 4
    %v2373 = vadd.f32 %v2371, %v2372
    %v2374 = vrot.slane %v2373, 2
    %v2375 = vadd.f32 %v2373, %v2374
    %v2376 = vrot.slane %v2375, 1
    %v2377 = vadd.f32 %v2375, %v2376
    %v2378 = vmul.f32 %v2377, %v640
    %v2379 = vadd.f32 %v2378, 1e-05
    %v2380 = vrsqrt.pop %v2379
    %v2381 = vmul.f32 %v2349, %v2380
    %v2382 = vmul.f32 %v2350, %v2380
    %v2383 = vmul.f32 %v2351, %v2380
    %v2384 = vmul.f32 %v2352, %v2380
    %v2385 = vmul.f32 %v2353, %v2380
    %v2386 = vmul.f32 %v2354, %v2380
    %v2387 = vmul.f32 %v2355, %v2380
    %v2388 = vmul.f32 %v2356, %v2380
    %v2389 = vlaneseq
    %v2390 = vshrl.u32 %v2389, 7
    %v2391 = vsub.s32 1, %v2390
    %v2392 = vrot.slane %v1862, %v2391
    %v2393 = vmul.f32 %v2381, %v2392
    %v2394 = vmul.f32 %v2382, %v2392
    %v2395 = vmul.f32 %v2383, %v2392
    %v2396 = vmul.f32 %v2384, %v2392
    %v2397 = vmul.f32 %v2385, %v2392
    %v2398 = vmul.f32 %v2386, %v2392
    %v2399 = vmul.f32 %v2387, %v2392
    %v2400 = vmul.f32 %v2388, %v2392
    %v2401 = vlaneseq
    %v2402 = vshrl.u32 %v2401, 7
    %v2403 = vsub.s32 2, %v2402
    %v2404 = vrot.slane %v1862, %v2403
    %v2405 = vadd.f32 %v2393, %v2404
    %v2406 = vadd.f32 %v2394, %v2404
    %v2407 = vadd.f32 %v2395, %v2404
    %v2408 = vadd.f32 %v2396, %v2404
    %v2409 = vadd.f32 %v2397, %v2404
    %v2410 = vadd.f32 %v2398, %v2404
    %v2411 = vadd.f32 %v2399, %v2404
    %v2412 = vadd.f32 %v2400, %v2404
    %s2413 = scalar_lea.vmem [#allocation8], 512
    %v2414 = vld [vmem:[%s2413] sm:$0xff]
    %v2415 = vld [vmem:[%s2413 + $0x8] sm:$0xff]
    %v2416 = vld [vmem:[%s2413 + $0x10] sm:$0xff]
    %v2417 = vld [vmem:[%s2413 + $0x18] sm:$0xff]
    %v2418 = vld [vmem:[%s2413 + $0x20] sm:$0xff]
    %v2419 = vld [vmem:[%s2413 + $0x28] sm:$0xff]
    %v2420 = vld [vmem:[%s2413 + $0x30] sm:$0xff]
    %v2421 = vld [vmem:[%s2413 + $0x38] sm:$0xff]
    %v2422 = vld [vmem:[%s2413 + $0x40] sm:$0xff]
    %v2423 = vld [vmem:[%s2413 + $0x48] sm:$0xff]
    %v2424 = vld [vmem:[%s2413 + $0x50] sm:$0xff]
    %v2425 = vld [vmem:[%s2413 + $0x58] sm:$0xff]
    %v2426 = vld [vmem:[%s2413 + $0x60] sm:$0xff]
    %v2427 = vld [vmem:[%s2413 + $0x68] sm:$0xff]
    %v2428 = vld [vmem:[%s2413 + $0x70] sm:$0xff]
    %v2429 = vld [vmem:[%s2413 + $0x78] sm:$0xff]
    %s2430 = scalar_lea.vmem [#allocation10], 16
    %v2431 = vld [vmem:[%s2430] sm:$0x7]
    %2432 = vmatprep.subr.mxu0 0.0
    %2433 = vmatpush1.msra.mxu0 %v2429
    %2434 = vmatprep.subr.mxu0 0.0
    %2435 = vmatpush1.msra.mxu0 %v2428
    %2436 = vmatprep.subr.mxu0 0.0
    %2437 = vmatpush1.msra.mxu0 %v2427
    %2438 = vmatprep.subr.mxu0 0.0
    %2439 = vmatpush1.msra.mxu0 %v2426
    %2440 = vmatprep.subr.mxu0 0.0
    %2441 = vmatpush1.msra.mxu0 %v2425
    %2442 = vmatprep.subr.mxu0 0.0
    %2443 = vmatpush1.msra.mxu0 %v2424
    %2444 = vmatprep.subr.mxu0 0.0
    %2445 = vmatpush1.msra.mxu0 %v2423
    %2446 = vmatprep.subr.mxu0 0.0
    %2447 = vmatpush1.msra.mxu0 %v2422
    %2448 = vmatprep.subr.mxu0 0.0
    %2449 = vmatpush1.msra.mxu0 %v2421
    %2450 = vmatprep.subr.mxu0 0.0
    %2451 = vmatpush1.msra.mxu0 %v2420
    %2452 = vmatprep.subr.mxu0 0.0
    %2453 = vmatpush1.msra.mxu0 %v2419
    %2454 = vmatprep.subr.mxu0 0.0
    %2455 = vmatpush1.msra.mxu0 %v2418
    %2456 = vmatprep.subr.mxu0 0.0
    %2457 = vmatpush1.msra.mxu0 %v2417
    %2458 = vmatprep.subr.mxu0 0.0
    %2459 = vmatpush1.msra.mxu0 %v2416
    %2460 = vmatprep.subr.mxu0 0.0
    %2461 = vmatpush1.msra.mxu0 %v2415
    %2462 = vmatprep.subr.mxu0 0.0
    %2463 = vmatpush1.msra.mxu0 %v2414
    %2464 = vmatprep.subr.mxu0 0.0
    %2465 = vmatpush2.msra.mxu0 0.0
    %2466 = vmatprep.subr.mxu0 0.0
    %2467 = vmatpush2.msra.mxu0 0.0
    %2468 = vmatprep.subr.mxu0 0.0
    %2469 = vmatpush2.msra.mxu0 0.0
    %2470 = vmatprep.subr.mxu0 0.0
    %2471 = vmatpush2.msra.mxu0 0.0
    %2472 = vmatprep.subr.mxu0 0.0
    %2473 = vmatpush2.msra.mxu0 0.0
    %2474 = vmatprep.subr.mxu0 0.0
    %2475 = vmatpush2.msra.mxu0 0.0
    %2476 = vmatprep.subr.mxu0 0.0
    %2477 = vmatpush2.msra.mxu0 0.0
    %2478 = vmatprep.subr.mxu0 0.0
    %2479 = vmatpush2.msra.mxu0 0.0
    %2480 = vmatprep.subr.mxu0 0.0
    %2481 = vmatpush2.msra.mxu0 0.0
    %2482 = vmatprep.subr.mxu0 0.0
    %2483 = vmatpush2.msra.mxu0 0.0
    %2484 = vmatprep.subr.mxu0 0.0
    %2485 = vmatpush2.msra.mxu0 0.0
    %2486 = vmatprep.subr.mxu0 0.0
    %2487 = vmatpush2.msra.mxu0 0.0
    %2488 = vmatprep.subr.mxu0 0.0
    %2489 = vmatpush2.msra.mxu0 0.0
    %2490 = vmatprep.subr.mxu0 0.0
    %2491 = vmatpush2.msra.mxu0 0.0
    %2492 = vmatprep.subr.mxu0 0.0
    %2493 = vmatpush2.msra.mxu0 0.0
    %2494 = vmatprep.subr.mxu0 0.0
    %2495 = vmatpush2.msra.mxu0 0.0
    %2496 = vmatprep.mubr.f32.mxu0 0.0
    %2497 = vmatmul.mubr.f32.gmra.mxu0 %v2405
    %v2498 = vpop.f32.mrf.mxu0
    %v2499 = vadd.f32 0.0, %v2498
    %v2500 = vpop.f32.mrf.mxu0
    %2501 = vmatprep.mubr.f32.mxu0 0.0
    %2502 = vmatmul.mubr.f32.gmra.mxu0 %v2406
    %v2503 = vpop.f32.mrf.mxu0
    %v2504 = vadd.f32 0.0, %v2503
    %v2505 = vpop.f32.mrf.mxu0
    %2506 = vmatprep.mubr.f32.mxu0 0.0
    %2507 = vmatmul.mubr.f32.gmra.mxu0 %v2407
    %v2508 = vpop.f32.mrf.mxu0
    %v2509 = vadd.f32 0.0, %v2508
    %v2510 = vpop.f32.mrf.mxu0
    %2511 = vmatprep.mubr.f32.mxu0 0.0
    %2512 = vmatmul.mubr.f32.gmra.mxu0 %v2408
    %v2513 = vpop.f32.mrf.mxu0
    %v2514 = vadd.f32 0.0, %v2513
    %v2515 = vpop.f32.mrf.mxu0
    %2516 = vmatprep.mubr.f32.mxu0 0.0
    %2517 = vmatmul.mubr.f32.gmra.mxu0 %v2409
    %v2518 = vpop.f32.mrf.mxu0
    %v2519 = vadd.f32 0.0, %v2518
    %v2520 = vpop.f32.mrf.mxu0
    %2521 = vmatprep.mubr.f32.mxu0 0.0
    %2522 = vmatmul.mubr.f32.gmra.mxu0 %v2410
    %v2523 = vpop.f32.mrf.mxu0
    %v2524 = vadd.f32 0.0, %v2523
    %v2525 = vpop.f32.mrf.mxu0
    %2526 = vmatprep.mubr.f32.mxu0 0.0
    %2527 = vmatmul.mubr.f32.gmra.mxu0 %v2411
    %v2528 = vpop.f32.mrf.mxu0
    %v2529 = vadd.f32 0.0, %v2528
    %v2530 = vpop.f32.mrf.mxu0
    %2531 = vmatprep.mubr.f32.mxu0 0.0
    %2532 = vmatmul.mubr.f32.gmra.mxu0 %v2412
    %v2533 = vpop.f32.mrf.mxu0
    %v2534 = vadd.f32 0.0, %v2533
    %v2535 = vpop.f32.mrf.mxu0
    %2536 = vdwg.mxu0
    %v2537 = vlaneseq
    %v2538 = vshrl.u32 %v2537, 7
    %v2539 = vsub.s32 0, %v2538
    %v2540 = vrot.slane %v2431, %v2539
    %2541 = vmatprep.subr.mxu0 0.0
    %2542 = vmatpush1.msra.mxu0 0.0
    %2543 = vmatprep.subr.mxu0 0.0
    %2544 = vmatpush1.msra.mxu0 0.0
    %2545 = vmatprep.subr.mxu0 0.0
    %2546 = vmatpush1.msra.mxu0 0.0
    %2547 = vmatprep.subr.mxu0 0.0
    %2548 = vmatpush1.msra.mxu0 0.0
    %2549 = vmatprep.subr.mxu0 0.0
    %2550 = vmatpush1.msra.mxu0 0.0
    %2551 = vmatprep.subr.mxu0 0.0
    %2552 = vmatpush1.msra.mxu0 0.0
    %2553 = vmatprep.subr.mxu0 0.0
    %2554 = vmatpush1.msra.mxu0 0.0
    %2555 = vmatprep.subr.mxu0 0.0
    %2556 = vmatpush1.msra.mxu0 0.0
    %2557 = vmatprep.subr.mxu0 0.0
    %2558 = vmatpush1.msra.mxu0 %v2534
    %2559 = vmatprep.subr.mxu0 0.0
    %2560 = vmatpush1.msra.mxu0 %v2529
    %2561 = vmatprep.subr.mxu0 0.0
    %2562 = vmatpush1.msra.mxu0 %v2524
    %2563 = vmatprep.subr.mxu0 0.0
    %2564 = vmatpush1.msra.mxu0 %v2519
    %2565 = vmatprep.subr.mxu0 0.0
    %2566 = vmatpush1.msra.mxu0 %v2514
    %2567 = vmatprep.subr.mxu0 0.0
    %2568 = vmatpush1.msra.mxu0 %v2509
    %2569 = vmatprep.subr.mxu0 0.0
    %2570 = vmatpush1.msra.mxu0 %v2504
    %2571 = vmatprep.subr.mxu0 0.0
    %2572 = vmatpush1.msra.mxu0 %v2499
    %2573 = vmatprep.subr.mxu0 0.0
    %2574 = vmatpush2.msra.mxu0 0.0
    %2575 = vmatprep.subr.mxu0 0.0
    %2576 = vmatpush2.msra.mxu0 0.0
    %2577 = vmatprep.subr.mxu0 0.0
    %2578 = vmatpush2.msra.mxu0 0.0
    %2579 = vmatprep.subr.mxu0 0.0
    %2580 = vmatpush2.msra.mxu0 0.0
    %2581 = vmatprep.subr.mxu0 0.0
    %2582 = vmatpush2.msra.mxu0 0.0
    %2583 = vmatprep.subr.mxu0 0.0
    %2584 = vmatpush2.msra.mxu0 0.0
    %2585 = vmatprep.subr.mxu0 0.0
    %2586 = vmatpush2.msra.mxu0 0.0
    %2587 = vmatprep.subr.mxu0 0.0
    %2588 = vmatpush2.msra.mxu0 0.0
    %2589 = vmatprep.subr.mxu0 0.0
    %2590 = vmatpush2.msra.mxu0 0.0
    %2591 = vmatprep.subr.mxu0 0.0
    %2592 = vmatpush2.msra.mxu0 0.0
    %2593 = vmatprep.subr.mxu0 0.0
    %2594 = vmatpush2.msra.mxu0 0.0
    %2595 = vmatprep.subr.mxu0 0.0
    %2596 = vmatpush2.msra.mxu0 0.0
    %2597 = vmatprep.subr.mxu0 0.0
    %2598 = vmatpush2.msra.mxu0 0.0
    %2599 = vmatprep.subr.mxu0 0.0
    %2600 = vmatpush2.msra.mxu0 0.0
    %2601 = vmatprep.subr.mxu0 0.0
    %2602 = vmatpush2.msra.mxu0 0.0
    %2603 = vmatprep.subr.mxu0 0.0
    %2604 = vmatpush2.msra.mxu0 0.0
    %2605 = vmatprep.mubr.f32.mxu0 0.0
    %2606 = vmatmul.mubr.f32.gmra.mxu0 %v241
    %v2607 = vpop.f32.mrf.mxu0
    %v2608 = vadd.f32 %v2540, %v2607
    %v2609 = vpop.f32.mrf.mxu0
    %2610 = vmatprep.mubr.f32.mxu0 0.0
    %2611 = vmatmul.mubr.f32.gmra.mxu0 %v244
    %v2612 = vpop.f32.mrf.mxu0
    %v2613 = vadd.f32 %v2540, %v2612
    %v2614 = vpop.f32.mrf.mxu0
    %2615 = vmatprep.mubr.f32.mxu0 0.0
    %2616 = vmatmul.mubr.f32.gmra.mxu0 %v247
    %v2617 = vpop.f32.mrf.mxu0
    %v2618 = vadd.f32 %v2540, %v2617
    %v2619 = vpop.f32.mrf.mxu0
    %2620 = vmatprep.mubr.f32.mxu0 0.0
    %2621 = vmatmul.mubr.f32.gmra.mxu0 %v250
    %v2622 = vpop.f32.mrf.mxu0
    %v2623 = vadd.f32 %v2540, %v2622
    %v2624 = vpop.f32.mrf.mxu0
    %2625 = vmatprep.mubr.f32.mxu0 0.0
    %2626 = vmatmul.mubr.f32.gmra.mxu0 %v253
    %v2627 = vpop.f32.mrf.mxu0
    %v2628 = vadd.f32 %v2540, %v2627
    %v2629 = vpop.f32.mrf.mxu0
    %2630 = vmatprep.mubr.f32.mxu0 0.0
    %2631 = vmatmul.mubr.f32.gmra.mxu0 %v256
    %v2632 = vpop.f32.mrf.mxu0
    %v2633 = vadd.f32 %v2540, %v2632
    %v2634 = vpop.f32.mrf.mxu0
    %2635 = vmatprep.mubr.f32.mxu0 0.0
    %2636 = vmatmul.mubr.f32.gmra.mxu0 %v259
    %v2637 = vpop.f32.mrf.mxu0
    %v2638 = vadd.f32 %v2540, %v2637
    %v2639 = vpop.f32.mrf.mxu0
    %2640 = vmatprep.mubr.f32.mxu0 0.0
    %2641 = vmatmul.mubr.f32.gmra.mxu0 %v262
    %v2642 = vpop.f32.mrf.mxu0
    %v2643 = vadd.f32 %v2540, %v2642
    %v2644 = vpop.f32.mrf.mxu0
    %2645 = vdwg.mxu0
    %v2646 = vmax.f32 %v2608, 0.0
    %v2647 = vmax.f32 %v2613, 0.0
    %v2648 = vmax.f32 %v2618, 0.0
    %v2649 = vmax.f32 %v2623, 0.0
    %v2650 = vmax.f32 %v2628, 0.0
    %v2651 = vmax.f32 %v2633, 0.0
    %v2652 = vmax.f32 %v2638, 0.0
    %v2653 = vmax.f32 %v2643, 0.0
    %v2654 = vmul.f32 %v2109, 0.2
    %v2655 = vmul.f32 %v2110, 0.2
    %v2656 = vmul.f32 %v2111, 0.2
    %v2657 = vmul.f32 %v2112, 0.2
    %v2658 = vmul.f32 %v2113, 0.2
    %v2659 = vmul.f32 %v2114, 0.2
    %v2660 = vmul.f32 %v2115, 0.2
    %v2661 = vmul.f32 %v2116, 0.2
    %v2662 = vsub.f32 %v2646, %v2654
    %v2663 = vsub.f32 %v2647, %v2655
    %v2664 = vsub.f32 %v2648, %v2656
    %v2665 = vsub.f32 %v2649, %v2657
    %v2666 = vsub.f32 %v2650, %v2658
    %v2667 = vsub.f32 %v2651, %v2659
    %v2668 = vsub.f32 %v2652, %v2660
    %v2669 = vsub.f32 %v2653, %v2661
    %v2670 = vsub.f32 %v2662, %v2405
    %v2671 = vsub.f32 %v2663, %v2406
    %v2672 = vsub.f32 %v2664, %v2407
    %v2673 = vsub.f32 %v2665, %v2408
    %v2674 = vsub.f32 %v2666, %v2409
    %v2675 = vsub.f32 %v2667, %v2410
    %v2676 = vsub.f32 %v2668, %v2411
    %v2677 = vsub.f32 %v2669, %v2412
    %v2678 = vadd.f32 %v2109, %v2670
    %v2679 = vadd.f32 %v2110, %v2671
    %v2680 = vadd.f32 %v2111, %v2672
    %v2681 = vadd.f32 %v2112, %v2673
    %v2682 = vadd.f32 %v2113, %v2674
    %v2683 = vadd.f32 %v2114, %v2675
    %v2684 = vadd.f32 %v2115, %v2676
    %v2685 = vadd.f32 %v2116, %v2677
    %v2686 = vadd.f32 %v2405, %v2678
    %v2687 = vadd.f32 %v2406, %v2679
    %v2688 = vadd.f32 %v2407, %v2680
    %v2689 = vadd.f32 %v2408, %v2681
    %v2690 = vadd.f32 %v2409, %v2682
    %v2691 = vadd.f32 %v2410, %v2683
    %v2692 = vadd.f32 %v2411, %v2684
    %v2693 = vadd.f32 %v2412, %v2685
    %2694 = vmatprep.subr.mxu0 0.0
    %2695 = vmatpush1.msra.mxu0 %v2429
    %2696 = vmatprep.subr.mxu0 0.0
    %2697 = vmatpush1.msra.mxu0 %v2428
    %2698 = vmatprep.subr.mxu0 0.0
    %2699 = vmatpush1.msra.mxu0 %v2427
    %2700 = vmatprep.subr.mxu0 0.0
    %2701 = vmatpush1.msra.mxu0 %v2426
    %2702 = vmatprep.subr.mxu0 0.0
    %2703 = vmatpush1.msra.mxu0 %v2425
    %2704 = vmatprep.subr.mxu0 0.0
    %2705 = vmatpush1.msra.mxu0 %v2424
    %2706 = vmatprep.subr.mxu0 0.0
    %2707 = vmatpush1.msra.mxu0 %v2423
    %2708 = vmatprep.subr.mxu0 0.0
    %2709 = vmatpush1.msra.mxu0 %v2422
    %2710 = vmatprep.subr.mxu0 0.0
    %2711 = vmatpush1.msra.mxu0 %v2421
    %2712 = vmatprep.subr.mxu0 0.0
    %2713 = vmatpush1.msra.mxu0 %v2420
    %2714 = vmatprep.subr.mxu0 0.0
    %2715 = vmatpush1.msra.mxu0 %v2419
    %2716 = vmatprep.subr.mxu0 0.0
    %2717 = vmatpush1.msra.mxu0 %v2418
    %2718 = vmatprep.subr.mxu0 0.0
    %2719 = vmatpush1.msra.mxu0 %v2417
    %2720 = vmatprep.subr.mxu0 0.0
    %2721 = vmatpush1.msra.mxu0 %v2416
    %2722 = vmatprep.subr.mxu0 0.0
    %2723 = vmatpush1.msra.mxu0 %v2415
    %2724 = vmatprep.subr.mxu0 0.0
    %2725 = vmatpush1.msra.mxu0 %v2414
    %2726 = vmatprep.subr.mxu0 0.0
    %2727 = vmatpush2.msra.mxu0 0.0
    %2728 = vmatprep.subr.mxu0 0.0
    %2729 = vmatpush2.msra.mxu0 0.0
    %2730 = vmatprep.subr.mxu0 0.0
    %2731 = vmatpush2.msra.mxu0 0.0
    %2732 = vmatprep.subr.mxu0 0.0
    %2733 = vmatpush2.msra.mxu0 0.0
    %2734 = vmatprep.subr.mxu0 0.0
    %2735 = vmatpush2.msra.mxu0 0.0
    %2736 = vmatprep.subr.mxu0 0.0
    %2737 = vmatpush2.msra.mxu0 0.0
    %2738 = vmatprep.subr.mxu0 0.0
    %2739 = vmatpush2.msra.mxu0 0.0
    %2740 = vmatprep.subr.mxu0 0.0
    %2741 = vmatpush2.msra.mxu0 0.0
    %2742 = vmatprep.subr.mxu0 0.0
    %2743 = vmatpush2.msra.mxu0 0.0
    %2744 = vmatprep.subr.mxu0 0.0
    %2745 = vmatpush2.msra.mxu0 0.0
    %2746 = vmatprep.subr.mxu0 0.0
    %2747 = vmatpush2.msra.mxu0 0.0
    %2748 = vmatprep.subr.mxu0 0.0
    %2749 = vmatpush2.msra.mxu0 0.0
    %2750 = vmatprep.subr.mxu0 0.0
    %2751 = vmatpush2.msra.mxu0 0.0
    %2752 = vmatprep.subr.mxu0 0.0
    %2753 = vmatpush2.msra.mxu0 0.0
    %2754 = vmatprep.subr.mxu0 0.0
    %2755 = vmatpush2.msra.mxu0 0.0
    %2756 = vmatprep.subr.mxu0 0.0
    %2757 = vmatpush2.msra.mxu0 0.0
    %2758 = vmatprep.mubr.f32.mxu0 0.0
    %2759 = vmatmul.mubr.f32.gmra.mxu0 %v2686
    %v2760 = vpop.f32.mrf.mxu0
    %v2761 = vadd.f32 0.0, %v2760
    %v2762 = vpop.f32.mrf.mxu0
    %2763 = vmatprep.mubr.f32.mxu0 0.0
    %2764 = vmatmul.mubr.f32.gmra.mxu0 %v2687
    %v2765 = vpop.f32.mrf.mxu0
    %v2766 = vadd.f32 0.0, %v2765
    %v2767 = vpop.f32.mrf.mxu0
    %2768 = vmatprep.mubr.f32.mxu0 0.0
    %2769 = vmatmul.mubr.f32.gmra.mxu0 %v2688
    %v2770 = vpop.f32.mrf.mxu0
    %v2771 = vadd.f32 0.0, %v2770
    %v2772 = vpop.f32.mrf.mxu0
    %2773 = vmatprep.mubr.f32.mxu0 0.0
    %2774 = vmatmul.mubr.f32.gmra.mxu0 %v2689
    %v2775 = vpop.f32.mrf.mxu0
    %v2776 = vadd.f32 0.0, %v2775
    %v2777 = vpop.f32.mrf.mxu0
    %2778 = vmatprep.mubr.f32.mxu0 0.0
    %2779 = vmatmul.mubr.f32.gmra.mxu0 %v2690
    %v2780 = vpop.f32.mrf.mxu0
    %v2781 = vadd.f32 0.0, %v2780
    %v2782 = vpop.f32.mrf.mxu0
    %2783 = vmatprep.mubr.f32.mxu0 0.0
    %2784 = vmatmul.mubr.f32.gmra.mxu0 %v2691
    %v2785 = vpop.f32.mrf.mxu0
    %v2786 = vadd.f32 0.0, %v2785
    %v2787 = vpop.f32.mrf.mxu0
    %2788 = vmatprep.mubr.f32.mxu0 0.0
    %2789 = vmatmul.mubr.f32.gmra.mxu0 %v2692
    %v2790 = vpop.f32.mrf.mxu0
    %v2791 = vadd.f32 0.0, %v2790
    %v2792 = vpop.f32.mrf.mxu0
    %2793 = vmatprep.mubr.f32.mxu0 0.0
    %2794 = vmatmul.mubr.f32.gmra.mxu0 %v2693
    %v2795 = vpop.f32.mrf.mxu0
    %v2796 = vadd.f32 0.0, %v2795
    %v2797 = vpop.f32.mrf.mxu0
    %2798 = vdwg.mxu0
    %2799 = vmatprep.subr.mxu0 0.0
    %2800 = vmatpush1.msra.mxu0 0.0
    %2801 = vmatprep.subr.mxu0 0.0
    %2802 = vmatpush1.msra.mxu0 0.0
    %2803 = vmatprep.subr.mxu0 0.0
    %2804 = vmatpush1.msra.mxu0 0.0
    %2805 = vmatprep.subr.mxu0 0.0
    %2806 = vmatpush1.msra.mxu0 0.0
    %2807 = vmatprep.subr.mxu0 0.0
    %2808 = vmatpush1.msra.mxu0 0.0
    %2809 = vmatprep.subr.mxu0 0.0
    %2810 = vmatpush1.msra.mxu0 0.0
    %2811 = vmatprep.subr.mxu0 0.0
    %2812 = vmatpush1.msra.mxu0 0.0
    %2813 = vmatprep.subr.mxu0 0.0
    %2814 = vmatpush1.msra.mxu0 0.0
    %2815 = vmatprep.subr.mxu0 0.0
    %2816 = vmatpush1.msra.mxu0 %v2796
    %2817 = vmatprep.subr.mxu0 0.0
    %2818 = vmatpush1.msra.mxu0 %v2791
    %2819 = vmatprep.subr.mxu0 0.0
    %2820 = vmatpush1.msra.mxu0 %v2786
    %2821 = vmatprep.subr.mxu0 0.0
    %2822 = vmatpush1.msra.mxu0 %v2781
    %2823 = vmatprep.subr.mxu0 0.0
    %2824 = vmatpush1.msra.mxu0 %v2776
    %2825 = vmatprep.subr.mxu0 0.0
    %2826 = vmatpush1.msra.mxu0 %v2771
    %2827 = vmatprep.subr.mxu0 0.0
    %2828 = vmatpush1.msra.mxu0 %v2766
    %2829 = vmatprep.subr.mxu0 0.0
    %2830 = vmatpush1.msra.mxu0 %v2761
    %2831 = vmatprep.subr.mxu0 0.0
    %2832 = vmatpush2.msra.mxu0 0.0
    %2833 = vmatprep.subr.mxu0 0.0
    %2834 = vmatpush2.msra.mxu0 0.0
    %2835 = vmatprep.subr.mxu0 0.0
    %2836 = vmatpush2.msra.mxu0 0.0
    %2837 = vmatprep.subr.mxu0 0.0
    %2838 = vmatpush2.msra.mxu0 0.0
    %2839 = vmatprep.subr.mxu0 0.0
    %2840 = vmatpush2.msra.mxu0 0.0
    %2841 = vmatprep.subr.mxu0 0.0
    %2842 = vmatpush2.msra.mxu0 0.0
    %2843 = vmatprep.subr.mxu0 0.0
    %2844 = vmatpush2.msra.mxu0 0.0
    %2845 = vmatprep.subr.mxu0 0.0
    %2846 = vmatpush2.msra.mxu0 0.0
    %2847 = vmatprep.subr.mxu0 0.0
    %2848 = vmatpush2.msra.mxu0 0.0
    %2849 = vmatprep.subr.mxu0 0.0
    %2850 = vmatpush2.msra.mxu0 0.0
    %2851 = vmatprep.subr.mxu0 0.0
    %2852 = vmatpush2.msra.mxu0 0.0
    %2853 = vmatprep.subr.mxu0 0.0
    %2854 = vmatpush2.msra.mxu0 0.0
    %2855 = vmatprep.subr.mxu0 0.0
    %2856 = vmatpush2.msra.mxu0 0.0
    %2857 = vmatprep.subr.mxu0 0.0
    %2858 = vmatpush2.msra.mxu0 0.0
    %2859 = vmatprep.subr.mxu0 0.0
    %2860 = vmatpush2.msra.mxu0 0.0
    %2861 = vmatprep.subr.mxu0 0.0
    %2862 = vmatpush2.msra.mxu0 0.0
    %2863 = vmatprep.mubr.f32.mxu0 0.0
    %2864 = vmatmul.mubr.f32.gmra.mxu0 %v241
    %v2865 = vpop.f32.mrf.mxu0
    %v2866 = vadd.f32 %v2540, %v2865
    %v2867 = vpop.f32.mrf.mxu0
    %2868 = vmatprep.mubr.f32.mxu0 0.0
    %2869 = vmatmul.mubr.f32.gmra.mxu0 %v244
    %v2870 = vpop.f32.mrf.mxu0
    %v2871 = vadd.f32 %v2540, %v2870
    %v2872 = vpop.f32.mrf.mxu0
    %2873 = vmatprep.mubr.f32.mxu0 0.0
    %2874 = vmatmul.mubr.f32.gmra.mxu0 %v247
    %v2875 = vpop.f32.mrf.mxu0
    %v2876 = vadd.f32 %v2540, %v2875
    %v2877 = vpop.f32.mrf.mxu0
    %2878 = vmatprep.mubr.f32.mxu0 0.0
    %2879 = vmatmul.mubr.f32.gmra.mxu0 %v250
    %v2880 = vpop.f32.mrf.mxu0
    %v2881 = vadd.f32 %v2540, %v2880
    %v2882 = vpop.f32.mrf.mxu0
    %2883 = vmatprep.mubr.f32.mxu0 0.0
    %2884 = vmatmul.mubr.f32.gmra.mxu0 %v253
    %v2885 = vpop.f32.mrf.mxu0
    %v2886 = vadd.f32 %v2540, %v2885
    %v2887 = vpop.f32.mrf.mxu0
    %2888 = vmatprep.mubr.f32.mxu0 0.0
    %2889 = vmatmul.mubr.f32.gmra.mxu0 %v256
    %v2890 = vpop.f32.mrf.mxu0
    %v2891 = vadd.f32 %v2540, %v2890
    %v2892 = vpop.f32.mrf.mxu0
    %2893 = vmatprep.mubr.f32.mxu0 0.0
    %2894 = vmatmul.mubr.f32.gmra.mxu0 %v259
    %v2895 = vpop.f32.mrf.mxu0
    %v2896 = vadd.f32 %v2540, %v2895
    %v2897 = vpop.f32.mrf.mxu0
    %2898 = vmatprep.mubr.f32.mxu0 0.0
    %2899 = vmatmul.mubr.f32.gmra.mxu0 %v262
    %v2900 = vpop.f32.mrf.mxu0
    %v2901 = vadd.f32 %v2540, %v2900
    %v2902 = vpop.f32.mrf.mxu0
    %2903 = vdwg.mxu0
    %v2904 = vadd.f32 %v2866, %v2871
    %v2905 = vadd.f32 %v2904, %v2876
    %v2906 = vadd.f32 %v2905, %v2881
    %v2907 = vadd.f32 %v2906, %v2886
    %v2908 = vadd.f32 %v2907, %v2891
    %v2909 = vadd.f32 %v2908, %v2896
    %v2910 = vadd.f32 %v2909, %v2901
    %v2911 = vrot.slane %v2910, 4
    %v2912 = vadd.f32 %v2910, %v2911
    %v2913 = vrot.slane %v2912, 2
    %v2914 = vadd.f32 %v2912, %v2913
    %v2915 = vrot.slane %v2914, 1
    %v2916 = vadd.f32 %v2914, %v2915
    %v2917 = vmul.f32 %v2916, %v640
    %v2918 = vsub.f32 %v2866, %v2917
    %v2919 = vsub.f32 %v2871, %v2917
    %v2920 = vsub.f32 %v2876, %v2917
    %v2921 = vsub.f32 %v2881, %v2917
    %v2922 = vsub.f32 %v2886, %v2917
    %v2923 = vsub.f32 %v2891, %v2917
    %v2924 = vsub.f32 %v2896, %v2917
    %v2925 = vsub.f32 %v2901, %v2917
    %v2926 = vmul.f32 %v2918, %v2918
    %v2927 = vmul.f32 %v2919, %v2919
    %v2928 = vmul.f32 %v2920, %v2920
    %v2929 = vmul.f32 %v2921, %v2921
    %v2930 = vmul.f32 %v2922, %v2922
    %v2931 = vmul.f32 %v2923, %v2923
    %v2932 = vmul.f32 %v2924, %v2924
    %v2933 = vmul.f32 %v2925, %v2925
    %v2934 = vadd.f32 %v2926, %v2927
    %v2935 = vadd.f32 %v2934, %v2928
    %v2936 = vadd.f32 %v2935, %v2929
    %v2937 = vadd.f32 %v2936, %v2930
    %v2938 = vadd.f32 %v2937, %v2931
    %v2939 = vadd.f32 %v2938, %v2932
    %v2940 = vadd.f32 %v2939, %v2933
    %v2941 = vrot.slane %v2940, 4
    %v2942 = vadd.f32 %v2940, %v2941
    %v2943 = vrot.slane %v2942, 2
    %v2944 = vadd.f32 %v2942, %v2943
    %v2945 = vrot.slane %v2944, 1
    %v2946 = vadd.f32 %v2944, %v2945
    %v2947 = vmul.f32 %v2946, %v640
    %v2948 = vadd.f32 %v2947, 1e-05
    %v2949 = vrsqrt.pop %v2948
    %v2950 = vmul.f32 %v2918, %v2949
    %v2951 = vmul.f32 %v2919, %v2949
    %v2952 = vmul.f32 %v2920, %v2949
    %v2953 = vmul.f32 %v2921, %v2949
    %v2954 = vmul.f32 %v2922, %v2949
    %v2955 = vmul.f32 %v2923, %v2949
    %v2956 = vmul.f32 %v2924, %v2949
    %v2957 = vmul.f32 %v2925, %v2949
    %v2958 = vlaneseq
    %v2959 = vshrl.u32 %v2958, 7
    %v2960 = vsub.s32 1, %v2959
    %v2961 = vrot.slane %v2431, %v2960
    %v2962 = vmul.f32 %v2950, %v2961
    %v2963 = vmul.f32 %v2951, %v2961
    %v2964 = vmul.f32 %v2952, %v2961
    %v2965 = vmul.f32 %v2953, %v2961
    %v2966 = vmul.f32 %v2954, %v2961
    %v2967 = vmul.f32 %v2955, %v2961
    %v2968 = vmul.f32 %v2956, %v2961
    %v2969 = vmul.f32 %v2957, %v2961
    %v2970 = vlaneseq
    %v2971 = vshrl.u32 %v2970, 7
    %v2972 = vsub.s32 2, %v2971
    %v2973 = vrot.slane %v2431, %v2972
    %v2974 = vadd.f32 %v2962, %v2973
    %v2975 = vadd.f32 %v2963, %v2973
    %v2976 = vadd.f32 %v2964, %v2973
    %v2977 = vadd.f32 %v2965, %v2973
    %v2978 = vadd.f32 %v2966, %v2973
    %v2979 = vadd.f32 %v2967, %v2973
    %v2980 = vadd.f32 %v2968, %v2973
    %v2981 = vadd.f32 %v2969, %v2973
    %s2982 = scalar_lea.vmem [#allocation8], 640
    %v2983 = vld [vmem:[%s2982] sm:$0xff]
    %v2984 = vld [vmem:[%s2982 + $0x8] sm:$0xff]
    %v2985 = vld [vmem:[%s2982 + $0x10] sm:$0xff]
    %v2986 = vld [vmem:[%s2982 + $0x18] sm:$0xff]
    %v2987 = vld [vmem:[%s2982 + $0x20] sm:$0xff]
    %v2988 = vld [vmem:[%s2982 + $0x28] sm:$0xff]
    %v2989 = vld [vmem:[%s2982 + $0x30] sm:$0xff]
    %v2990 = vld [vmem:[%s2982 + $0x38] sm:$0xff]
    %v2991 = vld [vmem:[%s2982 + $0x40] sm:$0xff]
    %v2992 = vld [vmem:[%s2982 + $0x48] sm:$0xff]
    %v2993 = vld [vmem:[%s2982 + $0x50] sm:$0xff]
    %v2994 = vld [vmem:[%s2982 + $0x58] sm:$0xff]
    %v2995 = vld [vmem:[%s2982 + $0x60] sm:$0xff]
    %v2996 = vld [vmem:[%s2982 + $0x68] sm:$0xff]
    %v2997 = vld [vmem:[%s2982 + $0x70] sm:$0xff]
    %v2998 = vld [vmem:[%s2982 + $0x78] sm:$0xff]
    %s2999 = scalar_lea.vmem [#allocation10], 20
    %v3000 = vld [vmem:[%s2999] sm:$0x7]
    %3001 = vmatprep.subr.mxu0 0.0
    %3002 = vmatpush1.msra.mxu0 %v2998
    %3003 = vmatprep.subr.mxu0 0.0
    %3004 = vmatpush1.msra.mxu0 %v2997
    %3005 = vmatprep.subr.mxu0 0.0
    %3006 = vmatpush1.msra.mxu0 %v2996
    %3007 = vmatprep.subr.mxu0 0.0
    %3008 = vmatpush1.msra.mxu0 %v2995
    %3009 = vmatprep.subr.mxu0 0.0
    %3010 = vmatpush1.msra.mxu0 %v2994
    %3011 = vmatprep.subr.mxu0 0.0
    %3012 = vmatpush1.msra.mxu0 %v2993
    %3013 = vmatprep.subr.mxu0 0.0
    %3014 = vmatpush1.msra.mxu0 %v2992
    %3015 = vmatprep.subr.mxu0 0.0
    %3016 = vmatpush1.msra.mxu0 %v2991
    %3017 = vmatprep.subr.mxu0 0.0
    %3018 = vmatpush1.msra.mxu0 %v2990
    %3019 = vmatprep.subr.mxu0 0.0
    %3020 = vmatpush1.msra.mxu0 %v2989
    %3021 = vmatprep.subr.mxu0 0.0
    %3022 = vmatpush1.msra.mxu0 %v2988
    %3023 = vmatprep.subr.mxu0 0.0
    %3024 = vmatpush1.msra.mxu0 %v2987
    %3025 = vmatprep.subr.mxu0 0.0
    %3026 = vmatpush1.msra.mxu0 %v2986
    %3027 = vmatprep.subr.mxu0 0.0
    %3028 = vmatpush1.msra.mxu0 %v2985
    %3029 = vmatprep.subr.mxu0 0.0
    %3030 = vmatpush1.msra.mxu0 %v2984
    %3031 = vmatprep.subr.mxu0 0.0
    %3032 = vmatpush1.msra.mxu0 %v2983
    %3033 = vmatprep.subr.mxu0 0.0
    %3034 = vmatpush2.msra.mxu0 0.0
    %3035 = vmatprep.subr.mxu0 0.0
    %3036 = vmatpush2.msra.mxu0 0.0
    %3037 = vmatprep.subr.mxu0 0.0
    %3038 = vmatpush2.msra.mxu0 0.0
    %3039 = vmatprep.subr.mxu0 0.0
    %3040 = vmatpush2.msra.mxu0 0.0
    %3041 = vmatprep.subr.mxu0 0.0
    %3042 = vmatpush2.msra.mxu0 0.0
    %3043 = vmatprep.subr.mxu0 0.0
    %3044 = vmatpush2.msra.mxu0 0.0
    %3045 = vmatprep.subr.mxu0 0.0
    %3046 = vmatpush2.msra.mxu0 0.0
    %3047 = vmatprep.subr.mxu0 0.0
    %3048 = vmatpush2.msra.mxu0 0.0
    %3049 = vmatprep.subr.mxu0 0.0
    %3050 = vmatpush2.msra.mxu0 0.0
    %3051 = vmatprep.subr.mxu0 0.0
    %3052 = vmatpush2.msra.mxu0 0.0
    %3053 = vmatprep.subr.mxu0 0.0
    %3054 = vmatpush2.msra.mxu0 0.0
    %3055 = vmatprep.subr.mxu0 0.0
    %3056 = vmatpush2.msra.mxu0 0.0
    %3057 = vmatprep.subr.mxu0 0.0
    %3058 = vmatpush2.msra.mxu0 0.0
    %3059 = vmatprep.subr.mxu0 0.0
    %3060 = vmatpush2.msra.mxu0 0.0
    %3061 = vmatprep.subr.mxu0 0.0
    %3062 = vmatpush2.msra.mxu0 0.0
    %3063 = vmatprep.subr.mxu0 0.0
    %3064 = vmatpush2.msra.mxu0 0.0
    %3065 = vmatprep.mubr.f32.mxu0 0.0
    %3066 = vmatmul.mubr.f32.gmra.mxu0 %v2974
    %v3067 = vpop.f32.mrf.mxu0
    %v3068 = vadd.f32 0.0, %v3067
    %v3069 = vpop.f32.mrf.mxu0
    %3070 = vmatprep.mubr.f32.mxu0 0.0
    %3071 = vmatmul.mubr.f32.gmra.mxu0 %v2975
    %v3072 = vpop.f32.mrf.mxu0
    %v3073 = vadd.f32 0.0, %v3072
    %v3074 = vpop.f32.mrf.mxu0
    %3075 = vmatprep.mubr.f32.mxu0 0.0
    %3076 = vmatmul.mubr.f32.gmra.mxu0 %v2976
    %v3077 = vpop.f32.mrf.mxu0
    %v3078 = vadd.f32 0.0, %v3077
    %v3079 = vpop.f32.mrf.mxu0
    %3080 = vmatprep.mubr.f32.mxu0 0.0
    %3081 = vmatmul.mubr.f32.gmra.mxu0 %v2977
    %v3082 = vpop.f32.mrf.mxu0
    %v3083 = vadd.f32 0.0, %v3082
    %v3084 = vpop.f32.mrf.mxu0
    %3085 = vmatprep.mubr.f32.mxu0 0.0
    %3086 = vmatmul.mubr.f32.gmra.mxu0 %v2978
    %v3087 = vpop.f32.mrf.mxu0
    %v3088 = vadd.f32 0.0, %v3087
    %v3089 = vpop.f32.mrf.mxu0
    %3090 = vmatprep.mubr.f32.mxu0 0.0
    %3091 = vmatmul.mubr.f32.gmra.mxu0 %v2979
    %v3092 = vpop.f32.mrf.mxu0
    %v3093 = vadd.f32 0.0, %v3092
    %v3094 = vpop.f32.mrf.mxu0
    %3095 = vmatprep.mubr.f32.mxu0 0.0
    %3096 = vmatmul.mubr.f32.gmra.mxu0 %v2980
    %v3097 = vpop.f32.mrf.mxu0
    %v3098 = vadd.f32 0.0, %v3097
    %v3099 = vpop.f32.mrf.mxu0
    %3100 = vmatprep.mubr.f32.mxu0 0.0
    %3101 = vmatmul.mubr.f32.gmra.mxu0 %v2981
    %v3102 = vpop.f32.mrf.mxu0
    %v3103 = vadd.f32 0.0, %v3102
    %v3104 = vpop.f32.mrf.mxu0
    %3105 = vdwg.mxu0
    %v3106 = vlaneseq
    %v3107 = vshrl.u32 %v3106, 7
    %v3108 = vsub.s32 0, %v3107
    %v3109 = vrot.slane %v3000, %v3108
    %3110 = vmatprep.subr.mxu0 0.0
    %3111 = vmatpush1.msra.mxu0 0.0
    %3112 = vmatprep.subr.mxu0 0.0
    %3113 = vmatpush1.msra.mxu0 0.0
    %3114 = vmatprep.subr.mxu0 0.0
    %3115 = vmatpush1.msra.mxu0 0.0
    %3116 = vmatprep.subr.mxu0 0.0
    %3117 = vmatpush1.msra.mxu0 0.0
    %3118 = vmatprep.subr.mxu0 0.0
    %3119 = vmatpush1.msra.mxu0 0.0
    %3120 = vmatprep.subr.mxu0 0.0
    %3121 = vmatpush1.msra.mxu0 0.0
    %3122 = vmatprep.subr.mxu0 0.0
    %3123 = vmatpush1.msra.mxu0 0.0
    %3124 = vmatprep.subr.mxu0 0.0
    %3125 = vmatpush1.msra.mxu0 0.0
    %3126 = vmatprep.subr.mxu0 0.0
    %3127 = vmatpush1.msra.mxu0 %v3103
    %3128 = vmatprep.subr.mxu0 0.0
    %3129 = vmatpush1.msra.mxu0 %v3098
    %3130 = vmatprep.subr.mxu0 0.0
    %3131 = vmatpush1.msra.mxu0 %v3093
    %3132 = vmatprep.subr.mxu0 0.0
    %3133 = vmatpush1.msra.mxu0 %v3088
    %3134 = vmatprep.subr.mxu0 0.0
    %3135 = vmatpush1.msra.mxu0 %v3083
    %3136 = vmatprep.subr.mxu0 0.0
    %3137 = vmatpush1.msra.mxu0 %v3078
    %3138 = vmatprep.subr.mxu0 0.0
    %3139 = vmatpush1.msra.mxu0 %v3073
    %3140 = vmatprep.subr.mxu0 0.0
    %3141 = vmatpush1.msra.mxu0 %v3068
    %3142 = vmatprep.subr.mxu0 0.0
    %3143 = vmatpush2.msra.mxu0 0.0
    %3144 = vmatprep.subr.mxu0 0.0
    %3145 = vmatpush2.msra.mxu0 0.0
    %3146 = vmatprep.subr.mxu0 0.0
    %3147 = vmatpush2.msra.mxu0 0.0
    %3148 = vmatprep.subr.mxu0 0.0
    %3149 = vmatpush2.msra.mxu0 0.0
    %3150 = vmatprep.subr.mxu0 0.0
    %3151 = vmatpush2.msra.mxu0 0.0
    %3152 = vmatprep.subr.mxu0 0.0
    %3153 = vmatpush2.msra.mxu0 0.0
    %3154 = vmatprep.subr.mxu0 0.0
    %3155 = vmatpush2.msra.mxu0 0.0
    %3156 = vmatprep.subr.mxu0 0.0
    %3157 = vmatpush2.msra.mxu0 0.0
    %3158 = vmatprep.subr.mxu0 0.0
    %3159 = vmatpush2.msra.mxu0 0.0
    %3160 = vmatprep.subr.mxu0 0.0
    %3161 = vmatpush2.msra.mxu0 0.0
    %3162 = vmatprep.subr.mxu0 0.0
    %3163 = vmatpush2.msra.mxu0 0.0
    %3164 = vmatprep.subr.mxu0 0.0
    %3165 = vmatpush2.msra.mxu0 0.0
    %3166 = vmatprep.subr.mxu0 0.0
    %3167 = vmatpush2.msra.mxu0 0.0
    %3168 = vmatprep.subr.mxu0 0.0
    %3169 = vmatpush2.msra.mxu0 0.0
    %3170 = vmatprep.subr.mxu0 0.0
    %3171 = vmatpush2.msra.mxu0 0.0
    %3172 = vmatprep.subr.mxu0 0.0
    %3173 = vmatpush2.msra.mxu0 0.0
    %3174 = vmatprep.mubr.f32.mxu0 0.0
    %3175 = vmatmul.mubr.f32.gmra.mxu0 %v241
    %v3176 = vpop.f32.mrf.mxu0
    %v3177 = vadd.f32 %v3109, %v3176
    %v3178 = vpop.f32.mrf.mxu0
    %3179 = vmatprep.mubr.f32.mxu0 0.0
    %3180 = vmatmul.mubr.f32.gmra.mxu0 %v244
    %v3181 = vpop.f32.mrf.mxu0
    %v3182 = vadd.f32 %v3109, %v3181
    %v3183 = vpop.f32.mrf.mxu0
    %3184 = vmatprep.mubr.f32.mxu0 0.0
    %3185 = vmatmul.mubr.f32.gmra.mxu0 %v247
    %v3186 = vpop.f32.mrf.mxu0
    %v3187 = vadd.f32 %v3109, %v3186
    %v3188 = vpop.f32.mrf.mxu0
    %3189 = vmatprep.mubr.f32.mxu0 0.0
    %3190 = vmatmul.mubr.f32.gmra.mxu0 %v250
    %v3191 = vpop.f32.mrf.mxu0
    %v3192 = vadd.f32 %v3109, %v3191
    %v3193 = vpop.f32.mrf.mxu0
    %3194 = vmatprep.mubr.f32.mxu0 0.0
    %3195 = vmatmul.mubr.f32.gmra.mxu0 %v253
    %v3196 = vpop.f32.mrf.mxu0
    %v3197 = vadd.f32 %v3109, %v3196
    %v3198 = vpop.f32.mrf.mxu0
    %3199 = vmatprep.mubr.f32.mxu0 0.0
    %3200 = vmatmul.mubr.f32.gmra.mxu0 %v256
    %v3201 = vpop.f32.mrf.mxu0
    %v3202 = vadd.f32 %v3109, %v3201
    %v3203 = vpop.f32.mrf.mxu0
    %3204 = vmatprep.mubr.f32.mxu0 0.0
    %3205 = vmatmul.mubr.f32.gmra.mxu0 %v259
    %v3206 = vpop.f32.mrf.mxu0
    %v3207 = vadd.f32 %v3109, %v3206
    %v3208 = vpop.f32.mrf.mxu0
    %3209 = vmatprep.mubr.f32.mxu0 0.0
    %3210 = vmatmul.mubr.f32.gmra.mxu0 %v262
    %v3211 = vpop.f32.mrf.mxu0
    %v3212 = vadd.f32 %v3109, %v3211
    %v3213 = vpop.f32.mrf.mxu0
    %3214 = vdwg.mxu0
    %v3215 = vmax.f32 %v3177, 0.0
    %v3216 = vmax.f32 %v3182, 0.0
    %v3217 = vmax.f32 %v3187, 0.0
    %v3218 = vmax.f32 %v3192, 0.0
    %v3219 = vmax.f32 %v3197, 0.0
    %v3220 = vmax.f32 %v3202, 0.0
    %v3221 = vmax.f32 %v3207, 0.0
    %v3222 = vmax.f32 %v3212, 0.0
    %v3223 = vmul.f32 %v2678, 0.2
    %v3224 = vmul.f32 %v2679, 0.2
    %v3225 = vmul.f32 %v2680, 0.2
    %v3226 = vmul.f32 %v2681, 0.2
    %v3227 = vmul.f32 %v2682, 0.2
    %v3228 = vmul.f32 %v2683, 0.2
    %v3229 = vmul.f32 %v2684, 0.2
    %v3230 = vmul.f32 %v2685, 0.2
    %v3231 = vsub.f32 %v3215, %v3223
    %v3232 = vsub.f32 %v3216, %v3224
    %v3233 = vsub.f32 %v3217, %v3225
    %v3234 = vsub.f32 %v3218, %v3226
    %v3235 = vsub.f32 %v3219, %v3227
    %v3236 = vsub.f32 %v3220, %v3228
    %v3237 = vsub.f32 %v3221, %v3229
    %v3238 = vsub.f32 %v3222, %v3230
    %v3239 = vsub.f32 %v3231, %v2974
    %v3240 = vsub.f32 %v3232, %v2975
    %v3241 = vsub.f32 %v3233, %v2976
    %v3242 = vsub.f32 %v3234, %v2977
    %v3243 = vsub.f32 %v3235, %v2978
    %v3244 = vsub.f32 %v3236, %v2979
    %v3245 = vsub.f32 %v3237, %v2980
    %v3246 = vsub.f32 %v3238, %v2981
    %v3247 = vadd.f32 %v2678, %v3239
    %v3248 = vadd.f32 %v2679, %v3240
    %v3249 = vadd.f32 %v2680, %v3241
    %v3250 = vadd.f32 %v2681, %v3242
    %v3251 = vadd.f32 %v2682, %v3243
    %v3252 = vadd.f32 %v2683, %v3244
    %v3253 = vadd.f32 %v2684, %v3245
    %v3254 = vadd.f32 %v2685, %v3246
    %v3255 = vadd.f32 %v2974, %v3247
    %v3256 = vadd.f32 %v2975, %v3248
    %v3257 = vadd.f32 %v2976, %v3249
    %v3258 = vadd.f32 %v2977, %v3250
    %v3259 = vadd.f32 %v2978, %v3251
    %v3260 = vadd.f32 %v2979, %v3252
    %v3261 = vadd.f32 %v2980, %v3253
    %v3262 = vadd.f32 %v2981, %v3254
    %3263 = vmatprep.subr.mxu0 0.0
    %3264 = vmatpush1.msra.mxu0 %v2998
    %3265 = vmatprep.subr.mxu0 0.0
    %3266 = vmatpush1.msra.mxu0 %v2997
    %3267 = vmatprep.subr.mxu0 0.0
    %3268 = vmatpush1.msra.mxu0 %v2996
    %3269 = vmatprep.subr.mxu0 0.0
    %3270 = vmatpush1.msra.mxu0 %v2995
    %3271 = vmatprep.subr.mxu0 0.0
    %3272 = vmatpush1.msra.mxu0 %v2994
    %3273 = vmatprep.subr.mxu0 0.0
    %3274 = vmatpush1.msra.mxu0 %v2993
    %3275 = vmatprep.subr.mxu0 0.0
    %3276 = vmatpush1.msra.mxu0 %v2992
    %3277 = vmatprep.subr.mxu0 0.0
    %3278 = vmatpush1.msra.mxu0 %v2991
    %3279 = vmatprep.subr.mxu0 0.0
    %3280 = vmatpush1.msra.mxu0 %v2990
    %3281 = vmatprep.subr.mxu0 0.0
    %3282 = vmatpush1.msra.mxu0 %v2989
    %3283 = vmatprep.subr.mxu0 0.0
    %3284 = vmatpush1.msra.mxu0 %v2988
    %3285 = vmatprep.subr.mxu0 0.0
    %3286 = vmatpush1.msra.mxu0 %v2987
    %3287 = vmatprep.subr.mxu0 0.0
    %3288 = vmatpush1.msra.mxu0 %v2986
    %3289 = vmatprep.subr.mxu0 0.0
    %3290 = vmatpush1.msra.mxu0 %v2985
    %3291 = vmatprep.subr.mxu0 0.0
    %3292 = vmatpush1.msra.mxu0 %v2984
    %3293 = vmatprep.subr.mxu0 0.0
    %3294 = vmatpush1.msra.mxu0 %v2983
    %3295 = vmatprep.subr.mxu0 0.0
    %3296 = vmatpush2.msra.mxu0 0.0
    %3297 = vmatprep.subr.mxu0 0.0
    %3298 = vmatpush2.msra.mxu0 0.0
    %3299 = vmatprep.subr.mxu0 0.0
    %3300 = vmatpush2.msra.mxu0 0.0
    %3301 = vmatprep.subr.mxu0 0.0
    %3302 = vmatpush2.msra.mxu0 0.0
    %3303 = vmatprep.subr.mxu0 0.0
    %3304 = vmatpush2.msra.mxu0 0.0
    %3305 = vmatprep.subr.mxu0 0.0
    %3306 = vmatpush2.msra.mxu0 0.0
    %3307 = vmatprep.subr.mxu0 0.0
    %3308 = vmatpush2.msra.mxu0 0.0
    %3309 = vmatprep.subr.mxu0 0.0
    %3310 = vmatpush2.msra.mxu0 0.0
    %3311 = vmatprep.subr.mxu0 0.0
    %3312 = vmatpush2.msra.mxu0 0.0
    %3313 = vmatprep.subr.mxu0 0.0
    %3314 = vmatpush2.msra.mxu0 0.0
    %3315 = vmatprep.subr.mxu0 0.0
    %3316 = vmatpush2.msra.mxu0 0.0
    %3317 = vmatprep.subr.mxu0 0.0
    %3318 = vmatpush2.msra.mxu0 0.0
    %3319 = vmatprep.subr.mxu0 0.0
    %3320 = vmatpush2.msra.mxu0 0.0
    %3321 = vmatprep.subr.mxu0 0.0
    %3322 = vmatpush2.msra.mxu0 0.0
    %3323 = vmatprep.subr.mxu0 0.0
    %3324 = vmatpush2.msra.mxu0 0.0
    %3325 = vmatprep.subr.mxu0 0.0
    %3326 = vmatpush2.msra.mxu0 0.0
    %3327 = vmatprep.mubr.f32.mxu0 0.0
    %3328 = vmatmul.mubr.f32.gmra.mxu0 %v3255
    %v3329 = vpop.f32.mrf.mxu0
    %v3330 = vadd.f32 0.0, %v3329
    %v3331 = vpop.f32.mrf.mxu0
    %3332 = vmatprep.mubr.f32.mxu0 0.0
    %3333 = vmatmul.mubr.f32.gmra.mxu0 %v3256
    %v3334 = vpop.f32.mrf.mxu0
    %v3335 = vadd.f32 0.0, %v3334
    %v3336 = vpop.f32.mrf.mxu0
    %3337 = vmatprep.mubr.f32.mxu0 0.0
    %3338 = vmatmul.mubr.f32.gmra.mxu0 %v3257
    %v3339 = vpop.f32.mrf.mxu0
    %v3340 = vadd.f32 0.0, %v3339
    %v3341 = vpop.f32.mrf.mxu0
    %3342 = vmatprep.mubr.f32.mxu0 0.0
    %3343 = vmatmul.mubr.f32.gmra.mxu0 %v3258
    %v3344 = vpop.f32.mrf.mxu0
    %v3345 = vadd.f32 0.0, %v3344
    %v3346 = vpop.f32.mrf.mxu0
    %3347 = vmatprep.mubr.f32.mxu0 0.0
    %3348 = vmatmul.mubr.f32.gmra.mxu0 %v3259
    %v3349 = vpop.f32.mrf.mxu0
    %v3350 = vadd.f32 0.0, %v3349
    %v3351 = vpop.f32.mrf.mxu0
    %3352 = vmatprep.mubr.f32.mxu0 0.0
    %3353 = vmatmul.mubr.f32.gmra.mxu0 %v3260
    %v3354 = vpop.f32.mrf.mxu0
    %v3355 = vadd.f32 0.0, %v3354
    %v3356 = vpop.f32.mrf.mxu0
    %3357 = vmatprep.mubr.f32.mxu0 0.0
    %3358 = vmatmul.mubr.f32.gmra.mxu0 %v3261
    %v3359 = vpop.f32.mrf.mxu0
    %v3360 = vadd.f32 0.0, %v3359
    %v3361 = vpop.f32.mrf.mxu0
    %3362 = vmatprep.mubr.f32.mxu0 0.0
    %3363 = vmatmul.mubr.f32.gmra.mxu0 %v3262
    %v3364 = vpop.f32.mrf.mxu0
    %v3365 = vadd.f32 0.0, %v3364
    %v3366 = vpop.f32.mrf.mxu0
    %3367 = vdwg.mxu0
    %3368 = vmatprep.subr.mxu0 0.0
    %3369 = vmatpush1.msra.mxu0 0.0
    %3370 = vmatprep.subr.mxu0 0.0
    %3371 = vmatpush1.msra.mxu0 0.0
    %3372 = vmatprep.subr.mxu0 0.0
    %3373 = vmatpush1.msra.mxu0 0.0
    %3374 = vmatprep.subr.mxu0 0.0
    %3375 = vmatpush1.msra.mxu0 0.0
    %3376 = vmatprep.subr.mxu0 0.0
    %3377 = vmatpush1.msra.mxu0 0.0
    %3378 = vmatprep.subr.mxu0 0.0
    %3379 = vmatpush1.msra.mxu0 0.0
    %3380 = vmatprep.subr.mxu0 0.0
    %3381 = vmatpush1.msra.mxu0 0.0
    %3382 = vmatprep.subr.mxu0 0.0
    %3383 = vmatpush1.msra.mxu0 0.0
    %3384 = vmatprep.subr.mxu0 0.0
    %3385 = vmatpush1.msra.mxu0 %v3365
    %3386 = vmatprep.subr.mxu0 0.0
    %3387 = vmatpush1.msra.mxu0 %v3360
    %3388 = vmatprep.subr.mxu0 0.0
    %3389 = vmatpush1.msra.mxu0 %v3355
    %3390 = vmatprep.subr.mxu0 0.0
    %3391 = vmatpush1.msra.mxu0 %v3350
    %3392 = vmatprep.subr.mxu0 0.0
    %3393 = vmatpush1.msra.mxu0 %v3345
    %3394 = vmatprep.subr.mxu0 0.0
    %3395 = vmatpush1.msra.mxu0 %v3340
    %3396 = vmatprep.subr.mxu0 0.0
    %3397 = vmatpush1.msra.mxu0 %v3335
    %3398 = vmatprep.subr.mxu0 0.0
    %3399 = vmatpush1.msra.mxu0 %v3330
    %3400 = vmatprep.subr.mxu0 0.0
    %3401 = vmatpush2.msra.mxu0 0.0
    %3402 = vmatprep.subr.mxu0 0.0
    %3403 = vmatpush2.msra.mxu0 0.0
    %3404 = vmatprep.subr.mxu0 0.0
    %3405 = vmatpush2.msra.mxu0 0.0
    %3406 = vmatprep.subr.mxu0 0.0
    %3407 = vmatpush2.msra.mxu0 0.0
    %3408 = vmatprep.subr.mxu0 0.0
    %3409 = vmatpush2.msra.mxu0 0.0
    %3410 = vmatprep.subr.mxu0 0.0
    %3411 = vmatpush2.msra.mxu0 0.0
    %3412 = vmatprep.subr.mxu0 0.0
    %3413 = vmatpush2.msra.mxu0 0.0
    %3414 = vmatprep.subr.mxu0 0.0
    %3415 = vmatpush2.msra.mxu0 0.0
    %3416 = vmatprep.subr.mxu0 0.0
    %3417 = vmatpush2.msra.mxu0 0.0
    %3418 = vmatprep.subr.mxu0 0.0
    %3419 = vmatpush2.msra.mxu0 0.0
    %3420 = vmatprep.subr.mxu0 0.0
    %3421 = vmatpush2.msra.mxu0 0.0
    %3422 = vmatprep.subr.mxu0 0.0
    %3423 = vmatpush2.msra.mxu0 0.0
    %3424 = vmatprep.subr.mxu0 0.0
    %3425 = vmatpush2.msra.mxu0 0.0
    %3426 = vmatprep.subr.mxu0 0.0
    %3427 = vmatpush2.msra.mxu0 0.0
    %3428 = vmatprep.subr.mxu0 0.0
    %3429 = vmatpush2.msra.mxu0 0.0
    %3430 = vmatprep.subr.mxu0 0.0
    %3431 = vmatpush2.msra.mxu0 0.0
    %3432 = vmatprep.mubr.f32.mxu0 0.0
    %3433 = vmatmul.mubr.f32.gmra.mxu0 %v241
    %v3434 = vpop.f32.mrf.mxu0
    %v3435 = vadd.f32 %v3109, %v3434
    %v3436 = vpop.f32.mrf.mxu0
    %3437 = vmatprep.mubr.f32.mxu0 0.0
    %3438 = vmatmul.mubr.f32.gmra.mxu0 %v244
    %v3439 = vpop.f32.mrf.mxu0
    %v3440 = vadd.f32 %v3109, %v3439
    %v3441 = vpop.f32.mrf.mxu0
    %3442 = vmatprep.mubr.f32.mxu0 0.0
    %3443 = vmatmul.mubr.f32.gmra.mxu0 %v247
    %v3444 = vpop.f32.mrf.mxu0
    %v3445 = vadd.f32 %v3109, %v3444
    %v3446 = vpop.f32.mrf.mxu0
    %3447 = vmatprep.mubr.f32.mxu0 0.0
    %3448 = vmatmul.mubr.f32.gmra.mxu0 %v250
    %v3449 = vpop.f32.mrf.mxu0
    %v3450 = vadd.f32 %v3109, %v3449
    %v3451 = vpop.f32.mrf.mxu0
    %3452 = vmatprep.mubr.f32.mxu0 0.0
    %3453 = vmatmul.mubr.f32.gmra.mxu0 %v253
    %v3454 = vpop.f32.mrf.mxu0
    %v3455 = vadd.f32 %v3109, %v3454
    %v3456 = vpop.f32.mrf.mxu0
    %3457 = vmatprep.mubr.f32.mxu0 0.0
    %3458 = vmatmul.mubr.f32.gmra.mxu0 %v256
    %v3459 = vpop.f32.mrf.mxu0
    %v3460 = vadd.f32 %v3109, %v3459
    %v3461 = vpop.f32.mrf.mxu0
    %3462 = vmatprep.mubr.f32.mxu0 0.0
    %3463 = vmatmul.mubr.f32.gmra.mxu0 %v259
    %v3464 = vpop.f32.mrf.mxu0
    %v3465 = vadd.f32 %v3109, %v3464
    %v3466 = vpop.f32.mrf.mxu0
    %3467 = vmatprep.mubr.f32.mxu0 0.0
    %3468 = vmatmul.mubr.f32.gmra.mxu0 %v262
    %v3469 = vpop.f32.mrf.mxu0
    %v3470 = vadd.f32 %v3109, %v3469
    %v3471 = vpop.f32.mrf.mxu0
    %3472 = vdwg.mxu0
    %v3473 = vadd.f32 %v3435, %v3440
    %v3474 = vadd.f32 %v3473, %v3445
    %v3475 = vadd.f32 %v3474, %v3450
    %v3476 = vadd.f32 %v3475, %v3455
    %v3477 = vadd.f32 %v3476, %v3460
    %v3478 = vadd.f32 %v3477, %v3465
    %v3479 = vadd.f32 %v3478, %v3470
    %v3480 = vrot.slane %v3479, 4
    %v3481 = vadd.f32 %v3479, %v3480
    %v3482 = vrot.slane %v3481, 2
    %v3483 = vadd.f32 %v3481, %v3482
    %v3484 = vrot.slane %v3483, 1
    %v3485 = vadd.f32 %v3483, %v3484
    %v3486 = vmul.f32 %v3485, %v640
    %v3487 = vsub.f32 %v3435, %v3486
    %v3488 = vsub.f32 %v3440, %v3486
    %v3489 = vsub.f32 %v3445, %v3486
    %v3490 = vsub.f32 %v3450, %v3486
    %v3491 = vsub.f32 %v3455, %v3486
    %v3492 = vsub.f32 %v3460, %v3486
    %v3493 = vsub.f32 %v3465, %v3486
    %v3494 = vsub.f32 %v3470, %v3486
    %v3495 = vmul.f32 %v3487, %v3487
    %v3496 = vmul.f32 %v3488, %v3488
    %v3497 = vmul.f32 %v3489, %v3489
    %v3498 = vmul.f32 %v3490, %v3490
    %v3499 = vmul.f32 %v3491, %v3491
    %v3500 = vmul.f32 %v3492, %v3492
    %v3501 = vmul.f32 %v3493, %v3493
    %v3502 = vmul.f32 %v3494, %v3494
    %v3503 = vadd.f32 %v3495, %v3496
    %v3504 = vadd.f32 %v3503, %v3497
    %v3505 = vadd.f32 %v3504, %v3498
    %v3506 = vadd.f32 %v3505, %v3499
    %v3507 = vadd.f32 %v3506, %v3500
    %v3508 = vadd.f32 %v3507, %v3501
    %v3509 = vadd.f32 %v3508, %v3502
    %v3510 = vrot.slane %v3509, 4
    %v3511 = vadd.f32 %v3509, %v3510
    %v3512 = vrot.slane %v3511, 2
    %v3513 = vadd.f32 %v3511, %v3512
    %v3514 = vrot.slane %v3513, 1
    %v3515 = vadd.f32 %v3513, %v3514
    %v3516 = vmul.f32 %v3515, %v640
    %v3517 = vadd.f32 %v3516, 1e-05
    %v3518 = vrsqrt.pop %v3517
    %v3519 = vmul.f32 %v3487, %v3518
    %v3520 = vmul.f32 %v3488, %v3518
    %v3521 = vmul.f32 %v3489, %v3518
    %v3522 = vmul.f32 %v3490, %v3518
    %v3523 = vmul.f32 %v3491, %v3518
    %v3524 = vmul.f32 %v3492, %v3518
    %v3525 = vmul.f32 %v3493, %v3518
    %v3526 = vmul.f32 %v3494, %v3518
    %v3527 = vlaneseq
    %v3528 = vshrl.u32 %v3527, 7
    %v3529 = vsub.s32 1, %v3528
    %v3530 = vrot.slane %v3000, %v3529
    %v3531 = vmul.f32 %v3519, %v3530
    %v3532 = vmul.f32 %v3520, %v3530
    %v3533 = vmul.f32 %v3521, %v3530
    %v3534 = vmul.f32 %v3522, %v3530
    %v3535 = vmul.f32 %v3523, %v3530
    %v3536 = vmul.f32 %v3524, %v3530
    %v3537 = vmul.f32 %v3525, %v3530
    %v3538 = vmul.f32 %v3526, %v3530
    %v3539 = vlaneseq
    %v3540 = vshrl.u32 %v3539, 7
    %v3541 = vsub.s32 2, %v3540
    %v3542 = vrot.slane %v3000, %v3541
    %v3543 = vadd.f32 %v3531, %v3542
    %v3544 = vadd.f32 %v3532, %v3542
    %v3545 = vadd.f32 %v3533, %v3542
    %v3546 = vadd.f32 %v3534, %v3542
    %v3547 = vadd.f32 %v3535, %v3542
    %v3548 = vadd.f32 %v3536, %v3542
    %v3549 = vadd.f32 %v3537, %v3542
    %v3550 = vadd.f32 %v3538, %v3542
    %3551 = vst [vmem:[#allocation11] sm:$0xff] %v3543
    %3552 = vst [vmem:[#allocation11 + $0x8] sm:$0xff] %v3544
    %3553 = vst [vmem:[#allocation11 + $0x10] sm:$0xff] %v3545
    %3554 = vst [vmem:[#allocation11 + $0x18] sm:$0xff] %v3546
    %3555 = vst [vmem:[#allocation11 + $0x20] sm:$0xff] %v3547
    %3556 = vst [vmem:[#allocation11 + $0x28] sm:$0xff] %v3548
    %3557 = vst [vmem:[#allocation11 + $0x30] sm:$0xff] %v3549
    %3558 = vst [vmem:[#allocation11 + $0x38] sm:$0xff] %v3550
    // Predicated region
    $region42: #{tpu_custom_call.1} parent=1 // pred_check
      _
    $region43: #{tpu_custom_call.1} parent=1 // pred_check_branch
      %3560 = sbr.rel (0) target = $region45
    $region44: #{tpu_custom_call.1} parent=1 // pred_region
      %s3562 = ssub.s32 1024, 1024
      %3563 = vsyncadd [#allocation4], %s3562
      %s3564 = sshll.u32 [#allocation11], 4
      %s3565 = int_to_ptr.vmem [resolvable:$true] %s3564
      %3570 = dma.vmem_to_hbm [thread:$0]  %s3565, 1024, %s5, [#allocation4], 128, 128, 8
    $region45: #{tpu_custom_call.1} parent=1 // pred_fallthru
      _
    // Predicated region
    $region46: #{tpu_custom_call.1} parent=1 // pred_check
      _
    $region47: #{tpu_custom_call.1} parent=1 // pred_check_branch
      %3572 = sbr.rel (0) target = $region49
    $region48: #{tpu_custom_call.1} parent=1 // pred_region
      %3573 = dma.done [#allocation4], 1024
    $region49: #{tpu_custom_call.1} parent=1 // pred_fallthru
      _
    %3574 = vsyncpa [#allocation3], 1
    %3575 = vsyncpa [#allocation6], 1
    %3576 = vsyncpa [#allocation9], 1
    %3577 = vsyncpa [#allocation4], 1

</llo_original>
